<compile_context>
chip_gen: v6e
topology: v6e:2x2x1
jax: 0.10.0
libtpu: 0.0.40
codegen_flags: <defaults>
</compile_context>

<pallas_src>
import math

import jax
import jax.numpy as jnp
from jax import lax
from jax.experimental import pallas as pl
from jax.experimental.pallas import tpu as pltpu


# ------------------------------ Pallas kernel --------------------------------
def _basic_block_kernel(x_ref, w1_ref, s1_ref, b1_ref, w2_ref, s2_ref, b2_ref,
                        o_ref, pad_ref):
    """Fused BasicBlock for one batch element.

    x_ref  : (1, C, H*W)    fp32 input, NCHW flattened (lane-dense load)
    w*_ref : (9*C, C)       bf16 im2col conv weights, row = (3*dy + dx)*C + c_in
    s*/b*  : (1, C)         fp32 folded BN scale / bias (+ conv bias)
    o_ref  : (1, C, H*W)    fp32 output, NCHW flattened (lane-dense store)
    pad_ref: (H+2, W+2, C)  bf16 scratch with zero halo, shared by both layers
    """
    C = x_ref.shape[1]
    Hp2, Wp2, _ = pad_ref.shape
    H, W = Hp2 - 2, Wp2 - 2

    x_cf = x_ref[0]                                   # (C, H*W) fp32, lane-dense

    # Zero ONLY the halo border (perimeter), every grid step (no program_id==0
    # gating -> safe under megacore "parallel" splitting).  The interior is
    # fully overwritten by each layer below, so this is the only zero-fill.
    zero_row = jnp.zeros((Wp2, C), pad_ref.dtype)
    pad_ref[0] = zero_row
    pad_ref[H + 1] = zero_row
    zero_col = jnp.zeros((H, 1, C), pad_ref.dtype)
    pad_ref[pl.ds(1, H), pl.ds(0, 1), :] = zero_col
    pad_ref[pl.ds(1, H), pl.ds(W + 1, 1), :] = zero_col

    def conv3x3_affine(src_hwc_bf16, w_ref, s_ref, b_ref):
        # Write the (already bf16) source into the interior of the halo scratch.
        pad_ref[pl.ds(1, H), pl.ds(1, W), :] = src_hwc_bf16
        xp = pad_ref[...]                             # (H+2, W+2, C) bf16

        # im2col: one (H*W, 9*C) patch matrix -> single MXU matmul per layer.
        cols = []
        for dy in range(3):
            for dx in range(3):
                cols.append(xp[dy:dy + H, dx:dx + W, :].reshape(H * W, C))
        patches = jnp.concatenate(cols, axis=-1)      # (H*W, 9*C) bf16
        y = jnp.dot(patches, w_ref[...],
                    preferred_element_type=jnp.float32)   # (H*W, C) fp32
        # Folded eval-mode BN (+ conv bias), applied once per layer in fp32.
        return y * s_ref[...] + b_ref[...]

    # Layer 1: conv -> BN -> ReLU (activation never leaves VMEM).
    x_hwc = x_cf.T.reshape(H, W, C).astype(jnp.bfloat16)
    y1 = jnp.maximum(conv3x3_affine(x_hwc, w1_ref, s1_ref, b1_ref), 0.0)
    # Layer 2: conv -> BN (reuses the same halo scratch; halo is still zero).
    y2 = conv3x3_affine(y1.astype(jnp.bfloat16).reshape(H, W, C),
                        w2_ref, s2_ref, b2_ref)
    # Residual add + final ReLU in (C, H*W) orientation -> lane-dense store.
    out = jnp.maximum(y2.T + x_cf, 0.0)               # (C, H*W) fp32
    o_ref[0] = out.astype(o_ref.dtype)


# --------------------------------- wrapper ------------------------------------
def basic_block_forward(x_nchw, params):
    """PyTorch-equivalent BasicBlock.forward (stride=1, downsample=None).

    Input/output are NCHW; the kernel works on NCHW flattened to (N, C, H*W),
    so the wrapper does only free reshapes (no transposes, no extra HBM trips).
    """
    N, C, H, W = x_nchw.shape
    assert W % 8 == 0, "W should be a multiple of 8 for cheap in-kernel reshapes"
    assert params["w1"].shape == (9 * C, C), "inplanes must equal planes (no downsample)"
    # (H*W) == 256 here -> multiple of 128 -> unmasked lane-dense loads/stores.

    x_flat = x_nchw.reshape(N, C, H * W)              # free reshape (same layout)

    out_flat = pl.pallas_call(
        _basic_block_kernel,
        out_shape=jax.ShapeDtypeStruct((N, C, H * W), jnp.float32),
        grid=(N,),
        in_specs=[
            pl.BlockSpec((1, C, H * W), lambda n: (n, 0, 0)),   # x (NCHW flat)
            pl.BlockSpec((9 * C, C), lambda n: (0, 0)),         # w1 (bf16 im2col)
            pl.BlockSpec((1, C), lambda n: (0, 0)),             # scale1
            pl.BlockSpec((1, C), lambda n: (0, 0)),             # bias1
            pl.BlockSpec((9 * C, C), lambda n: (0, 0)),         # w2 (bf16 im2col)
            pl.BlockSpec((1, C), lambda n: (0, 0)),             # scale2
            pl.BlockSpec((1, C), lambda n: (0, 0)),             # bias2
        ],
        out_specs=pl.BlockSpec((1, C, H * W), lambda n: (n, 0, 0)),
        scratch_shapes=[
            pltpu.VMEM((H + 2, W + 2, C), jnp.bfloat16),        # shared halo scratch
        ],
        compiler_params=pltpu.CompilerParams(
            dimension_semantics=("parallel",),
            vmem_limit_bytes=32 * 1024 * 1024,
        ),
    )(x_flat,
      params["w1"], params["scale1"].reshape(1, C), params["bias1"].reshape(1, C),
      params["w2"], params["scale2"].reshape(1, C), params["bias2"].reshape(1, C))

    return out_flat.reshape(N, C, H, W)               # free reshape back to NCHW


# ----------------------------- parameter handling -----------------------------
def init_basic_block_params(key, planes, eps=1e-5):
    """PyTorch-default-like init for BasicBlock(inplanes=planes, planes).

    Conv weights/biases use the Conv2d default uniform(+-1/sqrt(fan_in)).
    BatchNorm is folded in eval mode with fresh running stats into (scale, bias).
    Kernel weights are stored as a single (9*C, C) bf16 im2col matrix.
    """
    params = {}
    keys = jax.random.split(key, 4)
    for li, (kw, kb) in enumerate([(keys[0], keys[1]), (keys[2], keys[3])], start=1):
        cin = cout = planes
        fan_in = cin * 9
        bound = 1.0 / math.sqrt(fan_in)
        w_hwio = jax.random.uniform(kw, (3, 3, cin, cout), jnp.float32, -bound, bound)
        conv_b = jax.random.uniform(kb, (cout,), jnp.float32, -bound, bound)
        gamma = jnp.ones((cout,), jnp.float32)
        beta = jnp.zeros((cout,), jnp.float32)
        r_mean = jnp.zeros((cout,), jnp.float32)
        r_var = jnp.ones((cout,), jnp.float32)
        scale = gamma / jnp.sqrt(r_var + eps)
        bias = beta + (conv_b - r_mean) * scale
        params[f"w{li}_hwio"] = w_hwio                                     # fp32, reference
        # Row index = (3*dy + dx)*cin + c_in  -> matches the kernel's im2col order.
        params[f"w{li}"] = w_hwio.reshape(9 * cin, cout).astype(jnp.bfloat16)
        params[f"scale{li}"] = scale
        params[f"bias{li}"] = bias
    return params


# -------------------------------- pure-JAX ref ---------------------------------
def _ref_conv_bn(x_nhwc, w_hwio, scale, bias):
    # Mirror the kernel's numerics: bf16 conv operands, fp32 accumulation.
    y = lax.conv_general_dilated(
        x_nhwc.astype(jnp.bfloat16), w_hwio.astype(jnp.bfloat16),
        window_strides=(1, 1), padding="SAME",
        dimension_numbers=("NHWC", "HWIO", "NHWC"),
        preferred_element_type=jnp.float32)
    return y * scale + bias


def basic_block_ref(x_nchw, params):
    x = jnp.transpose(x_nchw, (0, 2, 3, 1))
    h = jnp.maximum(_ref_conv_bn(x, params["w1_hwio"], params["scale1"], params["bias1"]), 0.0)
    h = _ref_conv_bn(h, params["w2_hwio"], params["scale2"], params["bias2"])
    out = jnp.maximum(h + x, 0.0)          # residual + final ReLU
    return jnp.transpose(out, (0, 3, 1, 2))


if __name__ == "__main__":
    key = jax.random.PRNGKey(0)
    kp, kx = jax.random.split(key)

    N, planes, H, W = 2, 8, 16, 16          # inplanes == planes, stride=1, downsample=None
    params = init_basic_block_params(kp, planes)
    x = jax.random.normal(kx, (N, planes, H, W), jnp.float32)

    y = jax.block_until_ready(basic_block_forward(x, params))
    y_ref = jax.block_until_ready(basic_block_ref(x, params))

    assert y.shape == (N, planes, H, W), y.shape
    max_err = float(jnp.max(jnp.abs(y - y_ref)))
    assert jnp.allclose(y, y_ref, atol=1e-3, rtol=1e-3), max_err

    print("KERNEL_OK")
</pallas_src>

<mosaic_0001>
module attributes {stable_mosaic.version = 11 : i64} {
  func.func @_basic_block_kernel(%arg0: i32, %arg1: memref<1x8x256xf32, #tpu.memory_space<vmem>>, %arg2: memref<72x8xbf16, #tpu.memory_space<vmem>>, %arg3: memref<1x8xf32, #tpu.memory_space<vmem>>, %arg4: memref<1x8xf32, #tpu.memory_space<vmem>>, %arg5: memref<72x8xbf16, #tpu.memory_space<vmem>>, %arg6: memref<1x8xf32, #tpu.memory_space<vmem>>, %arg7: memref<1x8xf32, #tpu.memory_space<vmem>>, %arg8: memref<1x8x256xf32, #tpu.memory_space<vmem>>, %arg9: memref<18x18x8xbf16, #tpu.memory_space<vmem>>) attributes {dimension_semantics = [#tpu.dimension_semantics<parallel>], iteration_bounds = array<i64: 2>, scalar_prefetch = 0 : i64, scratch_operands = 1 : i64, tpu.core_type = #tpu.core_type<tc>, window_params = [{transform_indices = @transform_0, window_bounds = array<i64: 1, 8, 256>}, {pipeline_mode = #tpu.pipeline_mode<synchronous>, transform_indices = @transform_1, window_bounds = array<i64: 72, 8>}, {pipeline_mode = #tpu.pipeline_mode<synchronous>, transform_indices = @transform_2, window_bounds = array<i64: 1, 8>}, {pipeline_mode = #tpu.pipeline_mode<synchronous>, transform_indices = @transform_3, window_bounds = array<i64: 1, 8>}, {pipeline_mode = #tpu.pipeline_mode<synchronous>, transform_indices = @transform_4, window_bounds = array<i64: 72, 8>}, {pipeline_mode = #tpu.pipeline_mode<synchronous>, transform_indices = @transform_5, window_bounds = array<i64: 1, 8>}, {pipeline_mode = #tpu.pipeline_mode<synchronous>, transform_indices = @transform_6, window_bounds = array<i64: 1, 8>}, {transform_indices = @transform_7, window_bounds = array<i64: 1, 8, 256>}]} {
    %c0 = arith.constant 0 : index
    %c0_0 = arith.constant 0 : index
    %c0_1 = arith.constant 0 : index
    %0 = vector.load %arg1[%c0, %c0_0, %c0_1] : memref<1x8x256xf32, #tpu.memory_space<vmem>>, vector<1x8x256xf32>
    %1 = vector.shape_cast %0 : vector<1x8x256xf32> to vector<8x256xf32>
    %cst = arith.constant 0.000000e+00 : bf16
    %2 = vector.broadcast %cst : bf16 to vector<18x8xbf16>
    %c0_2 = arith.constant 0 : index
    %c0_3 = arith.constant 0 : index
    %c0_4 = arith.constant 0 : index
    %3 = vector.load %arg9[%c0_2, %c0_3, %c0_4] : memref<18x18x8xbf16, #tpu.memory_space<vmem>>, vector<1x18x8xbf16>
    %4 = vector.shape_cast %3 : vector<1x18x8xbf16> to vector<18x8xbf16>
    %5 = vector.shape_cast %2 : vector<18x8xbf16> to vector<1x18x8xbf16>
    tpu.vector_store %arg9[%c0_2, %c0_3, %c0_4], %5 {strides = array<i32>} : memref<18x18x8xbf16, #tpu.memory_space<vmem>>, vector<1x18x8xbf16>,
    %c17 = arith.constant 17 : index
    %c0_5 = arith.constant 0 : index
    %c0_6 = arith.constant 0 : index
    %6 = vector.load %arg9[%c17, %c0_5, %c0_6] : memref<18x18x8xbf16, #tpu.memory_space<vmem>>, vector<1x18x8xbf16>
    %7 = vector.shape_cast %6 : vector<1x18x8xbf16> to vector<18x8xbf16>
    %8 = vector.shape_cast %2 : vector<18x8xbf16> to vector<1x18x8xbf16>
    tpu.vector_store %arg9[%c17, %c0_5, %c0_6], %8 {strides = array<i32>} : memref<18x18x8xbf16, #tpu.memory_space<vmem>>, vector<1x18x8xbf16>,
    %cst_7 = arith.constant 0.000000e+00 : bf16
    %9 = vector.broadcast %cst_7 : bf16 to vector<16x1x8xbf16>
    %c1 = arith.constant 1 : index
    %c0_8 = arith.constant 0 : index
    %c0_9 = arith.constant 0 : index
    %10 = vector.load %arg9[%c1, %c0_8, %c0_9] : memref<18x18x8xbf16, #tpu.memory_space<vmem>>, vector<16x1x8xbf16>
    tpu.vector_store %arg9[%c1, %c0_8, %c0_9], %9 {strides = array<i32>} : memref<18x18x8xbf16, #tpu.memory_space<vmem>>, vector<16x1x8xbf16>,
    %c1_10 = arith.constant 1 : index
    %c17_11 = arith.constant 17 : index
    %c0_12 = arith.constant 0 : index
    %11 = vector.load %arg9[%c1_10, %c17_11, %c0_12] : memref<18x18x8xbf16, #tpu.memory_space<vmem>>, vector<16x1x8xbf16>
    tpu.vector_store %arg9[%c1_10, %c17_11, %c0_12], %9 {strides = array<i32>} : memref<18x18x8xbf16, #tpu.memory_space<vmem>>, vector<16x1x8xbf16>,
    %12 = tpu.transpose %1, [1, 0] : vector<8x256xf32> -> vector<256x8xf32>
    %13 = vector.shape_cast %12 : vector<256x8xf32> to vector<16x16x8xf32>
    %14 = arith.truncf %13 : vector<16x16x8xf32> to vector<16x16x8xbf16>
    %c1_13 = arith.constant 1 : index
    %c1_14 = arith.constant 1 : index
    %c0_15 = arith.constant 0 : index
    %15 = vector.load %arg9[%c1_13, %c1_14, %c0_15] : memref<18x18x8xbf16, #tpu.memory_space<vmem>>, vector<16x16x8xbf16>
    tpu.vector_store %arg9[%c1_13, %c1_14, %c0_15], %14 {strides = array<i32>} : memref<18x18x8xbf16, #tpu.memory_space<vmem>>, vector<16x16x8xbf16>,
    %c0_16 = arith.constant 0 : index
    %c0_17 = arith.constant 0 : index
    %c0_18 = arith.constant 0 : index
    %16 = vector.load %arg9[%c0_16, %c0_17, %c0_18] : memref<18x18x8xbf16, #tpu.memory_space<vmem>>, vector<18x18x8xbf16>
    %17 = vector.extract_strided_slice %16 {offsets = [0, 0, 0], sizes = [16, 16, 8], strides = [1, 1, 1]} : vector<18x18x8xbf16> to vector<16x16x8xbf16>
    %18 = vector.shape_cast %17 : vector<16x16x8xbf16> to vector<256x8xbf16>
    %19 = vector.extract_strided_slice %16 {offsets = [0, 1, 0], sizes = [16, 16, 8], strides = [1, 1, 1]} : vector<18x18x8xbf16> to vector<16x16x8xbf16>
    %20 = vector.shape_cast %19 : vector<16x16x8xbf16> to vector<256x8xbf16>
    %21 = vector.extract_strided_slice %16 {offsets = [0, 2, 0], sizes = [16, 16, 8], strides = [1, 1, 1]} : vector<18x18x8xbf16> to vector<16x16x8xbf16>
    %22 = vector.shape_cast %21 : vector<16x16x8xbf16> to vector<256x8xbf16>
    %23 = vector.extract_strided_slice %16 {offsets = [1, 0, 0], sizes = [16, 16, 8], strides = [1, 1, 1]} : vector<18x18x8xbf16> to vector<16x16x8xbf16>
    %24 = vector.shape_cast %23 : vector<16x16x8xbf16> to vector<256x8xbf16>
    %25 = vector.extract_strided_slice %16 {offsets = [1, 1, 0], sizes = [16, 16, 8], strides = [1, 1, 1]} : vector<18x18x8xbf16> to vector<16x16x8xbf16>
    %26 = vector.shape_cast %25 : vector<16x16x8xbf16> to vector<256x8xbf16>
    %27 = vector.extract_strided_slice %16 {offsets = [1, 2, 0], sizes = [16, 16, 8], strides = [1, 1, 1]} : vector<18x18x8xbf16> to vector<16x16x8xbf16>
    %28 = vector.shape_cast %27 : vector<16x16x8xbf16> to vector<256x8xbf16>
    %29 = vector.extract_strided_slice %16 {offsets = [2, 0, 0], sizes = [16, 16, 8], strides = [1, 1, 1]} : vector<18x18x8xbf16> to vector<16x16x8xbf16>
    %30 = vector.shape_cast %29 : vector<16x16x8xbf16> to vector<256x8xbf16>
    %31 = vector.extract_strided_slice %16 {offsets = [2, 1, 0], sizes = [16, 16, 8], strides = [1, 1, 1]} : vector<18x18x8xbf16> to vector<16x16x8xbf16>
    %32 = vector.shape_cast %31 : vector<16x16x8xbf16> to vector<256x8xbf16>
    %33 = vector.extract_strided_slice %16 {offsets = [2, 2, 0], sizes = [16, 16, 8], strides = [1, 1, 1]} : vector<18x18x8xbf16> to vector<16x16x8xbf16>
    %34 = vector.shape_cast %33 : vector<16x16x8xbf16> to vector<256x8xbf16>
    %35 = tpu.concatenate %18, %20, %22, %24, %26, %28, %30, %32, %34 in 1 : vector<256x8xbf16>, vector<256x8xbf16>, vector<256x8xbf16>, vector<256x8xbf16>, vector<256x8xbf16>, vector<256x8xbf16>, vector<256x8xbf16>, vector<256x8xbf16>, vector<256x8xbf16> -> vector<256x72xbf16>
    %c0_19 = arith.constant 0 : index
    %c0_20 = arith.constant 0 : index
    %36 = vector.load %arg2[%c0_19, %c0_20] : memref<72x8xbf16, #tpu.memory_space<vmem>>, vector<72x8xbf16>
    %cst_21 = arith.constant dense<0.000000e+00> : vector<256x8xf32>
    %37 = tpu.matmul %35, %36, %cst_21 {dimension_numbers = #tpu.dot_dimension_numbers<[1], [0], [0], [1], [0, 0, 1, 1], [], []>} : vector<256x72xbf16>, vector<72x8xbf16>, vector<256x8xf32> -> vector<256x8xf32>
    %c0_22 = arith.constant 0 : index
    %c0_23 = arith.constant 0 : index
    %38 = vector.load %arg3[%c0_22, %c0_23] : memref<1x8xf32, #tpu.memory_space<vmem>>, vector<1x8xf32>
    %39 = vector.broadcast %38 : vector<1x8xf32> to vector<256x8xf32>
    %40 = arith.mulf %37, %39 : vector<256x8xf32>
    %c0_24 = arith.constant 0 : index
    %c0_25 = arith.constant 0 : index
    %41 = vector.load %arg4[%c0_24, %c0_25] : memref<1x8xf32, #tpu.memory_space<vmem>>, vector<1x8xf32>
    %42 = vector.broadcast %41 : vector<1x8xf32> to vector<256x8xf32>
    %43 = arith.addf %40, %42 : vector<256x8xf32>
    %cst_26 = arith.constant 0.000000e+00 : f32
    %44 = vector.broadcast %cst_26 : f32 to vector<256x8xf32>
    %45 = arith.maximumf %43, %44 : vector<256x8xf32>
    %46 = arith.truncf %45 : vector<256x8xf32> to vector<256x8xbf16>
    %47 = vector.shape_cast %46 : vector<256x8xbf16> to vector<16x16x8xbf16>
    %c1_27 = arith.constant 1 : index
    %c1_28 = arith.constant 1 : index
    %c0_29 = arith.constant 0 : index
    %48 = vector.load %arg9[%c1_27, %c1_28, %c0_29] : memref<18x18x8xbf16, #tpu.memory_space<vmem>>, vector<16x16x8xbf16>
    tpu.vector_store %arg9[%c1_27, %c1_28, %c0_29], %47 {strides = array<i32>} : memref<18x18x8xbf16, #tpu.memory_space<vmem>>, vector<16x16x8xbf16>,
    %c0_30 = arith.constant 0 : index
    %c0_31 = arith.constant 0 : index
    %c0_32 = arith.constant 0 : index
    %49 = vector.load %arg9[%c0_30, %c0_31, %c0_32] : memref<18x18x8xbf16, #tpu.memory_space<vmem>>, vector<18x18x8xbf16>
    %50 = vector.extract_strided_slice %49 {offsets = [0, 0, 0], sizes = [16, 16, 8], strides = [1, 1, 1]} : vector<18x18x8xbf16> to vector<16x16x8xbf16>
    %51 = vector.shape_cast %50 : vector<16x16x8xbf16> to vector<256x8xbf16>
    %52 = vector.extract_strided_slice %49 {offsets = [0, 1, 0], sizes = [16, 16, 8], strides = [1, 1, 1]} : vector<18x18x8xbf16> to vector<16x16x8xbf16>
    %53 = vector.shape_cast %52 : vector<16x16x8xbf16> to vector<256x8xbf16>
    %54 = vector.extract_strided_slice %49 {offsets = [0, 2, 0], sizes = [16, 16, 8], strides = [1, 1, 1]} : vector<18x18x8xbf16> to vector<16x16x8xbf16>
    %55 = vector.shape_cast %54 : vector<16x16x8xbf16> to vector<256x8xbf16>
    %56 = vector.extract_strided_slice %49 {offsets = [1, 0, 0], sizes = [16, 16, 8], strides = [1, 1, 1]} : vector<18x18x8xbf16> to vector<16x16x8xbf16>
    %57 = vector.shape_cast %56 : vector<16x16x8xbf16> to vector<256x8xbf16>
    %58 = vector.extract_strided_slice %49 {offsets = [1, 1, 0], sizes = [16, 16, 8], strides = [1, 1, 1]} : vector<18x18x8xbf16> to vector<16x16x8xbf16>
    %59 = vector.shape_cast %58 : vector<16x16x8xbf16> to vector<256x8xbf16>
    %60 = vector.extract_strided_slice %49 {offsets = [1, 2, 0], sizes = [16, 16, 8], strides = [1, 1, 1]} : vector<18x18x8xbf16> to vector<16x16x8xbf16>
    %61 = vector.shape_cast %60 : vector<16x16x8xbf16> to vector<256x8xbf16>
    %62 = vector.extract_strided_slice %49 {offsets = [2, 0, 0], sizes = [16, 16, 8], strides = [1, 1, 1]} : vector<18x18x8xbf16> to vector<16x16x8xbf16>
    %63 = vector.shape_cast %62 : vector<16x16x8xbf16> to vector<256x8xbf16>
    %64 = vector.extract_strided_slice %49 {offsets = [2, 1, 0], sizes = [16, 16, 8], strides = [1, 1, 1]} : vector<18x18x8xbf16> to vector<16x16x8xbf16>
    %65 = vector.shape_cast %64 : vector<16x16x8xbf16> to vector<256x8xbf16>
    %66 = vector.extract_strided_slice %49 {offsets = [2, 2, 0], sizes = [16, 16, 8], strides = [1, 1, 1]} : vector<18x18x8xbf16> to vector<16x16x8xbf16>
    %67 = vector.shape_cast %66 : vector<16x16x8xbf16> to vector<256x8xbf16>
    %68 = tpu.concatenate %51, %53, %55, %57, %59, %61, %63, %65, %67 in 1 : vector<256x8xbf16>, vector<256x8xbf16>, vector<256x8xbf16>, vector<256x8xbf16>, vector<256x8xbf16>, vector<256x8xbf16>, vector<256x8xbf16>, vector<256x8xbf16>, vector<256x8xbf16> -> vector<256x72xbf16>
    %c0_33 = arith.constant 0 : index
    %c0_34 = arith.constant 0 : index
    %69 = vector.load %arg5[%c0_33, %c0_34] : memref<72x8xbf16, #tpu.memory_space<vmem>>, vector<72x8xbf16>
    %cst_35 = arith.constant dense<0.000000e+00> : vector<256x8xf32>
    %70 = tpu.matmul %68, %69, %cst_35 {dimension_numbers = #tpu.dot_dimension_numbers<[1], [0], [0], [1], [0, 0, 1, 1], [], []>} : vector<256x72xbf16>, vector<72x8xbf16>, vector<256x8xf32> -> vector<256x8xf32>
    %c0_36 = arith.constant 0 : index
    %c0_37 = arith.constant 0 : index
    %71 = vector.load %arg6[%c0_36, %c0_37] : memref<1x8xf32, #tpu.memory_space<vmem>>, vector<1x8xf32>
    %72 = vector.broadcast %71 : vector<1x8xf32> to vector<256x8xf32>
    %73 = arith.mulf %70, %72 : vector<256x8xf32>
    %c0_38 = arith.constant 0 : index
    %c0_39 = arith.constant 0 : index
    %74 = vector.load %arg7[%c0_38, %c0_39] : memref<1x8xf32, #tpu.memory_space<vmem>>, vector<1x8xf32>
    %75 = vector.broadcast %74 : vector<1x8xf32> to vector<256x8xf32>
    %76 = arith.addf %73, %75 : vector<256x8xf32>
    %77 = tpu.transpose %76, [1, 0] : vector<256x8xf32> -> vector<8x256xf32>
    %78 = arith.addf %77, %1 : vector<8x256xf32>
    %cst_40 = arith.constant 0.000000e+00 : f32
    %79 = vector.broadcast %cst_40 : f32 to vector<8x256xf32>
    %80 = arith.maximumf %78, %79 : vector<8x256xf32>
    %c0_41 = arith.constant 0 : index
    %c0_42 = arith.constant 0 : index
    %c0_43 = arith.constant 0 : index
    %81 = vector.load %arg8[%c0_41, %c0_42, %c0_43] : memref<1x8x256xf32, #tpu.memory_space<vmem>>, vector<1x8x256xf32>
    %82 = vector.shape_cast %81 : vector<1x8x256xf32> to vector<8x256xf32>
    %83 = vector.shape_cast %80 : vector<8x256xf32> to vector<1x8x256xf32>
    tpu.vector_store %arg8[%c0_41, %c0_42, %c0_43], %83 {strides = array<i32>} : memref<1x8x256xf32, #tpu.memory_space<vmem>>, vector<1x8x256xf32>,
    return
  }
  func.func @transform_0(%arg0: i32) -> (i32, i32, i32) {
    %c0_i32 = arith.constant 0 : i32
    %c0_i32_0 = arith.constant 0 : i32
    %c0_i32_1 = arith.constant 0 : i32
    return %arg0, %c0_i32, %c0_i32_0 : i32, i32, i32
  }
  func.func @transform_1(%arg0: i32) -> (i32, i32) {
    %c0_i32 = arith.constant 0 : i32
    %c0_i32_0 = arith.constant 0 : i32
    %c0_i32_1 = arith.constant 0 : i32
    return %c0_i32, %c0_i32_0 : i32, i32
  }
  func.func @transform_2(%arg0: i32) -> (i32, i32) {
    %c0_i32 = arith.constant 0 : i32
    %c0_i32_0 = arith.constant 0 : i32
    %c0_i32_1 = arith.constant 0 : i32
    return %c0_i32, %c0_i32_0 : i32, i32
  }
  func.func @transform_3(%arg0: i32) -> (i32, i32) {
    %c0_i32 = arith.constant 0 : i32
    %c0_i32_0 = arith.constant 0 : i32
    %c0_i32_1 = arith.constant 0 : i32
    return %c0_i32, %c0_i32_0 : i32, i32
  }
  func.func @transform_4(%arg0: i32) -> (i32, i32) {
    %c0_i32 = arith.constant 0 : i32
    %c0_i32_0 = arith.constant 0 : i32
    %c0_i32_1 = arith.constant 0 : i32
    return %c0_i32, %c0_i32_0 : i32, i32
  }
  func.func @transform_5(%arg0: i32) -> (i32, i32) {
    %c0_i32 = arith.constant 0 : i32
    %c0_i32_0 = arith.constant 0 : i32
    %c0_i32_1 = arith.constant 0 : i32
    return %c0_i32, %c0_i32_0 : i32, i32
  }
  func.func @transform_6(%arg0: i32) -> (i32, i32) {
    %c0_i32 = arith.constant 0 : i32
    %c0_i32_0 = arith.constant 0 : i32
    %c0_i32_1 = arith.constant 0 : i32
    return %c0_i32, %c0_i32_0 : i32, i32
  }
  func.func @transform_7(%arg0: i32) -> (i32, i32, i32) {
    %c0_i32 = arith.constant 0 : i32
    %c0_i32_0 = arith.constant 0 : i32
    %c0_i32_1 = arith.constant 0 : i32
    return %arg0, %c0_i32, %c0_i32_0 : i32, i32, i32
  }
}

</mosaic_0001>

<llo_original>
// kernel: tpu_custom_call.1
$region0: #{tpu_custom_call.1}
  #allocation0 [shape = 'u32[]', space=smem, size = 0x4, offset = 0x4, fixed_abs, tag = 'smem constant byte address 0x4 - core index']
  #allocation1 [shape = 'u32[144,128]{1,0:T(1,128)}', space=vmem, size = 0x12000, scoped, tag = 'internal scratch']
  #allocation2 [shape = 'bf16[18,18,8]{2,1,0:T(8,128)(2,1)}', space=vmem, size = 0x1b000, scoped, tag = 'scratch operand']
  %s0 = inlined_call_operand.vmem [shape: f32[2,8,256], index: 0, kind: input, shape index: {}]
  %s1 = inlined_call_operand.vmem [shape: bf16[72,8], index: 1, kind: input, shape index: {}]
  %s2 = inlined_call_operand.vmem [shape: f32[1,8], index: 2, kind: input, shape index: {}]
  %s3 = inlined_call_operand.vmem [shape: f32[1,8], index: 3, kind: input, shape index: {}]
  %s4 = inlined_call_operand.vmem [shape: bf16[72,8], index: 4, kind: input, shape index: {}]
  %s5 = inlined_call_operand.vmem [shape: f32[1,8], index: 5, kind: input, shape index: {}]
  %s6 = inlined_call_operand.vmem [shape: f32[1,8], index: 6, kind: input, shape index: {}]
  %s7 = inlined_call_operand.hbm [shape: f32[2,8,256], index: 7, kind: output, shape index: {}]
  %s8 = sld [smem:[#allocation0]]
  $region61: #{tpu_custom_call.1} parent=0
    _
  %s10 = ssub.s32 1, %s8
  %s11 = scalar_select 0, %s10, %s8
  $region1: #{tpu_custom_call.1} parent=0
    #allocation3 [shape = 'u8[16384]{0}', space=vmem, size = 0x4000, scoped, tag = 'output window, operand 0']
    #allocation4 [shape = 's32[2]{0}', space=sflag, size = 0x8, scoped, tag = 'scoped memory for tpu_custom_call.1']
    %12 = vsyncpa [#allocation4], 0
    %s13 = scalar_lea.sflag [#allocation4], 1
    %14 = vsyncpa %s13, 0
    loop: start=0, step=1, limit=4
    $region2: #{tpu_custom_call.1} parent=1 // loop_pre_header
      _
    $region3: #{tpu_custom_call.1} parent=1 // loop_header
      %s16 = sphi 0, %s20
      %p17 = scmp.ge.s32.totalorder %s16, 4
      %s26 = sphi 0, %s28
      %s29 = sphi 0, %s26
      %s30 = sphi 0, %s29
      %s46 = sphi 0, %s30
      %s50 = sphi 0, %s50
      %s52 = sphi 0, %s50
      %s53 = sphi 0, %s52
      %s67 = sphi 0, %s53
      %s71 = sphi 0, %s71
      %s73 = sphi 0, %s71
      %s74 = sphi 0, %s73
      %s88 = sphi 0, %s74
      %s92 = sphi 0, %s92
      %s94 = sphi 0, %s92
      %s95 = sphi 0, %s94
      %s109 = sphi 0, %s95
      %s113 = sphi 0, %s113
      %s115 = sphi 0, %s113
      %s116 = sphi 0, %s115
      %s130 = sphi 0, %s116
      %s134 = sphi 0, %s134
      %s136 = sphi 0, %s134
      %s137 = sphi 0, %s136
      %s151 = sphi 0, %s137
      %s155 = sphi 0, %s155
      %s157 = sphi 0, %s155
      %s158 = sphi 0, %s157
      %s172 = sphi 0, %s158
      %s178 = sphi 0, %s180
      %s181 = sphi 0, %s178
      %s182 = sphi 0, %s181
      %s198 = sphi 0, %s182
    $region4: #{tpu_custom_call.1} parent=1 // loop_header_branch
      %19 = sbr.rel (%p17) target = $region8
    $region5: #{tpu_custom_call.1} parent=1 // loop_body
      %s21 = ssub.s32 %s16, 1
      %s22 = ssub.s32 %s16, 2
      %s23 = sadd.s32 %s16, 1
      %s24 = ssub.s32 %s16, %s23
      %p25 = scmp.eq.s32.totalorder %s24, 0
      %s27 = sadd.s32 %s26, 1
      %s28 = scalar_select %p25, %s26, %s27
      %p31 = pneg %p25
      %p32 = scmp.eq.s32.totalorder %s16, 1
      %p33 = por %p31, %p32
      %p34 = scmp.ne.s32.totalorder %s26, %s29
      %p35 = scmp.eq.s32.totalorder %s16, 0
      %p36 = por %p34, %p35
      %p37 = scmp.ne.s32.totalorder %s26, %s29
      %p38 = scmp.eq.s32.totalorder %s21, 1
      %p39 = por %p37, %p38
      %p40 = scmp.ne.s32.totalorder %s29, %s30
      %p41 = scmp.eq.s32.totalorder %s21, 0
      %p42 = por %p40, %p41
      %p43 = scmp.ne.s32.totalorder %s29, %s30
      %p44 = scmp.eq.s32.totalorder %s22, 1
      %p45 = por %p43, %p44
      %p47 = scmp.ne.s32.totalorder %s30, %s46
      %p48 = scmp.eq.s32.totalorder %s22, 0
      %p49 = por %p47, %p48
      %s51 = sadd.s32 %s50, 1
      %p54 = scmp.eq.s32.totalorder %s16, 1
      %p55 = scmp.ne.s32.totalorder %s50, %s52
      %p56 = scmp.eq.s32.totalorder %s16, 0
      %p57 = por %p55, %p56
      %p58 = scmp.ne.s32.totalorder %s50, %s52
      %p59 = scmp.eq.s32.totalorder %s21, 1
      %p60 = por %p58, %p59
      %p61 = scmp.ne.s32.totalorder %s52, %s53
      %p62 = scmp.eq.s32.totalorder %s21, 0
      %p63 = por %p61, %p62
      %p64 = scmp.ne.s32.totalorder %s52, %s53
      %p65 = scmp.eq.s32.totalorder %s22, 1
      %p66 = por %p64, %p65
      %p68 = scmp.ne.s32.totalorder %s53, %s67
      %p69 = scmp.eq.s32.totalorder %s22, 0
      %p70 = por %p68, %p69
      %s72 = sadd.s32 %s71, 1
      %p75 = scmp.eq.s32.totalorder %s16, 1
      %p76 = scmp.ne.s32.totalorder %s71, %s73
      %p77 = scmp.eq.s32.totalorder %s16, 0
      %p78 = por %p76, %p77
      %p79 = scmp.ne.s32.totalorder %s71, %s73
      %p80 = scmp.eq.s32.totalorder %s21, 1
      %p81 = por %p79, %p80
      %p82 = scmp.ne.s32.totalorder %s73, %s74
      %p83 = scmp.eq.s32.totalorder %s21, 0
      %p84 = por %p82, %p83
      %p85 = scmp.ne.s32.totalorder %s73, %s74
      %p86 = scmp.eq.s32.totalorder %s22, 1
      %p87 = por %p85, %p86
      %p89 = scmp.ne.s32.totalorder %s74, %s88
      %p90 = scmp.eq.s32.totalorder %s22, 0
      %p91 = por %p89, %p90
      %s93 = sadd.s32 %s92, 1
      %p96 = scmp.eq.s32.totalorder %s16, 1
      %p97 = scmp.ne.s32.totalorder %s92, %s94
      %p98 = scmp.eq.s32.totalorder %s16, 0
      %p99 = por %p97, %p98
      %p100 = scmp.ne.s32.totalorder %s92, %s94
      %p101 = scmp.eq.s32.totalorder %s21, 1
      %p102 = por %p100, %p101
      %p103 = scmp.ne.s32.totalorder %s94, %s95
      %p104 = scmp.eq.s32.totalorder %s21, 0
      %p105 = por %p103, %p104
      %p106 = scmp.ne.s32.totalorder %s94, %s95
      %p107 = scmp.eq.s32.totalorder %s22, 1
      %p108 = por %p106, %p107
      %p110 = scmp.ne.s32.totalorder %s95, %s109
      %p111 = scmp.eq.s32.totalorder %s22, 0
      %p112 = por %p110, %p111
      %s114 = sadd.s32 %s113, 1
      %p117 = scmp.eq.s32.totalorder %s16, 1
      %p118 = scmp.ne.s32.totalorder %s113, %s115
      %p119 = scmp.eq.s32.totalorder %s16, 0
      %p120 = por %p118, %p119
      %p121 = scmp.ne.s32.totalorder %s113, %s115
      %p122 = scmp.eq.s32.totalorder %s21, 1
      %p123 = por %p121, %p122
      %p124 = scmp.ne.s32.totalorder %s115, %s116
      %p125 = scmp.eq.s32.totalorder %s21, 0
      %p126 = por %p124, %p125
      %p127 = scmp.ne.s32.totalorder %s115, %s116
      %p128 = scmp.eq.s32.totalorder %s22, 1
      %p129 = por %p127, %p128
      %p131 = scmp.ne.s32.totalorder %s116, %s130
      %p132 = scmp.eq.s32.totalorder %s22, 0
      %p133 = por %p131, %p132
      %s135 = sadd.s32 %s134, 1
      %p138 = scmp.eq.s32.totalorder %s16, 1
      %p139 = scmp.ne.s32.totalorder %s134, %s136
      %p140 = scmp.eq.s32.totalorder %s16, 0
      %p141 = por %p139, %p140
      %p142 = scmp.ne.s32.totalorder %s134, %s136
      %p143 = scmp.eq.s32.totalorder %s21, 1
      %p144 = por %p142, %p143
      %p145 = scmp.ne.s32.totalorder %s136, %s137
      %p146 = scmp.eq.s32.totalorder %s21, 0
      %p147 = por %p145, %p146
      %p148 = scmp.ne.s32.totalorder %s136, %s137
      %p149 = scmp.eq.s32.totalorder %s22, 1
      %p150 = por %p148, %p149
      %p152 = scmp.ne.s32.totalorder %s137, %s151
      %p153 = scmp.eq.s32.totalorder %s22, 0
      %p154 = por %p152, %p153
      %s156 = sadd.s32 %s155, 1
      %p159 = scmp.eq.s32.totalorder %s16, 1
      %p160 = scmp.ne.s32.totalorder %s155, %s157
      %p161 = scmp.eq.s32.totalorder %s16, 0
      %p162 = por %p160, %p161
      %p163 = scmp.ne.s32.totalorder %s155, %s157
      %p164 = scmp.eq.s32.totalorder %s21, 1
      %p165 = por %p163, %p164
      %p166 = scmp.ne.s32.totalorder %s157, %s158
      %p167 = scmp.eq.s32.totalorder %s21, 0
      %p168 = por %p166, %p167
      %p169 = scmp.ne.s32.totalorder %s157, %s158
      %p170 = scmp.eq.s32.totalorder %s22, 1
      %p171 = por %p169, %p170
      %p173 = scmp.ne.s32.totalorder %s158, %s172
      %p174 = scmp.eq.s32.totalorder %s22, 0
      %p175 = por %p173, %p174
      %s176 = ssub.s32 %s16, %s23
      %p177 = scmp.eq.s32.totalorder %s176, 0
      %s179 = sadd.s32 %s178, 1
      %s180 = scalar_select %p177, %s178, %s179
      %p183 = pneg %p177
      %p184 = scmp.eq.s32.totalorder %s16, 1
      %p185 = por %p183, %p184
      %p186 = scmp.ne.s32.totalorder %s178, %s181
      %p187 = scmp.eq.s32.totalorder %s16, 0
      %p188 = por %p186, %p187
      %p189 = scmp.ne.s32.totalorder %s178, %s181
      %p190 = scmp.eq.s32.totalorder %s21, 1
      %p191 = por %p189, %p190
      %p192 = scmp.ne.s32.totalorder %s181, %s182
      %p193 = scmp.eq.s32.totalorder %s21, 0
      %p194 = por %p192, %p193
      %p195 = scmp.ne.s32.totalorder %s181, %s182
      %p196 = scmp.eq.s32.totalorder %s22, 1
      %p197 = por %p195, %p196
      %p199 = scmp.ne.s32.totalorder %s182, %s198
      %p200 = scmp.eq.s32.totalorder %s22, 0
      %p201 = por %p199, %p200
      %p202 = scmp.le.s32.totalorder 1, %s16
      %p203 = scmp.lt.s32.totalorder %s16, 3
      %p204 = pnand %p202, %p203
      %p205 = pneg %p204
      // Predicated region
      $region9: #{tpu_custom_call.1} parent=5 // pred_check
        _
      $region10: #{tpu_custom_call.1} parent=5 // pred_check_branch
        %207 = sbr.rel (%p204) target = $region12
      $region11: #{tpu_custom_call.1} parent=5 // pred_region
        %s208 = ssub.s32 %s16, 1
        // Predicated region
        $region13: #{tpu_custom_call.1} parent=11 // pred_check
          %p209 = pneg %p63
        $region14: #{tpu_custom_call.1} parent=11 // pred_check_branch
          %211 = sbr.rel (%p209) target = $region16
        $region15: #{tpu_custom_call.1} parent=11 // pred_region
          _
        $region16: #{tpu_custom_call.1} parent=11 // pred_fallthru
          _
        // Predicated region
        $region17: #{tpu_custom_call.1} parent=11 // pred_check
          %p212 = pneg %p84
        $region18: #{tpu_custom_call.1} parent=11 // pred_check_branch
          %214 = sbr.rel (%p212) target = $region20
        $region19: #{tpu_custom_call.1} parent=11 // pred_region
          _
        $region20: #{tpu_custom_call.1} parent=11 // pred_fallthru
          _
        // Predicated region
        $region21: #{tpu_custom_call.1} parent=11 // pred_check
          %p215 = pneg %p105
        $region22: #{tpu_custom_call.1} parent=11 // pred_check_branch
          %217 = sbr.rel (%p215) target = $region24
        $region23: #{tpu_custom_call.1} parent=11 // pred_region
          _
        $region24: #{tpu_custom_call.1} parent=11 // pred_fallthru
          _
        // Predicated region
        $region25: #{tpu_custom_call.1} parent=11 // pred_check
          %p218 = pneg %p126
        $region26: #{tpu_custom_call.1} parent=11 // pred_check_branch
          %220 = sbr.rel (%p218) target = $region28
        $region27: #{tpu_custom_call.1} parent=11 // pred_region
          _
        $region28: #{tpu_custom_call.1} parent=11 // pred_fallthru
          _
        // Predicated region
        $region29: #{tpu_custom_call.1} parent=11 // pred_check
          %p221 = pneg %p147
        $region30: #{tpu_custom_call.1} parent=11 // pred_check_branch
          %223 = sbr.rel (%p221) target = $region32
        $region31: #{tpu_custom_call.1} parent=11 // pred_region
          _
        $region32: #{tpu_custom_call.1} parent=11 // pred_fallthru
          _
        // Predicated region
        $region33: #{tpu_custom_call.1} parent=11 // pred_check
          %p224 = pneg %p168
        $region34: #{tpu_custom_call.1} parent=11 // pred_check_branch
          %226 = sbr.rel (%p224) target = $region36
        $region35: #{tpu_custom_call.1} parent=11 // pred_region
          _
        $region36: #{tpu_custom_call.1} parent=11 // pred_fallthru
          _
      $region12: #{tpu_custom_call.1} parent=5 // pred_fallthru
        _
      %p227 = scmp.lt.s32.totalorder %s16, 2
      // Predicated region
      $region37: #{tpu_custom_call.1} parent=5 // pred_check
        %p228 = pneg %p227
      $region38: #{tpu_custom_call.1} parent=5 // pred_check_branch
        %230 = sbr.rel (%p228) target = $region40
      $region39: #{tpu_custom_call.1} parent=5 // pred_region
        // Predicated region
        $region41: #{tpu_custom_call.1} parent=39 // pred_check
          %p231 = pneg %p36
        $region42: #{tpu_custom_call.1} parent=39 // pred_check_branch
          %233 = sbr.rel (%p231) target = $region44
        $region43: #{tpu_custom_call.1} parent=39 // pred_region
          %p234 = scmp.lt.s32.totalorder %s16, 1
          %s235 = scalar_select %p234, %s16, 1
          %s236 = smul.addr %s235, 2
          %s237 = smul.addr %s236, 8
          %s238 = scalar_lea.vmem %s0, %s237
        $region44: #{tpu_custom_call.1} parent=39 // pred_fallthru
          _
      $region40: #{tpu_custom_call.1} parent=5 // pred_fallthru
        _
      %p239 = scmp.le.s32.totalorder 1, %s16
      %p240 = scmp.lt.s32.totalorder %s16, 3
      %p241 = pnand %p239, %p240
      %p242 = pneg %p241
      // Predicated region
      $region45: #{tpu_custom_call.1} parent=5 // pred_check
        _
      $region46: #{tpu_custom_call.1} parent=5 // pred_check_branch
        %244 = sbr.rel (%p241) target = $region48
      $region47: #{tpu_custom_call.1} parent=5 // pred_region
        %s245 = ssub.s32 %s16, 1
        %p246 = scmp.lt.s32.totalorder %s21, 1
        %s247 = scalar_select %p246, %s21, 1
        %s248 = smul.addr %s247, 2
        %s249 = smul.addr %s248, 8
        %s250 = scalar_lea.vmem %s0, %s249
        %p251 = pneg %p42
        %p252 = pneg %p39
        %p253 = pneg %p63
        %p254 = pneg %p60
        %p255 = pneg %p84
        %p256 = pneg %p81
        %p257 = pneg %p105
        %p258 = pneg %p102
        %p259 = pneg %p126
        %p260 = pneg %p123
        %p261 = pneg %p147
        %p262 = pneg %p144
        %p263 = pneg %p168
        %p264 = pneg %p165
        %p265 = pneg %p194
        %p266 = pneg %p191
        %s267 = sand.u32 %s181, 1
        %s268 = scalar_lea.sflag [#allocation4], %s267
        %s269 = sand.u32 %s181, 1
        %s270 = smul.addr %s269, 16
        %s271 = scalar_lea.vmem [#allocation3], %s270
        %p272 = scmp.lt.s32.totalorder %s21, 1
        %s273 = scalar_select %p272, %s21, 1
        %s274 = smul.addr %s273, 2
        %s275 = smul.addr %s274, 8
        %s276 = scalar_lea.vmem %s0, %s275
        %v278 = vld [vmem:[%s276] sm:$0xff]
        %v279 = vld [vmem:[%s276 + $0x8] sm:$0xff]
        %vm280 = vcmask 60416
        %281 = vst.msk [vmem:[#allocation2] sm:$0xf] %vm280, 0
        %282 = vst.msk [vmem:[#allocation2 + $0x4] sm:$0xf] %vm280, 0
        %vm283 = vcmask 57344
        %284 = vst.msk [vmem:[#allocation2 + $0x8] sm:$0x1] %vm283, 0
        %s285 = scalar_lea.vmem [#allocation2], 204
        %286 = vst.msk [vmem:[%s285] sm:$0xf] %vm280, 0
        %287 = vst.msk [vmem:[%s285 + $0x4] sm:$0xf] %vm280, 0
        %288 = vst.msk [vmem:[%s285 + $0x8] sm:$0x1] %vm283, 0
        %s289 = scalar_lea.vmem [#allocation2], 12
        %vm290 = vcmask 57344
        %vm291 = vsmask.f32 256
        %vm292 = vmand %vm290, %vm291
        %v293 = vld [vmem:[%s289] sm:$0x1]
        %v294 = vsel %vm292, 0, %v293
        %295 = vst [vmem:[%s289] sm:$0x1] %v294
        %v296 = vld [vmem:[%s289 + $0xc] sm:$0x1]
        %v297 = vsel %vm292, 0, %v296
        %298 = vst [vmem:[%s289 + $0xc] sm:$0x1] %v297
        %v299 = vld [vmem:[%s289 + $0x18] sm:$0x1]
        %v300 = vsel %vm292, 0, %v299
        %301 = vst [vmem:[%s289 + $0x18] sm:$0x1] %v300
        %v302 = vld [vmem:[%s289 + $0x24] sm:$0x1]
        %v303 = vsel %vm292, 0, %v302
        %304 = vst [vmem:[%s289 + $0x24] sm:$0x1] %v303
        %v305 = vld [vmem:[%s289 + $0x30] sm:$0x1]
        %v306 = vsel %vm292, 0, %v305
        %307 = vst [vmem:[%s289 + $0x30] sm:$0x1] %v306
        %v308 = vld [vmem:[%s289 + $0x3c] sm:$0x1]
        %v309 = vsel %vm292, 0, %v308
        %310 = vst [vmem:[%s289 + $0x3c] sm:$0x1] %v309
        %v311 = vld [vmem:[%s289 + $0x48] sm:$0x1]
        %v312 = vsel %vm292, 0, %v311
        %313 = vst [vmem:[%s289 + $0x48] sm:$0x1] %v312
        %v314 = vld [vmem:[%s289 + $0x54] sm:$0x1]
        %v315 = vsel %vm292, 0, %v314
        %316 = vst [vmem:[%s289 + $0x54] sm:$0x1] %v315
        %v317 = vld [vmem:[%s289 + $0x60] sm:$0x1]
        %v318 = vsel %vm292, 0, %v317
        %319 = vst [vmem:[%s289 + $0x60] sm:$0x1] %v318
        %v320 = vld [vmem:[%s289 + $0x6c] sm:$0x1]
        %v321 = vsel %vm292, 0, %v320
        %322 = vst [vmem:[%s289 + $0x6c] sm:$0x1] %v321
        %v323 = vld [vmem:[%s289 + $0x78] sm:$0x1]
        %v324 = vsel %vm292, 0, %v323
        %325 = vst [vmem:[%s289 + $0x78] sm:$0x1] %v324
        %v326 = vld [vmem:[%s289 + $0x84] sm:$0x1]
        %v327 = vsel %vm292, 0, %v326
        %328 = vst [vmem:[%s289 + $0x84] sm:$0x1] %v327
        %v329 = vld [vmem:[%s289 + $0x90] sm:$0x1]
        %v330 = vsel %vm292, 0, %v329
        %331 = vst [vmem:[%s289 + $0x90] sm:$0x1] %v330
        %v332 = vld [vmem:[%s289 + $0x9c] sm:$0x1]
        %v333 = vsel %vm292, 0, %v332
        %334 = vst [vmem:[%s289 + $0x9c] sm:$0x1] %v333
        %v335 = vld [vmem:[%s289 + $0xa8] sm:$0x1]
        %v336 = vsel %vm292, 0, %v335
        %337 = vst [vmem:[%s289 + $0xa8] sm:$0x1] %v336
        %v338 = vld [vmem:[%s289 + $0xb4] sm:$0x1]
        %v339 = vsel %vm292, 0, %v338
        %340 = vst [vmem:[%s289 + $0xb4] sm:$0x1] %v339
        %vm341 = vsmask.f32 7938
        %vm342 = vmand %vm290, %vm341
        %v343 = vld [vmem:[%s289 + $0x8] sm:$0x1]
        %v344 = vsel %vm342, 0, %v343
        %345 = vst [vmem:[%s289 + $0x8] sm:$0x1] %v344
        %v346 = vld [vmem:[%s289 + $0x14] sm:$0x1]
        %v347 = vsel %vm342, 0, %v346
        %348 = vst [vmem:[%s289 + $0x14] sm:$0x1] %v347
        %v349 = vld [vmem:[%s289 + $0x20] sm:$0x1]
        %v350 = vsel %vm342, 0, %v349
        %351 = vst [vmem:[%s289 + $0x20] sm:$0x1] %v350
        %v352 = vld [vmem:[%s289 + $0x2c] sm:$0x1]
        %v353 = vsel %vm342, 0, %v352
        %354 = vst [vmem:[%s289 + $0x2c] sm:$0x1] %v353
        %v355 = vld [vmem:[%s289 + $0x38] sm:$0x1]
        %v356 = vsel %vm342, 0, %v355
        %357 = vst [vmem:[%s289 + $0x38] sm:$0x1] %v356
        %v358 = vld [vmem:[%s289 + $0x44] sm:$0x1]
        %v359 = vsel %vm342, 0, %v358
        %360 = vst [vmem:[%s289 + $0x44] sm:$0x1] %v359
        %v361 = vld [vmem:[%s289 + $0x50] sm:$0x1]
        %v362 = vsel %vm342, 0, %v361
        %363 = vst [vmem:[%s289 + $0x50] sm:$0x1] %v362
        %v364 = vld [vmem:[%s289 + $0x5c] sm:$0x1]
        %v365 = vsel %vm342, 0, %v364
        %366 = vst [vmem:[%s289 + $0x5c] sm:$0x1] %v365
        %v367 = vld [vmem:[%s289 + $0x68] sm:$0x1]
        %v368 = vsel %vm342, 0, %v367
        %369 = vst [vmem:[%s289 + $0x68] sm:$0x1] %v368
        %v370 = vld [vmem:[%s289 + $0x74] sm:$0x1]
        %v371 = vsel %vm342, 0, %v370
        %372 = vst [vmem:[%s289 + $0x74] sm:$0x1] %v371
        %v373 = vld [vmem:[%s289 + $0x80] sm:$0x1]
        %v374 = vsel %vm342, 0, %v373
        %375 = vst [vmem:[%s289 + $0x80] sm:$0x1] %v374
        %v376 = vld [vmem:[%s289 + $0x8c] sm:$0x1]
        %v377 = vsel %vm342, 0, %v376
        %378 = vst [vmem:[%s289 + $0x8c] sm:$0x1] %v377
        %v379 = vld [vmem:[%s289 + $0x98] sm:$0x1]
        %v380 = vsel %vm342, 0, %v379
        %381 = vst [vmem:[%s289 + $0x98] sm:$0x1] %v380
        %v382 = vld [vmem:[%s289 + $0xa4] sm:$0x1]
        %v383 = vsel %vm342, 0, %v382
        %384 = vst [vmem:[%s289 + $0xa4] sm:$0x1] %v383
        %v385 = vld [vmem:[%s289 + $0xb0] sm:$0x1]
        %v386 = vsel %vm342, 0, %v385
        %387 = vst [vmem:[%s289 + $0xb0] sm:$0x1] %v386
        %v388 = vld [vmem:[%s289 + $0xbc] sm:$0x1]
        %v389 = vsel %vm342, 0, %v388
        %390 = vst [vmem:[%s289 + $0xbc] sm:$0x1] %v389
        %391 = vxpose.xlu0.b32.start [1/16] %v278, 128
        %392 = vxpose.xlu0.b32.cont [2/16] 0.0, 128
        %393 = vxpose.xlu0.b32.cont [3/16] 0.0, 128
        %394 = vxpose.xlu0.b32.cont [4/16] 0.0, 128
        %395 = vxpose.xlu0.b32.cont [5/16] 0.0, 128
        %396 = vxpose.xlu0.b32.cont [6/16] 0.0, 128
        %397 = vxpose.xlu0.b32.cont [7/16] 0.0, 128
        %398 = vxpose.xlu0.b32.cont [8/16] 0.0, 128
        %399 = vxpose.xlu0.b32.cont [9/16] 0.0, 128
        %400 = vxpose.xlu0.b32.cont [10/16] 0.0, 128
        %401 = vxpose.xlu0.b32.cont [11/16] 0.0, 128
        %402 = vxpose.xlu0.b32.cont [12/16] 0.0, 128
        %403 = vxpose.xlu0.b32.cont [13/16] 0.0, 128
        %404 = vxpose.xlu0.b32.cont [14/16] 0.0, 128
        %405 = vxpose.xlu0.b32.cont [15/16] 0.0, 128
        %406 = vxpose.xlu0.b32.end [16/16] 0.0, 128
        %v407 = vpop.trf.xlu0
        %v408 = vpop.trf.xlu0
        %v409 = vpop.trf.xlu0
        %v410 = vpop.trf.xlu0
        %v411 = vpop.trf.xlu0
        %v412 = vpop.trf.xlu0
        %v413 = vpop.trf.xlu0
        %v414 = vpop.trf.xlu0
        %v415 = vpop.trf.xlu0
        %v416 = vpop.trf.xlu0
        %v417 = vpop.trf.xlu0
        %v418 = vpop.trf.xlu0
        %v419 = vpop.trf.xlu0
        %v420 = vpop.trf.xlu0
        %v421 = vpop.trf.xlu0
        %v422 = vpop.trf.xlu0
        %423 = vxpose.xlu0.b32.start [1/16] %v279, 128
        %424 = vxpose.xlu0.b32.cont [2/16] 0.0, 128
        %425 = vxpose.xlu0.b32.cont [3/16] 0.0, 128
        %426 = vxpose.xlu0.b32.cont [4/16] 0.0, 128
        %427 = vxpose.xlu0.b32.cont [5/16] 0.0, 128
        %428 = vxpose.xlu0.b32.cont [6/16] 0.0, 128
        %429 = vxpose.xlu0.b32.cont [7/16] 0.0, 128
        %430 = vxpose.xlu0.b32.cont [8/16] 0.0, 128
        %431 = vxpose.xlu0.b32.cont [9/16] 0.0, 128
        %432 = vxpose.xlu0.b32.cont [10/16] 0.0, 128
        %433 = vxpose.xlu0.b32.cont [11/16] 0.0, 128
        %434 = vxpose.xlu0.b32.cont [12/16] 0.0, 128
        %435 = vxpose.xlu0.b32.cont [13/16] 0.0, 128
        %436 = vxpose.xlu0.b32.cont [14/16] 0.0, 128
        %437 = vxpose.xlu0.b32.cont [15/16] 0.0, 128
        %438 = vxpose.xlu0.b32.end [16/16] 0.0, 128
        %v439 = vpop.trf.xlu0
        %v440 = vpop.trf.xlu0
        %v441 = vpop.trf.xlu0
        %v442 = vpop.trf.xlu0
        %v443 = vpop.trf.xlu0
        %v444 = vpop.trf.xlu0
        %v445 = vpop.trf.xlu0
        %v446 = vpop.trf.xlu0
        %v447 = vpop.trf.xlu0
        %v448 = vpop.trf.xlu0
        %v449 = vpop.trf.xlu0
        %v450 = vpop.trf.xlu0
        %v451 = vpop.trf.xlu0
        %v452 = vpop.trf.xlu0
        %v453 = vpop.trf.xlu0
        %v454 = vpop.trf.xlu0
        %v455 = vpack.c.bf16 %v408, %v407
        %v456 = vpack.c.bf16 %v410, %v409
        %v457 = vpack.c.bf16 %v412, %v411
        %v458 = vpack.c.bf16 %v414, %v413
        %v459 = vpack.c.bf16 %v416, %v415
        %v460 = vpack.c.bf16 %v418, %v417
        %v461 = vpack.c.bf16 %v420, %v419
        %v462 = vpack.c.bf16 %v422, %v421
        %v463 = vpack.c.bf16 %v440, %v439
        %v464 = vpack.c.bf16 %v442, %v441
        %v465 = vpack.c.bf16 %v444, %v443
        %v466 = vpack.c.bf16 %v446, %v445
        %v467 = vpack.c.bf16 %v448, %v447
        %v468 = vpack.c.bf16 %v450, %v449
        %v469 = vpack.c.bf16 %v452, %v451
        %v470 = vpack.c.bf16 %v454, %v453
        %v487 = vunpack.c.l.b16 %v455
        %v488 = vunpack.c.h.b16 %v455
        %v489 = vunpack.c.l.b16 %v456
        %v490 = vunpack.c.h.b16 %v456
        %v491 = vunpack.c.l.b16 %v457
        %v492 = vunpack.c.h.b16 %v457
        %v493 = vunpack.c.l.b16 %v458
        %v494 = vunpack.c.h.b16 %v458
        %v495 = vunpack.c.l.b16 %v459
        %v496 = vunpack.c.h.b16 %v459
        %v497 = vunpack.c.l.b16 %v460
        %v498 = vunpack.c.h.b16 %v460
        %v499 = vunpack.c.l.b16 %v461
        %v500 = vunpack.c.h.b16 %v461
        %v501 = vunpack.c.l.b16 %v462
        %v502 = vunpack.c.h.b16 %v462
        %v503 = vunpack.c.l.b16 %v463
        %v504 = vunpack.c.h.b16 %v463
        %v505 = vunpack.c.l.b16 %v464
        %v506 = vunpack.c.h.b16 %v464
        %v507 = vunpack.c.l.b16 %v465
        %v508 = vunpack.c.h.b16 %v465
        %v509 = vunpack.c.l.b16 %v466
        %v510 = vunpack.c.h.b16 %v466
        %v511 = vunpack.c.l.b16 %v467
        %v512 = vunpack.c.h.b16 %v467
        %v513 = vunpack.c.l.b16 %v468
        %v514 = vunpack.c.h.b16 %v468
        %v515 = vunpack.c.l.b16 %v469
        %v516 = vunpack.c.h.b16 %v469
        %v517 = vunpack.c.l.b16 %v470
        %v518 = vunpack.c.h.b16 %v470
        %v519 = vpack.c.b16 %v487, %v487
        %v520 = vpack.c.b16 %v488, %v488
        %v521 = vpack.c.b16 %v489, %v489
        %v522 = vpack.c.b16 %v490, %v490
        %v523 = vpack.c.b16 %v491, %v491
        %v524 = vpack.c.b16 %v492, %v492
        %v525 = vpack.c.b16 %v493, %v493
        %v526 = vpack.c.b16 %v494, %v494
        %v527 = vpack.c.b16 %v495, %v495
        %v528 = vpack.c.b16 %v496, %v496
        %v529 = vpack.c.b16 %v497, %v497
        %v530 = vpack.c.b16 %v498, %v498
        %v531 = vpack.c.b16 %v499, %v499
        %v532 = vpack.c.b16 %v500, %v500
        %v533 = vpack.c.b16 %v501, %v501
        %v534 = vpack.c.b16 %v502, %v502
        %v535 = vpack.c.b16 %v503, %v503
        %v536 = vpack.c.b16 %v504, %v504
        %v537 = vpack.c.b16 %v505, %v505
        %v538 = vpack.c.b16 %v506, %v506
        %v539 = vpack.c.b16 %v507, %v507
        %v540 = vpack.c.b16 %v508, %v508
        %v541 = vpack.c.b16 %v509, %v509
        %v542 = vpack.c.b16 %v510, %v510
        %v543 = vpack.c.b16 %v511, %v511
        %v544 = vpack.c.b16 %v512, %v512
        %v545 = vpack.c.b16 %v513, %v513
        %v546 = vpack.c.b16 %v514, %v514
        %v547 = vpack.c.b16 %v515, %v515
        %v548 = vpack.c.b16 %v516, %v516
        %v549 = vpack.c.b16 %v517, %v517
        %v550 = vpack.c.b16 %v518, %v518
        %vm551 = vsmask.f32 4368
        %vm552 = vmor %vm291, %vm551
        %v554 = vshrl.u32 %v519, 16
        %v556 = vrot.slane %v554, 7
        %v557 = vshll.u32 %v519, 16
        %v559 = vor.u32 %v556, %v557
        %v560 = vrot.slane %v556, 4
        %v562 = vshrl.u32 %v520, 16
        %v564 = vrot.slane %v562, 7
        %v565 = vshll.u32 %v520, 16
        %v567 = vor.u32 %v564, %v565
        %v568 = vsel %vm552, %v560, %v567
        %v569 = vrot.slane %v564, 4
        %v571 = vshrl.u32 %v521, 16
        %v573 = vrot.slane %v571, 7
        %v574 = vshll.u32 %v521, 16
        %v576 = vor.u32 %v573, %v574
        %v577 = vrot.slane %v573, 4
        %v579 = vshrl.u32 %v522, 16
        %v581 = vrot.slane %v579, 7
        %v582 = vshll.u32 %v522, 16
        %v584 = vor.u32 %v581, %v582
        %v585 = vsel %vm552, %v577, %v584
        %v586 = vrot.slane %v581, 4
        %v588 = vshrl.u32 %v523, 16
        %v590 = vrot.slane %v588, 7
        %v591 = vshll.u32 %v523, 16
        %v593 = vor.u32 %v590, %v591
        %v594 = vrot.slane %v590, 4
        %v596 = vshrl.u32 %v524, 16
        %v598 = vrot.slane %v596, 7
        %v599 = vshll.u32 %v524, 16
        %v601 = vor.u32 %v598, %v599
        %v602 = vsel %vm552, %v594, %v601
        %v603 = vrot.slane %v598, 4
        %v605 = vshrl.u32 %v525, 16
        %v607 = vrot.slane %v605, 7
        %v608 = vshll.u32 %v525, 16
        %v610 = vor.u32 %v607, %v608
        %v611 = vrot.slane %v607, 4
        %v613 = vshrl.u32 %v526, 16
        %v615 = vrot.slane %v613, 7
        %v616 = vshll.u32 %v526, 16
        %v618 = vor.u32 %v615, %v616
        %v619 = vsel %vm552, %v611, %v618
        %v620 = vrot.slane %v615, 4
        %v622 = vshrl.u32 %v527, 16
        %v624 = vrot.slane %v622, 7
        %v625 = vshll.u32 %v527, 16
        %v627 = vor.u32 %v624, %v625
        %v628 = vrot.slane %v624, 4
        %v630 = vshrl.u32 %v528, 16
        %v632 = vrot.slane %v630, 7
        %v633 = vshll.u32 %v528, 16
        %v635 = vor.u32 %v632, %v633
        %v636 = vsel %vm552, %v628, %v635
        %v637 = vrot.slane %v632, 4
        %v639 = vshrl.u32 %v529, 16
        %v641 = vrot.slane %v639, 7
        %v642 = vshll.u32 %v529, 16
        %v644 = vor.u32 %v641, %v642
        %v645 = vrot.slane %v641, 4
        %v647 = vshrl.u32 %v530, 16
        %v649 = vrot.slane %v647, 7
        %v650 = vshll.u32 %v530, 16
        %v652 = vor.u32 %v649, %v650
        %v653 = vsel %vm552, %v645, %v652
        %v654 = vrot.slane %v649, 4
        %v656 = vshrl.u32 %v531, 16
        %v658 = vrot.slane %v656, 7
        %v659 = vshll.u32 %v531, 16
        %v661 = vor.u32 %v658, %v659
        %v662 = vrot.slane %v658, 4
        %v664 = vshrl.u32 %v532, 16
        %v666 = vrot.slane %v664, 7
        %v667 = vshll.u32 %v532, 16
        %v669 = vor.u32 %v666, %v667
        %v670 = vsel %vm552, %v662, %v669
        %v671 = vrot.slane %v666, 4
        %v673 = vshrl.u32 %v533, 16
        %v675 = vrot.slane %v673, 7
        %v676 = vshll.u32 %v533, 16
        %v678 = vor.u32 %v675, %v676
        %v679 = vrot.slane %v675, 4
        %v681 = vshrl.u32 %v534, 16
        %v683 = vrot.slane %v681, 7
        %v684 = vshll.u32 %v534, 16
        %v686 = vor.u32 %v683, %v684
        %v687 = vsel %vm552, %v679, %v686
        %v688 = vrot.slane %v683, 4
        %v690 = vshrl.u32 %v535, 16
        %v692 = vrot.slane %v690, 7
        %v693 = vshll.u32 %v535, 16
        %v695 = vor.u32 %v692, %v693
        %v696 = vrot.slane %v692, 4
        %v698 = vshrl.u32 %v536, 16
        %v700 = vrot.slane %v698, 7
        %v701 = vshll.u32 %v536, 16
        %v703 = vor.u32 %v700, %v701
        %v704 = vsel %vm552, %v696, %v703
        %v705 = vrot.slane %v700, 4
        %v707 = vshrl.u32 %v537, 16
        %v709 = vrot.slane %v707, 7
        %v710 = vshll.u32 %v537, 16
        %v712 = vor.u32 %v709, %v710
        %v713 = vrot.slane %v709, 4
        %v715 = vshrl.u32 %v538, 16
        %v717 = vrot.slane %v715, 7
        %v718 = vshll.u32 %v538, 16
        %v720 = vor.u32 %v717, %v718
        %v721 = vsel %vm552, %v713, %v720
        %v722 = vrot.slane %v717, 4
        %v724 = vshrl.u32 %v539, 16
        %v726 = vrot.slane %v724, 7
        %v727 = vshll.u32 %v539, 16
        %v729 = vor.u32 %v726, %v727
        %v730 = vrot.slane %v726, 4
        %v732 = vshrl.u32 %v540, 16
        %v734 = vrot.slane %v732, 7
        %v735 = vshll.u32 %v540, 16
        %v737 = vor.u32 %v734, %v735
        %v738 = vsel %vm552, %v730, %v737
        %v739 = vrot.slane %v734, 4
        %v741 = vshrl.u32 %v541, 16
        %v743 = vrot.slane %v741, 7
        %v744 = vshll.u32 %v541, 16
        %v746 = vor.u32 %v743, %v744
        %v747 = vrot.slane %v743, 4
        %v749 = vshrl.u32 %v542, 16
        %v751 = vrot.slane %v749, 7
        %v752 = vshll.u32 %v542, 16
        %v754 = vor.u32 %v751, %v752
        %v755 = vsel %vm552, %v747, %v754
        %v756 = vrot.slane %v751, 4
        %v758 = vshrl.u32 %v543, 16
        %v760 = vrot.slane %v758, 7
        %v761 = vshll.u32 %v543, 16
        %v763 = vor.u32 %v760, %v761
        %v764 = vrot.slane %v760, 4
        %v766 = vshrl.u32 %v544, 16
        %v768 = vrot.slane %v766, 7
        %v769 = vshll.u32 %v544, 16
        %v771 = vor.u32 %v768, %v769
        %v772 = vsel %vm552, %v764, %v771
        %v773 = vrot.slane %v768, 4
        %v775 = vshrl.u32 %v545, 16
        %v777 = vrot.slane %v775, 7
        %v778 = vshll.u32 %v545, 16
        %v780 = vor.u32 %v777, %v778
        %v781 = vrot.slane %v777, 4
        %v783 = vshrl.u32 %v546, 16
        %v785 = vrot.slane %v783, 7
        %v786 = vshll.u32 %v546, 16
        %v788 = vor.u32 %v785, %v786
        %v789 = vsel %vm552, %v781, %v788
        %v790 = vrot.slane %v785, 4
        %v792 = vshrl.u32 %v547, 16
        %v794 = vrot.slane %v792, 7
        %v795 = vshll.u32 %v547, 16
        %v797 = vor.u32 %v794, %v795
        %v798 = vrot.slane %v794, 4
        %v800 = vshrl.u32 %v548, 16
        %v802 = vrot.slane %v800, 7
        %v803 = vshll.u32 %v548, 16
        %v805 = vor.u32 %v802, %v803
        %v806 = vsel %vm552, %v798, %v805
        %v807 = vrot.slane %v802, 4
        %v809 = vshrl.u32 %v549, 16
        %v811 = vrot.slane %v809, 7
        %v812 = vshll.u32 %v549, 16
        %v814 = vor.u32 %v811, %v812
        %v815 = vrot.slane %v811, 4
        %v817 = vshrl.u32 %v550, 16
        %v819 = vrot.slane %v817, 7
        %v820 = vshll.u32 %v550, 16
        %v822 = vor.u32 %v819, %v820
        %v823 = vsel %vm552, %v815, %v822
        %v824 = vrot.slane %v819, 4
        %vm873 = vcmask 60416
        %vm874 = vmand %vm873, %vm341
        %v875 = vld [vmem:[%s289] sm:$0xf]
        %v876 = vsel %vm874, %v559, %v875
        %877 = vst [vmem:[%s289] sm:$0xf] %v876
        %878 = vst.msk [vmem:[%s289 + $0x4] sm:$0xf] %vm280, %v568
        %v879 = vld [vmem:[%s289 + $0x8] sm:$0x1]
        %v880 = vsel %vm292, %v569, %v879
        %881 = vst [vmem:[%s289 + $0x8] sm:$0x1] %v880
        %v882 = vld [vmem:[%s289 + $0xc] sm:$0xf]
        %v883 = vsel %vm874, %v576, %v882
        %884 = vst [vmem:[%s289 + $0xc] sm:$0xf] %v883
        %885 = vst.msk [vmem:[%s289 + $0x10] sm:$0xf] %vm280, %v585
        %v886 = vld [vmem:[%s289 + $0x14] sm:$0x1]
        %v887 = vsel %vm292, %v586, %v886
        %888 = vst [vmem:[%s289 + $0x14] sm:$0x1] %v887
        %v889 = vld [vmem:[%s289 + $0x18] sm:$0xf]
        %v890 = vsel %vm874, %v593, %v889
        %891 = vst [vmem:[%s289 + $0x18] sm:$0xf] %v890
        %892 = vst.msk [vmem:[%s289 + $0x1c] sm:$0xf] %vm280, %v602
        %v893 = vld [vmem:[%s289 + $0x20] sm:$0x1]
        %v894 = vsel %vm292, %v603, %v893
        %895 = vst [vmem:[%s289 + $0x20] sm:$0x1] %v894
        %v896 = vld [vmem:[%s289 + $0x24] sm:$0xf]
        %v897 = vsel %vm874, %v610, %v896
        %898 = vst [vmem:[%s289 + $0x24] sm:$0xf] %v897
        %899 = vst.msk [vmem:[%s289 + $0x28] sm:$0xf] %vm280, %v619
        %v900 = vld [vmem:[%s289 + $0x2c] sm:$0x1]
        %v901 = vsel %vm292, %v620, %v900
        %902 = vst [vmem:[%s289 + $0x2c] sm:$0x1] %v901
        %v903 = vld [vmem:[%s289 + $0x30] sm:$0xf]
        %v904 = vsel %vm874, %v627, %v903
        %905 = vst [vmem:[%s289 + $0x30] sm:$0xf] %v904
        %906 = vst.msk [vmem:[%s289 + $0x34] sm:$0xf] %vm280, %v636
        %v907 = vld [vmem:[%s289 + $0x38] sm:$0x1]
        %v908 = vsel %vm292, %v637, %v907
        %909 = vst [vmem:[%s289 + $0x38] sm:$0x1] %v908
        %v910 = vld [vmem:[%s289 + $0x3c] sm:$0xf]
        %v911 = vsel %vm874, %v644, %v910
        %912 = vst [vmem:[%s289 + $0x3c] sm:$0xf] %v911
        %913 = vst.msk [vmem:[%s289 + $0x40] sm:$0xf] %vm280, %v653
        %v914 = vld [vmem:[%s289 + $0x44] sm:$0x1]
        %v915 = vsel %vm292, %v654, %v914
        %916 = vst [vmem:[%s289 + $0x44] sm:$0x1] %v915
        %v917 = vld [vmem:[%s289 + $0x48] sm:$0xf]
        %v918 = vsel %vm874, %v661, %v917
        %919 = vst [vmem:[%s289 + $0x48] sm:$0xf] %v918
        %920 = vst.msk [vmem:[%s289 + $0x4c] sm:$0xf] %vm280, %v670
        %v921 = vld [vmem:[%s289 + $0x50] sm:$0x1]
        %v922 = vsel %vm292, %v671, %v921
        %923 = vst [vmem:[%s289 + $0x50] sm:$0x1] %v922
        %v924 = vld [vmem:[%s289 + $0x54] sm:$0xf]
        %v925 = vsel %vm874, %v678, %v924
        %926 = vst [vmem:[%s289 + $0x54] sm:$0xf] %v925
        %927 = vst.msk [vmem:[%s289 + $0x58] sm:$0xf] %vm280, %v687
        %v928 = vld [vmem:[%s289 + $0x5c] sm:$0x1]
        %v929 = vsel %vm292, %v688, %v928
        %930 = vst [vmem:[%s289 + $0x5c] sm:$0x1] %v929
        %v931 = vld [vmem:[%s289 + $0x60] sm:$0xf]
        %v932 = vsel %vm874, %v695, %v931
        %933 = vst [vmem:[%s289 + $0x60] sm:$0xf] %v932
        %934 = vst.msk [vmem:[%s289 + $0x64] sm:$0xf] %vm280, %v704
        %v935 = vld [vmem:[%s289 + $0x68] sm:$0x1]
        %v936 = vsel %vm292, %v705, %v935
        %937 = vst [vmem:[%s289 + $0x68] sm:$0x1] %v936
        %v938 = vld [vmem:[%s289 + $0x6c] sm:$0xf]
        %v939 = vsel %vm874, %v712, %v938
        %940 = vst [vmem:[%s289 + $0x6c] sm:$0xf] %v939
        %941 = vst.msk [vmem:[%s289 + $0x70] sm:$0xf] %vm280, %v721
        %v942 = vld [vmem:[%s289 + $0x74] sm:$0x1]
        %v943 = vsel %vm292, %v722, %v942
        %944 = vst [vmem:[%s289 + $0x74] sm:$0x1] %v943
        %v945 = vld [vmem:[%s289 + $0x78] sm:$0xf]
        %v946 = vsel %vm874, %v729, %v945
        %947 = vst [vmem:[%s289 + $0x78] sm:$0xf] %v946
        %948 = vst.msk [vmem:[%s289 + $0x7c] sm:$0xf] %vm280, %v738
        %v949 = vld [vmem:[%s289 + $0x80] sm:$0x1]
        %v950 = vsel %vm292, %v739, %v949
        %951 = vst [vmem:[%s289 + $0x80] sm:$0x1] %v950
        %v952 = vld [vmem:[%s289 + $0x84] sm:$0xf]
        %v953 = vsel %vm874, %v746, %v952
        %954 = vst [vmem:[%s289 + $0x84] sm:$0xf] %v953
        %955 = vst.msk [vmem:[%s289 + $0x88] sm:$0xf] %vm280, %v755
        %v956 = vld [vmem:[%s289 + $0x8c] sm:$0x1]
        %v957 = vsel %vm292, %v756, %v956
        %958 = vst [vmem:[%s289 + $0x8c] sm:$0x1] %v957
        %v959 = vld [vmem:[%s289 + $0x90] sm:$0xf]
        %v960 = vsel %vm874, %v763, %v959
        %961 = vst [vmem:[%s289 + $0x90] sm:$0xf] %v960
        %962 = vst.msk [vmem:[%s289 + $0x94] sm:$0xf] %vm280, %v772
        %v963 = vld [vmem:[%s289 + $0x98] sm:$0x1]
        %v964 = vsel %vm292, %v773, %v963
        %965 = vst [vmem:[%s289 + $0x98] sm:$0x1] %v964
        %v966 = vld [vmem:[%s289 + $0x9c] sm:$0xf]
        %v967 = vsel %vm874, %v780, %v966
        %968 = vst [vmem:[%s289 + $0x9c] sm:$0xf] %v967
        %969 = vst.msk [vmem:[%s289 + $0xa0] sm:$0xf] %vm280, %v789
        %v970 = vld [vmem:[%s289 + $0xa4] sm:$0x1]
        %v971 = vsel %vm292, %v790, %v970
        %972 = vst [vmem:[%s289 + $0xa4] sm:$0x1] %v971
        %v973 = vld [vmem:[%s289 + $0xa8] sm:$0xf]
        %v974 = vsel %vm874, %v797, %v973
        %975 = vst [vmem:[%s289 + $0xa8] sm:$0xf] %v974
        %976 = vst.msk [vmem:[%s289 + $0xac] sm:$0xf] %vm280, %v806
        %v977 = vld [vmem:[%s289 + $0xb0] sm:$0x1]
        %v978 = vsel %vm292, %v807, %v977
        %979 = vst [vmem:[%s289 + $0xb0] sm:$0x1] %v978
        %v980 = vld [vmem:[%s289 + $0xb4] sm:$0xf]
        %v981 = vsel %vm874, %v814, %v980
        %982 = vst [vmem:[%s289 + $0xb4] sm:$0xf] %v981
        %983 = vst.msk [vmem:[%s289 + $0xb8] sm:$0xf] %vm280, %v823
        %v984 = vld [vmem:[%s289 + $0xbc] sm:$0x1]
        %v985 = vsel %vm292, %v824, %v984
        %986 = vst [vmem:[%s289 + $0xbc] sm:$0x1] %v985
        %v987 = vld [vmem:[#allocation2] sm:$0xf]
        %v988 = vld [vmem:[#allocation2 + $0x4] sm:$0xf]
        %v989 = vld [vmem:[#allocation2 + $0x8] sm:$0x1]
        %v990 = vld [vmem:[#allocation2 + $0xc] sm:$0xf]
        %v991 = vld [vmem:[#allocation2 + $0x10] sm:$0xf]
        %v992 = vld [vmem:[#allocation2 + $0x14] sm:$0x1]
        %v993 = vld [vmem:[#allocation2 + $0x18] sm:$0xf]
        %v994 = vld [vmem:[#allocation2 + $0x1c] sm:$0xf]
        %v995 = vld [vmem:[#allocation2 + $0x20] sm:$0x1]
        %v996 = vld [vmem:[#allocation2 + $0x24] sm:$0xf]
        %v997 = vld [vmem:[#allocation2 + $0x28] sm:$0xf]
        %v998 = vld [vmem:[#allocation2 + $0x2c] sm:$0x1]
        %v999 = vld [vmem:[#allocation2 + $0x30] sm:$0xf]
        %v1000 = vld [vmem:[#allocation2 + $0x34] sm:$0xf]
        %v1001 = vld [vmem:[#allocation2 + $0x38] sm:$0x1]
        %v1002 = vld [vmem:[#allocation2 + $0x3c] sm:$0xf]
        %v1003 = vld [vmem:[#allocation2 + $0x40] sm:$0xf]
        %v1004 = vld [vmem:[#allocation2 + $0x44] sm:$0x1]
        %v1005 = vld [vmem:[#allocation2 + $0x48] sm:$0xf]
        %v1006 = vld [vmem:[#allocation2 + $0x4c] sm:$0xf]
        %v1007 = vld [vmem:[#allocation2 + $0x50] sm:$0x1]
        %v1008 = vld [vmem:[#allocation2 + $0x54] sm:$0xf]
        %v1009 = vld [vmem:[#allocation2 + $0x58] sm:$0xf]
        %v1010 = vld [vmem:[#allocation2 + $0x5c] sm:$0x1]
        %v1011 = vld [vmem:[#allocation2 + $0x60] sm:$0xf]
        %v1012 = vld [vmem:[#allocation2 + $0x64] sm:$0xf]
        %v1013 = vld [vmem:[#allocation2 + $0x68] sm:$0x1]
        %v1014 = vld [vmem:[#allocation2 + $0x6c] sm:$0xf]
        %v1015 = vld [vmem:[#allocation2 + $0x70] sm:$0xf]
        %v1016 = vld [vmem:[#allocation2 + $0x74] sm:$0x1]
        %v1017 = vld [vmem:[#allocation2 + $0x78] sm:$0xf]
        %v1018 = vld [vmem:[#allocation2 + $0x7c] sm:$0xf]
        %v1019 = vld [vmem:[#allocation2 + $0x80] sm:$0x1]
        %v1020 = vld [vmem:[#allocation2 + $0x84] sm:$0xf]
        %v1021 = vld [vmem:[#allocation2 + $0x88] sm:$0xf]
        %v1022 = vld [vmem:[#allocation2 + $0x8c] sm:$0x1]
        %v1023 = vld [vmem:[#allocation2 + $0x90] sm:$0xf]
        %v1024 = vld [vmem:[#allocation2 + $0x94] sm:$0xf]
        %v1025 = vld [vmem:[#allocation2 + $0x98] sm:$0x1]
        %v1026 = vld [vmem:[#allocation2 + $0x9c] sm:$0xf]
        %v1027 = vld [vmem:[#allocation2 + $0xa0] sm:$0xf]
        %v1028 = vld [vmem:[#allocation2 + $0xa4] sm:$0x1]
        %v1029 = vld [vmem:[#allocation2 + $0xa8] sm:$0xf]
        %v1030 = vld [vmem:[#allocation2 + $0xac] sm:$0xf]
        %v1031 = vld [vmem:[#allocation2 + $0xb0] sm:$0x1]
        %v1032 = vld [vmem:[#allocation2 + $0xb4] sm:$0xf]
        %v1033 = vld [vmem:[#allocation2 + $0xb8] sm:$0xf]
        %v1034 = vld [vmem:[#allocation2 + $0xbc] sm:$0x1]
        %v1035 = vld [vmem:[#allocation2 + $0xc0] sm:$0xf]
        %v1036 = vld [vmem:[#allocation2 + $0xc4] sm:$0xf]
        %v1037 = vld [vmem:[#allocation2 + $0xc8] sm:$0x1]
        %v1038 = vld [vmem:[#allocation2 + $0xcc] sm:$0xf]
        %v1039 = vld [vmem:[#allocation2 + $0xd0] sm:$0xf]
        %v1040 = vld [vmem:[#allocation2 + $0xd4] sm:$0x1]
        %vm1041 = vsmask.f32 3328
        %vm1042 = vsmask.f32 7440
        %vm1043 = vmor %vm1041, %vm1042
        %v1045 = vshrl.u32 %v987, 16
        %v1047 = vrot.slane %v1045, 4
        %v1048 = vshll.u32 %v987, 16
        %v1050 = vrot.slane %v1048, 5
        %v1051 = vor.u32 %v1047, %v1050
        %v1052 = vrot.slane %v1051, 4
        %v1054 = vshll.u32 %v988, 16
        %v1056 = vrot.slane %v1054, 5
        %v1057 = vsel %vm1043, %v1052, %v1056
        %v1058 = vshrl.u32 %v988, 16
        %v1060 = vrot.slane %v1058, 4
        %v1061 = vor.u32 %v1060, %v1056
        %v1062 = vrot.slane %v1061, 4
        %v1064 = vshll.u32 %v989, 16
        %v1066 = vrot.slane %v1064, 5
        %v1067 = vsel %vm1043, %v1062, %v1066
        %v1069 = vshrl.u32 %v990, 16
        %v1071 = vrot.slane %v1069, 4
        %v1072 = vshll.u32 %v990, 16
        %v1074 = vrot.slane %v1072, 5
        %v1075 = vor.u32 %v1071, %v1074
        %v1076 = vrot.slane %v1075, 4
        %v1078 = vshll.u32 %v991, 16
        %v1080 = vrot.slane %v1078, 5
        %v1081 = vsel %vm1043, %v1076, %v1080
        %v1082 = vshrl.u32 %v991, 16
        %v1084 = vrot.slane %v1082, 4
        %v1085 = vor.u32 %v1084, %v1080
        %v1086 = vrot.slane %v1085, 4
        %v1088 = vshll.u32 %v992, 16
        %v1090 = vrot.slane %v1088, 5
        %v1091 = vsel %vm1043, %v1086, %v1090
        %v1093 = vshrl.u32 %v993, 16
        %v1095 = vrot.slane %v1093, 4
        %v1096 = vshll.u32 %v993, 16
        %v1098 = vrot.slane %v1096, 5
        %v1099 = vor.u32 %v1095, %v1098
        %v1100 = vrot.slane %v1099, 4
        %v1102 = vshll.u32 %v994, 16
        %v1104 = vrot.slane %v1102, 5
        %v1105 = vsel %vm1043, %v1100, %v1104
        %v1106 = vshrl.u32 %v994, 16
        %v1108 = vrot.slane %v1106, 4
        %v1109 = vor.u32 %v1108, %v1104
        %v1110 = vrot.slane %v1109, 4
        %v1112 = vshll.u32 %v995, 16
        %v1114 = vrot.slane %v1112, 5
        %v1115 = vsel %vm1043, %v1110, %v1114
        %v1117 = vshrl.u32 %v996, 16
        %v1119 = vrot.slane %v1117, 4
        %v1120 = vshll.u32 %v996, 16
        %v1122 = vrot.slane %v1120, 5
        %v1123 = vor.u32 %v1119, %v1122
        %v1124 = vrot.slane %v1123, 4
        %v1126 = vshll.u32 %v997, 16
        %v1128 = vrot.slane %v1126, 5
        %v1129 = vsel %vm1043, %v1124, %v1128
        %v1130 = vshrl.u32 %v997, 16
        %v1132 = vrot.slane %v1130, 4
        %v1133 = vor.u32 %v1132, %v1128
        %v1134 = vrot.slane %v1133, 4
        %v1136 = vshll.u32 %v998, 16
        %v1138 = vrot.slane %v1136, 5
        %v1139 = vsel %vm1043, %v1134, %v1138
        %v1141 = vshrl.u32 %v999, 16
        %v1143 = vrot.slane %v1141, 4
        %v1144 = vshll.u32 %v999, 16
        %v1146 = vrot.slane %v1144, 5
        %v1147 = vor.u32 %v1143, %v1146
        %v1148 = vrot.slane %v1147, 4
        %v1150 = vshll.u32 %v1000, 16
        %v1152 = vrot.slane %v1150, 5
        %v1153 = vsel %vm1043, %v1148, %v1152
        %v1154 = vshrl.u32 %v1000, 16
        %v1156 = vrot.slane %v1154, 4
        %v1157 = vor.u32 %v1156, %v1152
        %v1158 = vrot.slane %v1157, 4
        %v1160 = vshll.u32 %v1001, 16
        %v1162 = vrot.slane %v1160, 5
        %v1163 = vsel %vm1043, %v1158, %v1162
        %v1165 = vshrl.u32 %v1002, 16
        %v1167 = vrot.slane %v1165, 4
        %v1168 = vshll.u32 %v1002, 16
        %v1170 = vrot.slane %v1168, 5
        %v1171 = vor.u32 %v1167, %v1170
        %v1172 = vrot.slane %v1171, 4
        %v1174 = vshll.u32 %v1003, 16
        %v1176 = vrot.slane %v1174, 5
        %v1177 = vsel %vm1043, %v1172, %v1176
        %v1178 = vshrl.u32 %v1003, 16
        %v1180 = vrot.slane %v1178, 4
        %v1181 = vor.u32 %v1180, %v1176
        %v1182 = vrot.slane %v1181, 4
        %v1184 = vshll.u32 %v1004, 16
        %v1186 = vrot.slane %v1184, 5
        %v1187 = vsel %vm1043, %v1182, %v1186
        %v1189 = vshrl.u32 %v1005, 16
        %v1191 = vrot.slane %v1189, 4
        %v1192 = vshll.u32 %v1005, 16
        %v1194 = vrot.slane %v1192, 5
        %v1195 = vor.u32 %v1191, %v1194
        %v1196 = vrot.slane %v1195, 4
        %v1198 = vshll.u32 %v1006, 16
        %v1200 = vrot.slane %v1198, 5
        %v1201 = vsel %vm1043, %v1196, %v1200
        %v1202 = vshrl.u32 %v1006, 16
        %v1204 = vrot.slane %v1202, 4
        %v1205 = vor.u32 %v1204, %v1200
        %v1206 = vrot.slane %v1205, 4
        %v1208 = vshll.u32 %v1007, 16
        %v1210 = vrot.slane %v1208, 5
        %v1211 = vsel %vm1043, %v1206, %v1210
        %v1213 = vshrl.u32 %v1008, 16
        %v1215 = vrot.slane %v1213, 4
        %v1216 = vshll.u32 %v1008, 16
        %v1218 = vrot.slane %v1216, 5
        %v1219 = vor.u32 %v1215, %v1218
        %v1220 = vrot.slane %v1219, 4
        %v1222 = vshll.u32 %v1009, 16
        %v1224 = vrot.slane %v1222, 5
        %v1225 = vsel %vm1043, %v1220, %v1224
        %v1226 = vshrl.u32 %v1009, 16
        %v1228 = vrot.slane %v1226, 4
        %v1229 = vor.u32 %v1228, %v1224
        %v1230 = vrot.slane %v1229, 4
        %v1232 = vshll.u32 %v1010, 16
        %v1234 = vrot.slane %v1232, 5
        %v1235 = vsel %vm1043, %v1230, %v1234
        %v1237 = vshrl.u32 %v1011, 16
        %v1239 = vrot.slane %v1237, 4
        %v1240 = vshll.u32 %v1011, 16
        %v1242 = vrot.slane %v1240, 5
        %v1243 = vor.u32 %v1239, %v1242
        %v1244 = vrot.slane %v1243, 4
        %v1246 = vshll.u32 %v1012, 16
        %v1248 = vrot.slane %v1246, 5
        %v1249 = vsel %vm1043, %v1244, %v1248
        %v1250 = vshrl.u32 %v1012, 16
        %v1252 = vrot.slane %v1250, 4
        %v1253 = vor.u32 %v1252, %v1248
        %v1254 = vrot.slane %v1253, 4
        %v1256 = vshll.u32 %v1013, 16
        %v1258 = vrot.slane %v1256, 5
        %v1259 = vsel %vm1043, %v1254, %v1258
        %v1261 = vshrl.u32 %v1014, 16
        %v1263 = vrot.slane %v1261, 4
        %v1264 = vshll.u32 %v1014, 16
        %v1266 = vrot.slane %v1264, 5
        %v1267 = vor.u32 %v1263, %v1266
        %v1268 = vrot.slane %v1267, 4
        %v1270 = vshll.u32 %v1015, 16
        %v1272 = vrot.slane %v1270, 5
        %v1273 = vsel %vm1043, %v1268, %v1272
        %v1274 = vshrl.u32 %v1015, 16
        %v1276 = vrot.slane %v1274, 4
        %v1277 = vor.u32 %v1276, %v1272
        %v1278 = vrot.slane %v1277, 4
        %v1280 = vshll.u32 %v1016, 16
        %v1282 = vrot.slane %v1280, 5
        %v1283 = vsel %vm1043, %v1278, %v1282
        %v1285 = vshrl.u32 %v1017, 16
        %v1287 = vrot.slane %v1285, 4
        %v1288 = vshll.u32 %v1017, 16
        %v1290 = vrot.slane %v1288, 5
        %v1291 = vor.u32 %v1287, %v1290
        %v1292 = vrot.slane %v1291, 4
        %v1294 = vshll.u32 %v1018, 16
        %v1296 = vrot.slane %v1294, 5
        %v1297 = vsel %vm1043, %v1292, %v1296
        %v1298 = vshrl.u32 %v1018, 16
        %v1300 = vrot.slane %v1298, 4
        %v1301 = vor.u32 %v1300, %v1296
        %v1302 = vrot.slane %v1301, 4
        %v1304 = vshll.u32 %v1019, 16
        %v1306 = vrot.slane %v1304, 5
        %v1307 = vsel %vm1043, %v1302, %v1306
        %v1309 = vshrl.u32 %v1020, 16
        %v1311 = vrot.slane %v1309, 4
        %v1312 = vshll.u32 %v1020, 16
        %v1314 = vrot.slane %v1312, 5
        %v1315 = vor.u32 %v1311, %v1314
        %v1316 = vrot.slane %v1315, 4
        %v1318 = vshll.u32 %v1021, 16
        %v1320 = vrot.slane %v1318, 5
        %v1321 = vsel %vm1043, %v1316, %v1320
        %v1322 = vshrl.u32 %v1021, 16
        %v1324 = vrot.slane %v1322, 4
        %v1325 = vor.u32 %v1324, %v1320
        %v1326 = vrot.slane %v1325, 4
        %v1328 = vshll.u32 %v1022, 16
        %v1330 = vrot.slane %v1328, 5
        %v1331 = vsel %vm1043, %v1326, %v1330
        %v1333 = vshrl.u32 %v1023, 16
        %v1335 = vrot.slane %v1333, 4
        %v1336 = vshll.u32 %v1023, 16
        %v1338 = vrot.slane %v1336, 5
        %v1339 = vor.u32 %v1335, %v1338
        %v1340 = vrot.slane %v1339, 4
        %v1342 = vshll.u32 %v1024, 16
        %v1344 = vrot.slane %v1342, 5
        %v1345 = vsel %vm1043, %v1340, %v1344
        %v1346 = vshrl.u32 %v1024, 16
        %v1348 = vrot.slane %v1346, 4
        %v1349 = vor.u32 %v1348, %v1344
        %v1350 = vrot.slane %v1349, 4
        %v1352 = vshll.u32 %v1025, 16
        %v1354 = vrot.slane %v1352, 5
        %v1355 = vsel %vm1043, %v1350, %v1354
        %v1357 = vshrl.u32 %v1026, 16
        %v1359 = vrot.slane %v1357, 4
        %v1360 = vshll.u32 %v1026, 16
        %v1362 = vrot.slane %v1360, 5
        %v1363 = vor.u32 %v1359, %v1362
        %v1364 = vrot.slane %v1363, 4
        %v1366 = vshll.u32 %v1027, 16
        %v1368 = vrot.slane %v1366, 5
        %v1369 = vsel %vm1043, %v1364, %v1368
        %v1370 = vshrl.u32 %v1027, 16
        %v1372 = vrot.slane %v1370, 4
        %v1373 = vor.u32 %v1372, %v1368
        %v1374 = vrot.slane %v1373, 4
        %v1376 = vshll.u32 %v1028, 16
        %v1378 = vrot.slane %v1376, 5
        %v1379 = vsel %vm1043, %v1374, %v1378
        %v1381 = vshrl.u32 %v1029, 16
        %v1383 = vrot.slane %v1381, 4
        %v1384 = vshll.u32 %v1029, 16
        %v1386 = vrot.slane %v1384, 5
        %v1387 = vor.u32 %v1383, %v1386
        %v1388 = vrot.slane %v1387, 4
        %v1390 = vshll.u32 %v1030, 16
        %v1392 = vrot.slane %v1390, 5
        %v1393 = vsel %vm1043, %v1388, %v1392
        %v1394 = vshrl.u32 %v1030, 16
        %v1396 = vrot.slane %v1394, 4
        %v1397 = vor.u32 %v1396, %v1392
        %v1398 = vrot.slane %v1397, 4
        %v1400 = vshll.u32 %v1031, 16
        %v1402 = vrot.slane %v1400, 5
        %v1403 = vsel %vm1043, %v1398, %v1402
        %v1405 = vshrl.u32 %v1032, 16
        %v1407 = vrot.slane %v1405, 4
        %v1408 = vshll.u32 %v1032, 16
        %v1410 = vrot.slane %v1408, 5
        %v1411 = vor.u32 %v1407, %v1410
        %v1412 = vrot.slane %v1411, 4
        %v1414 = vshll.u32 %v1033, 16
        %v1416 = vrot.slane %v1414, 5
        %v1417 = vsel %vm1043, %v1412, %v1416
        %v1418 = vshrl.u32 %v1033, 16
        %v1420 = vrot.slane %v1418, 4
        %v1421 = vor.u32 %v1420, %v1416
        %v1422 = vrot.slane %v1421, 4
        %v1424 = vshll.u32 %v1034, 16
        %v1426 = vrot.slane %v1424, 5
        %v1427 = vsel %vm1043, %v1422, %v1426
        %vm1476 = vcmask 1042432
        %vm1477 = vcmask 1046532
        %vm1478 = vmor %vm1476, %vm1477
        %v1479 = vrot.slane %v987, 5
        %v1480 = vrot.slane %v1479, 4
        %v1481 = vrot.slane %v988, 5
        %v1482 = vsel %vm1478, %v1480, %v1481
        %v1483 = vrot.slane %v1481, 4
        %v1484 = vrot.slane %v989, 5
        %v1485 = vsel %vm1478, %v1483, %v1484
        %v1486 = vrot.slane %v990, 5
        %v1487 = vrot.slane %v1486, 4
        %v1488 = vrot.slane %v991, 5
        %v1489 = vsel %vm1478, %v1487, %v1488
        %v1490 = vrot.slane %v1488, 4
        %v1491 = vrot.slane %v992, 5
        %v1492 = vsel %vm1478, %v1490, %v1491
        %v1493 = vrot.slane %v993, 5
        %v1494 = vrot.slane %v1493, 4
        %v1495 = vrot.slane %v994, 5
        %v1496 = vsel %vm1478, %v1494, %v1495
        %v1497 = vrot.slane %v1495, 4
        %v1498 = vrot.slane %v995, 5
        %v1499 = vsel %vm1478, %v1497, %v1498
        %v1500 = vrot.slane %v996, 5
        %v1501 = vrot.slane %v1500, 4
        %v1502 = vrot.slane %v997, 5
        %v1503 = vsel %vm1478, %v1501, %v1502
        %v1504 = vrot.slane %v1502, 4
        %v1505 = vrot.slane %v998, 5
        %v1506 = vsel %vm1478, %v1504, %v1505
        %v1507 = vrot.slane %v999, 5
        %v1508 = vrot.slane %v1507, 4
        %v1509 = vrot.slane %v1000, 5
        %v1510 = vsel %vm1478, %v1508, %v1509
        %v1511 = vrot.slane %v1509, 4
        %v1512 = vrot.slane %v1001, 5
        %v1513 = vsel %vm1478, %v1511, %v1512
        %v1514 = vrot.slane %v1002, 5
        %v1515 = vrot.slane %v1514, 4
        %v1516 = vrot.slane %v1003, 5
        %v1517 = vsel %vm1478, %v1515, %v1516
        %v1518 = vrot.slane %v1516, 4
        %v1519 = vrot.slane %v1004, 5
        %v1520 = vsel %vm1478, %v1518, %v1519
        %v1521 = vrot.slane %v1005, 5
        %v1522 = vrot.slane %v1521, 4
        %v1523 = vrot.slane %v1006, 5
        %v1524 = vsel %vm1478, %v1522, %v1523
        %v1525 = vrot.slane %v1523, 4
        %v1526 = vrot.slane %v1007, 5
        %v1527 = vsel %vm1478, %v1525, %v1526
        %v1528 = vrot.slane %v1008, 5
        %v1529 = vrot.slane %v1528, 4
        %v1530 = vrot.slane %v1009, 5
        %v1531 = vsel %vm1478, %v1529, %v1530
        %v1532 = vrot.slane %v1530, 4
        %v1533 = vrot.slane %v1010, 5
        %v1534 = vsel %vm1478, %v1532, %v1533
        %v1535 = vrot.slane %v1011, 5
        %v1536 = vrot.slane %v1535, 4
        %v1537 = vrot.slane %v1012, 5
        %v1538 = vsel %vm1478, %v1536, %v1537
        %v1539 = vrot.slane %v1537, 4
        %v1540 = vrot.slane %v1013, 5
        %v1541 = vsel %vm1478, %v1539, %v1540
        %v1542 = vrot.slane %v1014, 5
        %v1543 = vrot.slane %v1542, 4
        %v1544 = vrot.slane %v1015, 5
        %v1545 = vsel %vm1478, %v1543, %v1544
        %v1546 = vrot.slane %v1544, 4
        %v1547 = vrot.slane %v1016, 5
        %v1548 = vsel %vm1478, %v1546, %v1547
        %v1549 = vrot.slane %v1017, 5
        %v1550 = vrot.slane %v1549, 4
        %v1551 = vrot.slane %v1018, 5
        %v1552 = vsel %vm1478, %v1550, %v1551
        %v1553 = vrot.slane %v1551, 4
        %v1554 = vrot.slane %v1019, 5
        %v1555 = vsel %vm1478, %v1553, %v1554
        %v1556 = vrot.slane %v1020, 5
        %v1557 = vrot.slane %v1556, 4
        %v1558 = vrot.slane %v1021, 5
        %v1559 = vsel %vm1478, %v1557, %v1558
        %v1560 = vrot.slane %v1558, 4
        %v1561 = vrot.slane %v1022, 5
        %v1562 = vsel %vm1478, %v1560, %v1561
        %v1563 = vrot.slane %v1023, 5
        %v1564 = vrot.slane %v1563, 4
        %v1565 = vrot.slane %v1024, 5
        %v1566 = vsel %vm1478, %v1564, %v1565
        %v1567 = vrot.slane %v1565, 4
        %v1568 = vrot.slane %v1025, 5
        %v1569 = vsel %vm1478, %v1567, %v1568
        %v1570 = vrot.slane %v1026, 5
        %v1571 = vrot.slane %v1570, 4
        %v1572 = vrot.slane %v1027, 5
        %v1573 = vsel %vm1478, %v1571, %v1572
        %v1574 = vrot.slane %v1572, 4
        %v1575 = vrot.slane %v1028, 5
        %v1576 = vsel %vm1478, %v1574, %v1575
        %v1577 = vrot.slane %v1029, 5
        %v1578 = vrot.slane %v1577, 4
        %v1579 = vrot.slane %v1030, 5
        %v1580 = vsel %vm1478, %v1578, %v1579
        %v1581 = vrot.slane %v1579, 4
        %v1582 = vrot.slane %v1031, 5
        %v1583 = vsel %vm1478, %v1581, %v1582
        %v1584 = vrot.slane %v1032, 5
        %v1585 = vrot.slane %v1584, 4
        %v1586 = vrot.slane %v1033, 5
        %v1587 = vsel %vm1478, %v1585, %v1586
        %v1588 = vrot.slane %v1586, 4
        %v1589 = vrot.slane %v1034, 5
        %v1590 = vsel %vm1478, %v1588, %v1589
        %v1592 = vshrl.u32 %v1035, 16
        %v1594 = vrot.slane %v1592, 4
        %v1595 = vshll.u32 %v1035, 16
        %v1597 = vrot.slane %v1595, 5
        %v1598 = vor.u32 %v1594, %v1597
        %v1599 = vrot.slane %v1598, 4
        %v1601 = vshll.u32 %v1036, 16
        %v1603 = vrot.slane %v1601, 5
        %v1604 = vsel %vm1043, %v1599, %v1603
        %v1605 = vshrl.u32 %v1036, 16
        %v1607 = vrot.slane %v1605, 4
        %v1608 = vor.u32 %v1607, %v1603
        %v1609 = vrot.slane %v1608, 4
        %v1611 = vshll.u32 %v1037, 16
        %v1613 = vrot.slane %v1611, 5
        %v1614 = vsel %vm1043, %v1609, %v1613
        %v1618 = vrot.slane %v1035, 5
        %v1619 = vrot.slane %v1618, 4
        %v1620 = vrot.slane %v1036, 5
        %v1621 = vsel %vm1478, %v1619, %v1620
        %v1622 = vrot.slane %v1620, 4
        %v1623 = vrot.slane %v1037, 5
        %v1624 = vsel %vm1478, %v1622, %v1623
        %v1626 = vshrl.u32 %v1038, 16
        %v1628 = vrot.slane %v1626, 4
        %v1629 = vshll.u32 %v1038, 16
        %v1631 = vrot.slane %v1629, 5
        %v1632 = vor.u32 %v1628, %v1631
        %v1633 = vrot.slane %v1632, 4
        %v1635 = vshll.u32 %v1039, 16
        %v1637 = vrot.slane %v1635, 5
        %v1638 = vsel %vm1043, %v1633, %v1637
        %v1639 = vshrl.u32 %v1039, 16
        %v1641 = vrot.slane %v1639, 4
        %v1642 = vor.u32 %v1641, %v1637
        %v1643 = vrot.slane %v1642, 4
        %v1645 = vshll.u32 %v1040, 16
        %v1647 = vrot.slane %v1645, 5
        %v1648 = vsel %vm1043, %v1643, %v1647
        %v1652 = vrot.slane %v1038, 5
        %v1653 = vrot.slane %v1652, 4
        %v1654 = vrot.slane %v1039, 5
        %v1655 = vsel %vm1478, %v1653, %v1654
        %v1656 = vrot.slane %v1654, 4
        %v1657 = vrot.slane %v1040, 5
        %v1658 = vsel %vm1478, %v1656, %v1657
        %v1659 = vunpack.c.l.b16 %v987
        %v1660 = vunpack.c.l.b16 %v988
        %v1661 = vunpack.c.l.b16 %v990
        %v1662 = vunpack.c.l.b16 %v991
        %v1663 = vunpack.c.l.b16 %v993
        %v1664 = vunpack.c.l.b16 %v994
        %v1665 = vunpack.c.l.b16 %v996
        %v1666 = vunpack.c.l.b16 %v997
        %v1667 = vunpack.c.l.b16 %v999
        %v1668 = vunpack.c.l.b16 %v1000
        %v1669 = vunpack.c.l.b16 %v1002
        %v1670 = vunpack.c.l.b16 %v1003
        %v1671 = vunpack.c.l.b16 %v1005
        %v1672 = vunpack.c.l.b16 %v1006
        %v1673 = vunpack.c.l.b16 %v1008
        %v1674 = vunpack.c.l.b16 %v1009
        %v1675 = vunpack.c.l.b16 %v1011
        %v1676 = vunpack.c.l.b16 %v1012
        %v1677 = vunpack.c.l.b16 %v1014
        %v1678 = vunpack.c.l.b16 %v1015
        %v1679 = vunpack.c.l.b16 %v1017
        %v1680 = vunpack.c.l.b16 %v1018
        %v1681 = vunpack.c.l.b16 %v1020
        %v1682 = vunpack.c.l.b16 %v1021
        %v1683 = vunpack.c.l.b16 %v1023
        %v1684 = vunpack.c.l.b16 %v1024
        %v1685 = vunpack.c.l.b16 %v1026
        %v1686 = vunpack.c.l.b16 %v1027
        %v1687 = vunpack.c.l.b16 %v1029
        %v1688 = vunpack.c.l.b16 %v1030
        %v1689 = vunpack.c.l.b16 %v1032
        %v1690 = vunpack.c.l.b16 %v1033
        %v1691 = vpack.c.b16 %v1660, %v1659
        %v1692 = vpack.c.b16 %v1662, %v1661
        %v1693 = vpack.c.b16 %v1664, %v1663
        %v1694 = vpack.c.b16 %v1666, %v1665
        %v1695 = vpack.c.b16 %v1668, %v1667
        %v1696 = vpack.c.b16 %v1670, %v1669
        %v1697 = vpack.c.b16 %v1672, %v1671
        %v1698 = vpack.c.b16 %v1674, %v1673
        %v1699 = vpack.c.b16 %v1676, %v1675
        %v1700 = vpack.c.b16 %v1678, %v1677
        %v1701 = vpack.c.b16 %v1680, %v1679
        %v1702 = vpack.c.b16 %v1682, %v1681
        %v1703 = vpack.c.b16 %v1684, %v1683
        %v1704 = vpack.c.b16 %v1686, %v1685
        %v1705 = vpack.c.b16 %v1688, %v1687
        %v1706 = vpack.c.b16 %v1690, %v1689
        %v1707 = vunpack.c.l.b16 %v1057
        %v1708 = vunpack.c.l.b16 %v1067
        %v1709 = vunpack.c.l.b16 %v1081
        %v1710 = vunpack.c.l.b16 %v1091
        %v1711 = vunpack.c.l.b16 %v1105
        %v1712 = vunpack.c.l.b16 %v1115
        %v1713 = vunpack.c.l.b16 %v1129
        %v1714 = vunpack.c.l.b16 %v1139
        %v1715 = vunpack.c.l.b16 %v1153
        %v1716 = vunpack.c.l.b16 %v1163
        %v1717 = vunpack.c.l.b16 %v1177
        %v1718 = vunpack.c.l.b16 %v1187
        %v1719 = vunpack.c.l.b16 %v1201
        %v1720 = vunpack.c.l.b16 %v1211
        %v1721 = vunpack.c.l.b16 %v1225
        %v1722 = vunpack.c.l.b16 %v1235
        %v1723 = vunpack.c.l.b16 %v1249
        %v1724 = vunpack.c.l.b16 %v1259
        %v1725 = vunpack.c.l.b16 %v1273
        %v1726 = vunpack.c.l.b16 %v1283
        %v1727 = vunpack.c.l.b16 %v1297
        %v1728 = vunpack.c.l.b16 %v1307
        %v1729 = vunpack.c.l.b16 %v1321
        %v1730 = vunpack.c.l.b16 %v1331
        %v1731 = vunpack.c.l.b16 %v1345
        %v1732 = vunpack.c.l.b16 %v1355
        %v1733 = vunpack.c.l.b16 %v1369
        %v1734 = vunpack.c.l.b16 %v1379
        %v1735 = vunpack.c.l.b16 %v1393
        %v1736 = vunpack.c.l.b16 %v1403
        %v1737 = vunpack.c.l.b16 %v1417
        %v1738 = vunpack.c.l.b16 %v1427
        %v1739 = vpack.c.b16 %v1708, %v1707
        %v1740 = vpack.c.b16 %v1710, %v1709
        %v1741 = vpack.c.b16 %v1712, %v1711
        %v1742 = vpack.c.b16 %v1714, %v1713
        %v1743 = vpack.c.b16 %v1716, %v1715
        %v1744 = vpack.c.b16 %v1718, %v1717
        %v1745 = vpack.c.b16 %v1720, %v1719
        %v1746 = vpack.c.b16 %v1722, %v1721
        %v1747 = vpack.c.b16 %v1724, %v1723
        %v1748 = vpack.c.b16 %v1726, %v1725
        %v1749 = vpack.c.b16 %v1728, %v1727
        %v1750 = vpack.c.b16 %v1730, %v1729
        %v1751 = vpack.c.b16 %v1732, %v1731
        %v1752 = vpack.c.b16 %v1734, %v1733
        %v1753 = vpack.c.b16 %v1736, %v1735
        %v1754 = vpack.c.b16 %v1738, %v1737
        %1755 = vrot.lane.b32.xlu0 %v1739, 8
        %v1756 = vpop.permute.xlu0 %1755
        %1757 = vrot.lane.b32.xlu0 %v1740, 8
        %v1758 = vpop.permute.xlu0 %1757
        %1759 = vrot.lane.b32.xlu0 %v1741, 8
        %v1760 = vpop.permute.xlu0 %1759
        %1761 = vrot.lane.b32.xlu0 %v1742, 8
        %v1762 = vpop.permute.xlu0 %1761
        %1763 = vrot.lane.b32.xlu0 %v1743, 8
        %v1764 = vpop.permute.xlu0 %1763
        %1765 = vrot.lane.b32.xlu0 %v1744, 8
        %v1766 = vpop.permute.xlu0 %1765
        %1767 = vrot.lane.b32.xlu0 %v1745, 8
        %v1768 = vpop.permute.xlu0 %1767
        %1769 = vrot.lane.b32.xlu0 %v1746, 8
        %v1770 = vpop.permute.xlu0 %1769
        %1771 = vrot.lane.b32.xlu0 %v1747, 8
        %v1772 = vpop.permute.xlu0 %1771
        %1773 = vrot.lane.b32.xlu0 %v1748, 8
        %v1774 = vpop.permute.xlu0 %1773
        %1775 = vrot.lane.b32.xlu0 %v1749, 8
        %v1776 = vpop.permute.xlu0 %1775
        %1777 = vrot.lane.b32.xlu0 %v1750, 8
        %v1778 = vpop.permute.xlu0 %1777
        %1779 = vrot.lane.b32.xlu0 %v1751, 8
        %v1780 = vpop.permute.xlu0 %1779
        %1781 = vrot.lane.b32.xlu0 %v1752, 8
        %v1782 = vpop.permute.xlu0 %1781
        %1783 = vrot.lane.b32.xlu0 %v1753, 8
        %v1784 = vpop.permute.xlu0 %1783
        %1785 = vrot.lane.b32.xlu0 %v1754, 8
        %v1786 = vpop.permute.xlu0 %1785
        %v1787 = vunpack.c.l.b16 %v1482
        %v1788 = vunpack.c.l.b16 %v1485
        %v1789 = vunpack.c.l.b16 %v1489
        %v1790 = vunpack.c.l.b16 %v1492
        %v1791 = vunpack.c.l.b16 %v1496
        %v1792 = vunpack.c.l.b16 %v1499
        %v1793 = vunpack.c.l.b16 %v1503
        %v1794 = vunpack.c.l.b16 %v1506
        %v1795 = vunpack.c.l.b16 %v1510
        %v1796 = vunpack.c.l.b16 %v1513
        %v1797 = vunpack.c.l.b16 %v1517
        %v1798 = vunpack.c.l.b16 %v1520
        %v1799 = vunpack.c.l.b16 %v1524
        %v1800 = vunpack.c.l.b16 %v1527
        %v1801 = vunpack.c.l.b16 %v1531
        %v1802 = vunpack.c.l.b16 %v1534
        %v1803 = vunpack.c.l.b16 %v1538
        %v1804 = vunpack.c.l.b16 %v1541
        %v1805 = vunpack.c.l.b16 %v1545
        %v1806 = vunpack.c.l.b16 %v1548
        %v1807 = vunpack.c.l.b16 %v1552
        %v1808 = vunpack.c.l.b16 %v1555
        %v1809 = vunpack.c.l.b16 %v1559
        %v1810 = vunpack.c.l.b16 %v1562
        %v1811 = vunpack.c.l.b16 %v1566
        %v1812 = vunpack.c.l.b16 %v1569
        %v1813 = vunpack.c.l.b16 %v1573
        %v1814 = vunpack.c.l.b16 %v1576
        %v1815 = vunpack.c.l.b16 %v1580
        %v1816 = vunpack.c.l.b16 %v1583
        %v1817 = vunpack.c.l.b16 %v1587
        %v1818 = vunpack.c.l.b16 %v1590
        %v1819 = vpack.c.b16 %v1788, %v1787
        %v1820 = vpack.c.b16 %v1790, %v1789
        %v1821 = vpack.c.b16 %v1792, %v1791
        %v1822 = vpack.c.b16 %v1794, %v1793
        %v1823 = vpack.c.b16 %v1796, %v1795
        %v1824 = vpack.c.b16 %v1798, %v1797
        %v1825 = vpack.c.b16 %v1800, %v1799
        %v1826 = vpack.c.b16 %v1802, %v1801
        %v1827 = vpack.c.b16 %v1804, %v1803
        %v1828 = vpack.c.b16 %v1806, %v1805
        %v1829 = vpack.c.b16 %v1808, %v1807
        %v1830 = vpack.c.b16 %v1810, %v1809
        %v1831 = vpack.c.b16 %v1812, %v1811
        %v1832 = vpack.c.b16 %v1814, %v1813
        %v1833 = vpack.c.b16 %v1816, %v1815
        %v1834 = vpack.c.b16 %v1818, %v1817
        %1835 = vrot.lane.b32.xlu0 %v1819, 16
        %v1836 = vpop.permute.xlu0 %1835
        %1837 = vrot.lane.b32.xlu0 %v1820, 16
        %v1838 = vpop.permute.xlu0 %1837
        %1839 = vrot.lane.b32.xlu0 %v1821, 16
        %v1840 = vpop.permute.xlu0 %1839
        %1841 = vrot.lane.b32.xlu0 %v1822, 16
        %v1842 = vpop.permute.xlu0 %1841
        %1843 = vrot.lane.b32.xlu0 %v1823, 16
        %v1844 = vpop.permute.xlu0 %1843
        %1845 = vrot.lane.b32.xlu0 %v1824, 16
        %v1846 = vpop.permute.xlu0 %1845
        %1847 = vrot.lane.b32.xlu0 %v1825, 16
        %v1848 = vpop.permute.xlu0 %1847
        %1849 = vrot.lane.b32.xlu0 %v1826, 16
        %v1850 = vpop.permute.xlu0 %1849
        %1851 = vrot.lane.b32.xlu0 %v1827, 16
        %v1852 = vpop.permute.xlu0 %1851
        %1853 = vrot.lane.b32.xlu0 %v1828, 16
        %v1854 = vpop.permute.xlu0 %1853
        %1855 = vrot.lane.b32.xlu0 %v1829, 16
        %v1856 = vpop.permute.xlu0 %1855
        %1857 = vrot.lane.b32.xlu0 %v1830, 16
        %v1858 = vpop.permute.xlu0 %1857
        %1859 = vrot.lane.b32.xlu0 %v1831, 16
        %v1860 = vpop.permute.xlu0 %1859
        %1861 = vrot.lane.b32.xlu0 %v1832, 16
        %v1862 = vpop.permute.xlu0 %1861
        %1863 = vrot.lane.b32.xlu0 %v1833, 16
        %v1864 = vpop.permute.xlu0 %1863
        %1865 = vrot.lane.b32.xlu0 %v1834, 16
        %v1866 = vpop.permute.xlu0 %1865
        %v1867 = vunpack.c.l.b16 %v1035
        %v1868 = vunpack.c.l.b16 %v1036
        %v1869 = vpack.c.b16 %v1868, %v1867
        %1870 = vrot.lane.b32.xlu0 %v1692, 24
        %v1871 = vpop.permute.xlu0 %1870
        %1872 = vrot.lane.b32.xlu0 %v1693, 24
        %v1873 = vpop.permute.xlu0 %1872
        %1874 = vrot.lane.b32.xlu0 %v1694, 24
        %v1875 = vpop.permute.xlu0 %1874
        %1876 = vrot.lane.b32.xlu0 %v1695, 24
        %v1877 = vpop.permute.xlu0 %1876
        %1878 = vrot.lane.b32.xlu0 %v1696, 24
        %v1879 = vpop.permute.xlu0 %1878
        %1880 = vrot.lane.b32.xlu0 %v1697, 24
        %v1881 = vpop.permute.xlu0 %1880
        %1882 = vrot.lane.b32.xlu0 %v1698, 24
        %v1883 = vpop.permute.xlu0 %1882
        %1884 = vrot.lane.b32.xlu0 %v1699, 24
        %v1885 = vpop.permute.xlu0 %1884
        %1886 = vrot.lane.b32.xlu0 %v1700, 24
        %v1887 = vpop.permute.xlu0 %1886
        %1888 = vrot.lane.b32.xlu0 %v1701, 24
        %v1889 = vpop.permute.xlu0 %1888
        %1890 = vrot.lane.b32.xlu0 %v1702, 24
        %v1891 = vpop.permute.xlu0 %1890
        %1892 = vrot.lane.b32.xlu0 %v1703, 24
        %v1893 = vpop.permute.xlu0 %1892
        %1894 = vrot.lane.b32.xlu0 %v1704, 24
        %v1895 = vpop.permute.xlu0 %1894
        %1896 = vrot.lane.b32.xlu0 %v1705, 24
        %v1897 = vpop.permute.xlu0 %1896
        %1898 = vrot.lane.b32.xlu0 %v1706, 24
        %v1899 = vpop.permute.xlu0 %1898
        %1900 = vrot.lane.b32.xlu0 %v1869, 24
        %v1901 = vpop.permute.xlu0 %1900
        %v1902 = vunpack.c.l.b16 %v1604
        %v1903 = vunpack.c.l.b16 %v1614
        %v1904 = vpack.c.b16 %v1903, %v1902
        %1905 = vrot.lane.b32.xlu0 %v1740, 32
        %v1906 = vpop.permute.xlu0 %1905
        %1907 = vrot.lane.b32.xlu0 %v1741, 32
        %v1908 = vpop.permute.xlu0 %1907
        %1909 = vrot.lane.b32.xlu0 %v1742, 32
        %v1910 = vpop.permute.xlu0 %1909
        %1911 = vrot.lane.b32.xlu0 %v1743, 32
        %v1912 = vpop.permute.xlu0 %1911
        %1913 = vrot.lane.b32.xlu0 %v1744, 32
        %v1914 = vpop.permute.xlu0 %1913
        %1915 = vrot.lane.b32.xlu0 %v1745, 32
        %v1916 = vpop.permute.xlu0 %1915
        %1917 = vrot.lane.b32.xlu0 %v1746, 32
        %v1918 = vpop.permute.xlu0 %1917
        %1919 = vrot.lane.b32.xlu0 %v1747, 32
        %v1920 = vpop.permute.xlu0 %1919
        %1921 = vrot.lane.b32.xlu0 %v1748, 32
        %v1922 = vpop.permute.xlu0 %1921
        %1923 = vrot.lane.b32.xlu0 %v1749, 32
        %v1924 = vpop.permute.xlu0 %1923
        %1925 = vrot.lane.b32.xlu0 %v1750, 32
        %v1926 = vpop.permute.xlu0 %1925
        %1927 = vrot.lane.b32.xlu0 %v1751, 32
        %v1928 = vpop.permute.xlu0 %1927
        %1929 = vrot.lane.b32.xlu0 %v1752, 32
        %v1930 = vpop.permute.xlu0 %1929
        %1931 = vrot.lane.b32.xlu0 %v1753, 32
        %v1932 = vpop.permute.xlu0 %1931
        %1933 = vrot.lane.b32.xlu0 %v1754, 32
        %v1934 = vpop.permute.xlu0 %1933
        %1935 = vrot.lane.b32.xlu0 %v1904, 32
        %v1936 = vpop.permute.xlu0 %1935
        %v1937 = vunpack.c.l.b16 %v1621
        %v1938 = vunpack.c.l.b16 %v1624
        %v1939 = vpack.c.b16 %v1938, %v1937
        %1940 = vrot.lane.b32.xlu0 %v1820, 40
        %v1941 = vpop.permute.xlu0 %1940
        %1942 = vrot.lane.b32.xlu0 %v1821, 40
        %v1943 = vpop.permute.xlu0 %1942
        %1944 = vrot.lane.b32.xlu0 %v1822, 40
        %v1945 = vpop.permute.xlu0 %1944
        %1946 = vrot.lane.b32.xlu0 %v1823, 40
        %v1947 = vpop.permute.xlu0 %1946
        %1948 = vrot.lane.b32.xlu0 %v1824, 40
        %v1949 = vpop.permute.xlu0 %1948
        %1950 = vrot.lane.b32.xlu0 %v1825, 40
        %v1951 = vpop.permute.xlu0 %1950
        %1952 = vrot.lane.b32.xlu0 %v1826, 40
        %v1953 = vpop.permute.xlu0 %1952
        %1954 = vrot.lane.b32.xlu0 %v1827, 40
        %v1955 = vpop.permute.xlu0 %1954
        %1956 = vrot.lane.b32.xlu0 %v1828, 40
        %v1957 = vpop.permute.xlu0 %1956
        %1958 = vrot.lane.b32.xlu0 %v1829, 40
        %v1959 = vpop.permute.xlu0 %1958
        %1960 = vrot.lane.b32.xlu0 %v1830, 40
        %v1961 = vpop.permute.xlu0 %1960
        %1962 = vrot.lane.b32.xlu0 %v1831, 40
        %v1963 = vpop.permute.xlu0 %1962
        %1964 = vrot.lane.b32.xlu0 %v1832, 40
        %v1965 = vpop.permute.xlu0 %1964
        %1966 = vrot.lane.b32.xlu0 %v1833, 40
        %v1967 = vpop.permute.xlu0 %1966
        %1968 = vrot.lane.b32.xlu0 %v1834, 40
        %v1969 = vpop.permute.xlu0 %1968
        %1970 = vrot.lane.b32.xlu0 %v1939, 40
        %v1971 = vpop.permute.xlu0 %1970
        %v1972 = vunpack.c.l.b16 %v1038
        %v1973 = vunpack.c.l.b16 %v1039
        %v1974 = vpack.c.b16 %v1973, %v1972
        %1975 = vrot.lane.b32.xlu0 %v1693, 48
        %v1976 = vpop.permute.xlu0 %1975
        %1977 = vrot.lane.b32.xlu0 %v1694, 48
        %v1978 = vpop.permute.xlu0 %1977
        %1979 = vrot.lane.b32.xlu0 %v1695, 48
        %v1980 = vpop.permute.xlu0 %1979
        %1981 = vrot.lane.b32.xlu0 %v1696, 48
        %v1982 = vpop.permute.xlu0 %1981
        %1983 = vrot.lane.b32.xlu0 %v1697, 48
        %v1984 = vpop.permute.xlu0 %1983
        %1985 = vrot.lane.b32.xlu0 %v1698, 48
        %v1986 = vpop.permute.xlu0 %1985
        %1987 = vrot.lane.b32.xlu0 %v1699, 48
        %v1988 = vpop.permute.xlu0 %1987
        %1989 = vrot.lane.b32.xlu0 %v1700, 48
        %v1990 = vpop.permute.xlu0 %1989
        %1991 = vrot.lane.b32.xlu0 %v1701, 48
        %v1992 = vpop.permute.xlu0 %1991
        %1993 = vrot.lane.b32.xlu0 %v1702, 48
        %v1994 = vpop.permute.xlu0 %1993
        %1995 = vrot.lane.b32.xlu0 %v1703, 48
        %v1996 = vpop.permute.xlu0 %1995
        %1997 = vrot.lane.b32.xlu0 %v1704, 48
        %v1998 = vpop.permute.xlu0 %1997
        %1999 = vrot.lane.b32.xlu0 %v1705, 48
        %v2000 = vpop.permute.xlu0 %1999
        %2001 = vrot.lane.b32.xlu0 %v1706, 48
        %v2002 = vpop.permute.xlu0 %2001
        %2003 = vrot.lane.b32.xlu0 %v1869, 48
        %v2004 = vpop.permute.xlu0 %2003
        %2005 = vrot.lane.b32.xlu0 %v1974, 48
        %v2006 = vpop.permute.xlu0 %2005
        %v2007 = vunpack.c.l.b16 %v1638
        %v2008 = vunpack.c.l.b16 %v1648
        %v2009 = vpack.c.b16 %v2008, %v2007
        %2010 = vrot.lane.b32.xlu0 %v1741, 56
        %v2011 = vpop.permute.xlu0 %2010
        %2012 = vrot.lane.b32.xlu0 %v1742, 56
        %v2013 = vpop.permute.xlu0 %2012
        %2014 = vrot.lane.b32.xlu0 %v1743, 56
        %v2015 = vpop.permute.xlu0 %2014
        %2016 = vrot.lane.b32.xlu0 %v1744, 56
        %v2017 = vpop.permute.xlu0 %2016
        %2018 = vrot.lane.b32.xlu0 %v1745, 56
        %v2019 = vpop.permute.xlu0 %2018
        %2020 = vrot.lane.b32.xlu0 %v1746, 56
        %v2021 = vpop.permute.xlu0 %2020
        %2022 = vrot.lane.b32.xlu0 %v1747, 56
        %v2023 = vpop.permute.xlu0 %2022
        %2024 = vrot.lane.b32.xlu0 %v1748, 56
        %v2025 = vpop.permute.xlu0 %2024
        %2026 = vrot.lane.b32.xlu0 %v1749, 56
        %v2027 = vpop.permute.xlu0 %2026
        %2028 = vrot.lane.b32.xlu0 %v1750, 56
        %v2029 = vpop.permute.xlu0 %2028
        %2030 = vrot.lane.b32.xlu0 %v1751, 56
        %v2031 = vpop.permute.xlu0 %2030
        %2032 = vrot.lane.b32.xlu0 %v1752, 56
        %v2033 = vpop.permute.xlu0 %2032
        %2034 = vrot.lane.b32.xlu0 %v1753, 56
        %v2035 = vpop.permute.xlu0 %2034
        %2036 = vrot.lane.b32.xlu0 %v1754, 56
        %v2037 = vpop.permute.xlu0 %2036
        %2038 = vrot.lane.b32.xlu0 %v1904, 56
        %v2039 = vpop.permute.xlu0 %2038
        %2040 = vrot.lane.b32.xlu0 %v2009, 56
        %v2041 = vpop.permute.xlu0 %2040
        %v2042 = vunpack.c.l.b16 %v1655
        %v2043 = vunpack.c.l.b16 %v1658
        %v2044 = vpack.c.b16 %v2043, %v2042
        %2045 = vrot.lane.b32.xlu0 %v1821, 64
        %v2046 = vpop.permute.xlu0 %2045
        %2047 = vrot.lane.b32.xlu0 %v1822, 64
        %v2048 = vpop.permute.xlu0 %2047
        %2049 = vrot.lane.b32.xlu0 %v1823, 64
        %v2050 = vpop.permute.xlu0 %2049
        %2051 = vrot.lane.b32.xlu0 %v1824, 64
        %v2052 = vpop.permute.xlu0 %2051
        %2053 = vrot.lane.b32.xlu0 %v1825, 64
        %v2054 = vpop.permute.xlu0 %2053
        %2055 = vrot.lane.b32.xlu0 %v1826, 64
        %v2056 = vpop.permute.xlu0 %2055
        %2057 = vrot.lane.b32.xlu0 %v1827, 64
        %v2058 = vpop.permute.xlu0 %2057
        %2059 = vrot.lane.b32.xlu0 %v1828, 64
        %v2060 = vpop.permute.xlu0 %2059
        %2061 = vrot.lane.b32.xlu0 %v1829, 64
        %v2062 = vpop.permute.xlu0 %2061
        %2063 = vrot.lane.b32.xlu0 %v1830, 64
        %v2064 = vpop.permute.xlu0 %2063
        %2065 = vrot.lane.b32.xlu0 %v1831, 64
        %v2066 = vpop.permute.xlu0 %2065
        %2067 = vrot.lane.b32.xlu0 %v1832, 64
        %v2068 = vpop.permute.xlu0 %2067
        %2069 = vrot.lane.b32.xlu0 %v1833, 64
        %v2070 = vpop.permute.xlu0 %2069
        %2071 = vrot.lane.b32.xlu0 %v1834, 64
        %v2072 = vpop.permute.xlu0 %2071
        %2073 = vrot.lane.b32.xlu0 %v1939, 64
        %v2074 = vpop.permute.xlu0 %2073
        %2075 = vrot.lane.b32.xlu0 %v2044, 64
        %v2076 = vpop.permute.xlu0 %2075
        %vm2077 = vcmask 64512
        %v2080 = vsel %vm2077, %v1691, %v1756
        %v2083 = vsel %vm2077, %v1692, %v1758
        %v2086 = vsel %vm2077, %v1693, %v1760
        %v2089 = vsel %vm2077, %v1694, %v1762
        %v2092 = vsel %vm2077, %v1695, %v1764
        %v2095 = vsel %vm2077, %v1696, %v1766
        %v2098 = vsel %vm2077, %v1697, %v1768
        %v2101 = vsel %vm2077, %v1698, %v1770
        %v2104 = vsel %vm2077, %v1699, %v1772
        %v2107 = vsel %vm2077, %v1700, %v1774
        %v2110 = vsel %vm2077, %v1701, %v1776
        %v2113 = vsel %vm2077, %v1702, %v1778
        %v2116 = vsel %vm2077, %v1703, %v1780
        %v2119 = vsel %vm2077, %v1704, %v1782
        %v2122 = vsel %vm2077, %v1705, %v1784
        %v2125 = vsel %vm2077, %v1706, %v1786
        %vm2126 = vcmask 130048
        %v2128 = vsel %vm2126, %v2080, %v1836
        %v2130 = vsel %vm2126, %v2083, %v1838
        %v2132 = vsel %vm2126, %v2086, %v1840
        %v2134 = vsel %vm2126, %v2089, %v1842
        %v2136 = vsel %vm2126, %v2092, %v1844
        %v2138 = vsel %vm2126, %v2095, %v1846
        %v2140 = vsel %vm2126, %v2098, %v1848
        %v2142 = vsel %vm2126, %v2101, %v1850
        %v2144 = vsel %vm2126, %v2104, %v1852
        %v2146 = vsel %vm2126, %v2107, %v1854
        %v2148 = vsel %vm2126, %v2110, %v1856
        %v2150 = vsel %vm2126, %v2113, %v1858
        %v2152 = vsel %vm2126, %v2116, %v1860
        %v2154 = vsel %vm2126, %v2119, %v1862
        %v2156 = vsel %vm2126, %v2122, %v1864
        %v2158 = vsel %vm2126, %v2125, %v1866
        %vm2159 = vcmask 195584
        %v2161 = vsel %vm2159, %v2128, %v1871
        %v2163 = vsel %vm2159, %v2130, %v1873
        %v2165 = vsel %vm2159, %v2132, %v1875
        %v2167 = vsel %vm2159, %v2134, %v1877
        %v2169 = vsel %vm2159, %v2136, %v1879
        %v2171 = vsel %vm2159, %v2138, %v1881
        %v2173 = vsel %vm2159, %v2140, %v1883
        %v2175 = vsel %vm2159, %v2142, %v1885
        %v2177 = vsel %vm2159, %v2144, %v1887
        %v2179 = vsel %vm2159, %v2146, %v1889
        %v2181 = vsel %vm2159, %v2148, %v1891
        %v2183 = vsel %vm2159, %v2150, %v1893
        %v2185 = vsel %vm2159, %v2152, %v1895
        %v2187 = vsel %vm2159, %v2154, %v1897
        %v2189 = vsel %vm2159, %v2156, %v1899
        %v2191 = vsel %vm2159, %v2158, %v1901
        %vm2192 = vcmask 261120
        %v2194 = vsel %vm2192, %v2161, %v1906
        %v2196 = vsel %vm2192, %v2163, %v1908
        %v2198 = vsel %vm2192, %v2165, %v1910
        %v2200 = vsel %vm2192, %v2167, %v1912
        %v2202 = vsel %vm2192, %v2169, %v1914
        %v2204 = vsel %vm2192, %v2171, %v1916
        %v2206 = vsel %vm2192, %v2173, %v1918
        %v2208 = vsel %vm2192, %v2175, %v1920
        %v2210 = vsel %vm2192, %v2177, %v1922
        %v2212 = vsel %vm2192, %v2179, %v1924
        %v2214 = vsel %vm2192, %v2181, %v1926
        %v2216 = vsel %vm2192, %v2183, %v1928
        %v2218 = vsel %vm2192, %v2185, %v1930
        %v2220 = vsel %vm2192, %v2187, %v1932
        %v2222 = vsel %vm2192, %v2189, %v1934
        %v2224 = vsel %vm2192, %v2191, %v1936
        %vm2225 = vcmask 326656
        %v2227 = vsel %vm2225, %v2194, %v1941
        %v2229 = vsel %vm2225, %v2196, %v1943
        %v2231 = vsel %vm2225, %v2198, %v1945
        %v2233 = vsel %vm2225, %v2200, %v1947
        %v2235 = vsel %vm2225, %v2202, %v1949
        %v2237 = vsel %vm2225, %v2204, %v1951
        %v2239 = vsel %vm2225, %v2206, %v1953
        %v2241 = vsel %vm2225, %v2208, %v1955
        %v2243 = vsel %vm2225, %v2210, %v1957
        %v2245 = vsel %vm2225, %v2212, %v1959
        %v2247 = vsel %vm2225, %v2214, %v1961
        %v2249 = vsel %vm2225, %v2216, %v1963
        %v2251 = vsel %vm2225, %v2218, %v1965
        %v2253 = vsel %vm2225, %v2220, %v1967
        %v2255 = vsel %vm2225, %v2222, %v1969
        %v2257 = vsel %vm2225, %v2224, %v1971
        %vm2258 = vcmask 392192
        %v2260 = vsel %vm2258, %v2227, %v1976
        %v2262 = vsel %vm2258, %v2229, %v1978
        %v2264 = vsel %vm2258, %v2231, %v1980
        %v2266 = vsel %vm2258, %v2233, %v1982
        %v2268 = vsel %vm2258, %v2235, %v1984
        %v2270 = vsel %vm2258, %v2237, %v1986
        %v2272 = vsel %vm2258, %v2239, %v1988
        %v2274 = vsel %vm2258, %v2241, %v1990
        %v2276 = vsel %vm2258, %v2243, %v1992
        %v2278 = vsel %vm2258, %v2245, %v1994
        %v2280 = vsel %vm2258, %v2247, %v1996
        %v2282 = vsel %vm2258, %v2249, %v1998
        %v2284 = vsel %vm2258, %v2251, %v2000
        %v2286 = vsel %vm2258, %v2253, %v2002
        %v2288 = vsel %vm2258, %v2255, %v2004
        %v2290 = vsel %vm2258, %v2257, %v2006
        %vm2291 = vcmask 457728
        %v2293 = vsel %vm2291, %v2260, %v2011
        %v2295 = vsel %vm2291, %v2262, %v2013
        %v2297 = vsel %vm2291, %v2264, %v2015
        %v2299 = vsel %vm2291, %v2266, %v2017
        %v2301 = vsel %vm2291, %v2268, %v2019
        %v2303 = vsel %vm2291, %v2270, %v2021
        %v2305 = vsel %vm2291, %v2272, %v2023
        %v2307 = vsel %vm2291, %v2274, %v2025
        %v2309 = vsel %vm2291, %v2276, %v2027
        %v2311 = vsel %vm2291, %v2278, %v2029
        %v2313 = vsel %vm2291, %v2280, %v2031
        %v2315 = vsel %vm2291, %v2282, %v2033
        %v2317 = vsel %vm2291, %v2284, %v2035
        %v2319 = vsel %vm2291, %v2286, %v2037
        %v2321 = vsel %vm2291, %v2288, %v2039
        %v2323 = vsel %vm2291, %v2290, %v2041
        %vm2324 = vcmask 523264
        %v2326 = vsel %vm2324, %v2293, %v2046
        %v2328 = vsel %vm2324, %v2295, %v2048
        %v2330 = vsel %vm2324, %v2297, %v2050
        %v2332 = vsel %vm2324, %v2299, %v2052
        %v2334 = vsel %vm2324, %v2301, %v2054
        %v2336 = vsel %vm2324, %v2303, %v2056
        %v2338 = vsel %vm2324, %v2305, %v2058
        %v2340 = vsel %vm2324, %v2307, %v2060
        %v2342 = vsel %vm2324, %v2309, %v2062
        %v2344 = vsel %vm2324, %v2311, %v2064
        %v2346 = vsel %vm2324, %v2313, %v2066
        %v2348 = vsel %vm2324, %v2315, %v2068
        %v2350 = vsel %vm2324, %v2317, %v2070
        %v2352 = vsel %vm2324, %v2319, %v2072
        %v2354 = vsel %vm2324, %v2321, %v2074
        %v2356 = vsel %vm2324, %v2323, %v2076
        %v2357 = vld [vmem:[%s1] sm:$0xf]
        %v2358 = vld [vmem:[%s1 + $0x4] sm:$0xf]
        %v2359 = vld [vmem:[%s1 + $0x8] sm:$0xf]
        %v2360 = vld [vmem:[%s1 + $0xc] sm:$0xf]
        %v2361 = vld [vmem:[%s1 + $0x10] sm:$0xf]
        %v2362 = vld [vmem:[%s1 + $0x14] sm:$0xf]
        %v2363 = vld [vmem:[%s1 + $0x18] sm:$0xf]
        %v2364 = vld [vmem:[%s1 + $0x1c] sm:$0xf]
        %v2365 = vld [vmem:[%s1 + $0x20] sm:$0xf]
        %v2375 = vunpack.c.l.b16 %v2357
        %v2376 = vunpack.c.l.b16 %v2358
        %v2377 = vunpack.c.l.b16 %v2359
        %v2378 = vunpack.c.l.b16 %v2360
        %v2379 = vunpack.c.l.b16 %v2361
        %v2380 = vunpack.c.l.b16 %v2362
        %v2381 = vunpack.c.l.b16 %v2363
        %v2382 = vunpack.c.l.b16 %v2364
        %v2383 = vunpack.c.l.b16 %v2365
        %v2384 = vpack.c.b16 %v2376, %v2375
        %v2385 = vpack.c.b16 %v2378, %v2377
        %v2386 = vpack.c.b16 %v2380, %v2379
        %v2387 = vpack.c.b16 %v2382, %v2381
        %v2388 = vpack.c.b16 %v2383, %v2383
        %vm2393 = vcmask 588800
        %v2394 = vsel %vm2393, %v2326, 0
        %v2396 = vsel %vm2393, %v2328, 0
        %v2398 = vsel %vm2393, %v2330, 0
        %v2400 = vsel %vm2393, %v2332, 0
        %v2402 = vsel %vm2393, %v2334, 0
        %v2404 = vsel %vm2393, %v2336, 0
        %v2406 = vsel %vm2393, %v2338, 0
        %v2408 = vsel %vm2393, %v2340, 0
        %v2410 = vsel %vm2393, %v2342, 0
        %v2412 = vsel %vm2393, %v2344, 0
        %v2414 = vsel %vm2393, %v2346, 0
        %v2416 = vsel %vm2393, %v2348, 0
        %v2418 = vsel %vm2393, %v2350, 0
        %v2420 = vsel %vm2393, %v2352, 0
        %v2422 = vsel %vm2393, %v2354, 0
        %v2424 = vsel %vm2393, %v2356, 0
        %vm2426 = vcmask 1043456
        %v2428 = vsel %vm2426, %v2388, 0
        %2430 = vmatprep.subr.bf16.mxu0 0
        %2431 = vmatpush1.bf16.msra.mxu0 0
        %2432 = vmatprep.subr.bf16.mxu0 0
        %2433 = vmatpush1.bf16.msra.mxu0 0
        %2434 = vmatprep.subr.bf16.mxu0 0
        %2435 = vmatpush1.bf16.msra.mxu0 0
        %2436 = vmatprep.subr.bf16.mxu0 0
        %2437 = vmatpush1.bf16.msra.mxu0 %v2428
        %2438 = vmatprep.subr.bf16.mxu0 0
        %2439 = vmatpush1.bf16.msra.mxu0 %v2387
        %2440 = vmatprep.subr.bf16.mxu0 0
        %2441 = vmatpush1.bf16.msra.mxu0 %v2386
        %2442 = vmatprep.subr.bf16.mxu0 0
        %2443 = vmatpush1.bf16.msra.mxu0 %v2385
        %2444 = vmatprep.subr.bf16.mxu0 0
        %2445 = vmatpush1.bf16.msra.mxu0 %v2384
        %2446 = vmatprep.subr.bf16.mxu0 0
        %2447 = vmatpush2.bf16.msra.mxu0 0
        %2448 = vmatprep.subr.bf16.mxu0 0
        %2449 = vmatpush2.bf16.msra.mxu0 0
        %2450 = vmatprep.subr.bf16.mxu0 0
        %2451 = vmatpush2.bf16.msra.mxu0 0
        %2452 = vmatprep.subr.bf16.mxu0 0
        %2453 = vmatpush2.bf16.msra.mxu0 0
        %2454 = vmatprep.subr.bf16.mxu0 0
        %2455 = vmatpush2.bf16.msra.mxu0 0
        %2456 = vmatprep.subr.bf16.mxu0 0
        %2457 = vmatpush2.bf16.msra.mxu0 0
        %2458 = vmatprep.subr.bf16.mxu0 0
        %2459 = vmatpush2.bf16.msra.mxu0 0
        %2460 = vmatprep.subr.bf16.mxu0 0
        %2461 = vmatpush2.bf16.msra.mxu0 0
        %2462 = vmatprep.mubr.bf16.mxu0 0
        %2463 = vmatmul.mubr.bf16.gmra.mxu0 %v2394
        %v2464 = vpop.f32.mrf.mxu0
        %v2465 = vadd.f32 0.0, %v2464
        %v2466 = vpop.f32.mrf.mxu0
        %v2467 = vpop.f32.mrf.mxu0
        %v2468 = vadd.f32 0.0, %v2467
        %v2469 = vpop.f32.mrf.mxu0
        %2470 = vmatprep.mubr.bf16.mxu0 0
        %2471 = vmatmul.mubr.bf16.gmra.mxu0 %v2396
        %v2472 = vpop.f32.mrf.mxu0
        %v2473 = vadd.f32 0.0, %v2472
        %v2474 = vpop.f32.mrf.mxu0
        %v2475 = vpop.f32.mrf.mxu0
        %v2476 = vadd.f32 0.0, %v2475
        %v2477 = vpop.f32.mrf.mxu0
        %2478 = vmatprep.mubr.bf16.mxu0 0
        %2479 = vmatmul.mubr.bf16.gmra.mxu0 %v2398
        %v2480 = vpop.f32.mrf.mxu0
        %v2481 = vadd.f32 0.0, %v2480
        %v2482 = vpop.f32.mrf.mxu0
        %v2483 = vpop.f32.mrf.mxu0
        %v2484 = vadd.f32 0.0, %v2483
        %v2485 = vpop.f32.mrf.mxu0
        %2486 = vmatprep.mubr.bf16.mxu0 0
        %2487 = vmatmul.mubr.bf16.gmra.mxu0 %v2400
        %v2488 = vpop.f32.mrf.mxu0
        %v2489 = vadd.f32 0.0, %v2488
        %v2490 = vpop.f32.mrf.mxu0
        %v2491 = vpop.f32.mrf.mxu0
        %v2492 = vadd.f32 0.0, %v2491
        %v2493 = vpop.f32.mrf.mxu0
        %2494 = vmatprep.mubr.bf16.mxu0 0
        %2495 = vmatmul.mubr.bf16.gmra.mxu0 %v2402
        %v2496 = vpop.f32.mrf.mxu0
        %v2497 = vadd.f32 0.0, %v2496
        %v2498 = vpop.f32.mrf.mxu0
        %v2499 = vpop.f32.mrf.mxu0
        %v2500 = vadd.f32 0.0, %v2499
        %v2501 = vpop.f32.mrf.mxu0
        %2502 = vmatprep.mubr.bf16.mxu0 0
        %2503 = vmatmul.mubr.bf16.gmra.mxu0 %v2404
        %v2504 = vpop.f32.mrf.mxu0
        %v2505 = vadd.f32 0.0, %v2504
        %v2506 = vpop.f32.mrf.mxu0
        %v2507 = vpop.f32.mrf.mxu0
        %v2508 = vadd.f32 0.0, %v2507
        %v2509 = vpop.f32.mrf.mxu0
        %2510 = vmatprep.mubr.bf16.mxu0 0
        %2511 = vmatmul.mubr.bf16.gmra.mxu0 %v2406
        %v2512 = vpop.f32.mrf.mxu0
        %v2513 = vadd.f32 0.0, %v2512
        %v2514 = vpop.f32.mrf.mxu0
        %v2515 = vpop.f32.mrf.mxu0
        %v2516 = vadd.f32 0.0, %v2515
        %v2517 = vpop.f32.mrf.mxu0
        %2518 = vmatprep.mubr.bf16.mxu0 0
        %2519 = vmatmul.mubr.bf16.gmra.mxu0 %v2408
        %v2520 = vpop.f32.mrf.mxu0
        %v2521 = vadd.f32 0.0, %v2520
        %v2522 = vpop.f32.mrf.mxu0
        %v2523 = vpop.f32.mrf.mxu0
        %v2524 = vadd.f32 0.0, %v2523
        %v2525 = vpop.f32.mrf.mxu0
        %2526 = vmatprep.mubr.bf16.mxu0 0
        %2527 = vmatmul.mubr.bf16.gmra.mxu0 %v2410
        %v2528 = vpop.f32.mrf.mxu0
        %v2529 = vadd.f32 0.0, %v2528
        %v2530 = vpop.f32.mrf.mxu0
        %v2531 = vpop.f32.mrf.mxu0
        %v2532 = vadd.f32 0.0, %v2531
        %v2533 = vpop.f32.mrf.mxu0
        %2534 = vmatprep.mubr.bf16.mxu0 0
        %2535 = vmatmul.mubr.bf16.gmra.mxu0 %v2412
        %v2536 = vpop.f32.mrf.mxu0
        %v2537 = vadd.f32 0.0, %v2536
        %v2538 = vpop.f32.mrf.mxu0
        %v2539 = vpop.f32.mrf.mxu0
        %v2540 = vadd.f32 0.0, %v2539
        %v2541 = vpop.f32.mrf.mxu0
        %2542 = vmatprep.mubr.bf16.mxu0 0
        %2543 = vmatmul.mubr.bf16.gmra.mxu0 %v2414
        %v2544 = vpop.f32.mrf.mxu0
        %v2545 = vadd.f32 0.0, %v2544
        %v2546 = vpop.f32.mrf.mxu0
        %v2547 = vpop.f32.mrf.mxu0
        %v2548 = vadd.f32 0.0, %v2547
        %v2549 = vpop.f32.mrf.mxu0
        %2550 = vmatprep.mubr.bf16.mxu0 0
        %2551 = vmatmul.mubr.bf16.gmra.mxu0 %v2416
        %v2552 = vpop.f32.mrf.mxu0
        %v2553 = vadd.f32 0.0, %v2552
        %v2554 = vpop.f32.mrf.mxu0
        %v2555 = vpop.f32.mrf.mxu0
        %v2556 = vadd.f32 0.0, %v2555
        %v2557 = vpop.f32.mrf.mxu0
        %2558 = vmatprep.mubr.bf16.mxu0 0
        %2559 = vmatmul.mubr.bf16.gmra.mxu0 %v2418
        %v2560 = vpop.f32.mrf.mxu0
        %v2561 = vadd.f32 0.0, %v2560
        %v2562 = vpop.f32.mrf.mxu0
        %v2563 = vpop.f32.mrf.mxu0
        %v2564 = vadd.f32 0.0, %v2563
        %v2565 = vpop.f32.mrf.mxu0
        %2566 = vmatprep.mubr.bf16.mxu0 0
        %2567 = vmatmul.mubr.bf16.gmra.mxu0 %v2420
        %v2568 = vpop.f32.mrf.mxu0
        %v2569 = vadd.f32 0.0, %v2568
        %v2570 = vpop.f32.mrf.mxu0
        %v2571 = vpop.f32.mrf.mxu0
        %v2572 = vadd.f32 0.0, %v2571
        %v2573 = vpop.f32.mrf.mxu0
        %2574 = vmatprep.mubr.bf16.mxu0 0
        %2575 = vmatmul.mubr.bf16.gmra.mxu0 %v2422
        %v2576 = vpop.f32.mrf.mxu0
        %v2577 = vadd.f32 0.0, %v2576
        %v2578 = vpop.f32.mrf.mxu0
        %v2579 = vpop.f32.mrf.mxu0
        %v2580 = vadd.f32 0.0, %v2579
        %v2581 = vpop.f32.mrf.mxu0
        %2582 = vmatprep.mubr.bf16.mxu0 0
        %2583 = vmatmul.mubr.bf16.gmra.mxu0 %v2424
        %v2584 = vpop.f32.mrf.mxu0
        %v2585 = vadd.f32 0.0, %v2584
        %v2586 = vpop.f32.mrf.mxu0
        %v2587 = vpop.f32.mrf.mxu0
        %v2588 = vadd.f32 0.0, %v2587
        %v2589 = vpop.f32.mrf.mxu0
        %2590 = vdwg.mxu0
        %v2591 = vld [vmem:[%s2] sm:$0x1]
        %v2593 = vlaneseq
        %v2594 = vshrl.u32 %v2593, 7
        %v2595 = vsub.s32 0, %v2594
        %v2596 = vrot.slane %v2591, %v2595
        %v2598 = vmul.f32 %v2465, %v2596
        %v2599 = vmul.f32 %v2468, %v2596
        %v2600 = vmul.f32 %v2473, %v2596
        %v2601 = vmul.f32 %v2476, %v2596
        %v2602 = vmul.f32 %v2481, %v2596
        %v2603 = vmul.f32 %v2484, %v2596
        %v2604 = vmul.f32 %v2489, %v2596
        %v2605 = vmul.f32 %v2492, %v2596
        %v2606 = vmul.f32 %v2497, %v2596
        %v2607 = vmul.f32 %v2500, %v2596
        %v2608 = vmul.f32 %v2505, %v2596
        %v2609 = vmul.f32 %v2508, %v2596
        %v2610 = vmul.f32 %v2513, %v2596
        %v2611 = vmul.f32 %v2516, %v2596
        %v2612 = vmul.f32 %v2521, %v2596
        %v2613 = vmul.f32 %v2524, %v2596
        %v2614 = vmul.f32 %v2529, %v2596
        %v2615 = vmul.f32 %v2532, %v2596
        %v2616 = vmul.f32 %v2537, %v2596
        %v2617 = vmul.f32 %v2540, %v2596
        %v2618 = vmul.f32 %v2545, %v2596
        %v2619 = vmul.f32 %v2548, %v2596
        %v2620 = vmul.f32 %v2553, %v2596
        %v2621 = vmul.f32 %v2556, %v2596
        %v2622 = vmul.f32 %v2561, %v2596
        %v2623 = vmul.f32 %v2564, %v2596
        %v2624 = vmul.f32 %v2569, %v2596
        %v2625 = vmul.f32 %v2572, %v2596
        %v2626 = vmul.f32 %v2577, %v2596
        %v2627 = vmul.f32 %v2580, %v2596
        %v2628 = vmul.f32 %v2585, %v2596
        %v2629 = vmul.f32 %v2588, %v2596
        %v2630 = vld [vmem:[%s3] sm:$0x1]
        %v2632 = vlaneseq
        %v2633 = vshrl.u32 %v2632, 7
        %v2634 = vsub.s32 0, %v2633
        %v2635 = vrot.slane %v2630, %v2634
        %v2637 = vadd.f32 %v2598, %v2635
        %v2638 = vadd.f32 %v2599, %v2635
        %v2639 = vadd.f32 %v2600, %v2635
        %v2640 = vadd.f32 %v2601, %v2635
        %v2641 = vadd.f32 %v2602, %v2635
        %v2642 = vadd.f32 %v2603, %v2635
        %v2643 = vadd.f32 %v2604, %v2635
        %v2644 = vadd.f32 %v2605, %v2635
        %v2645 = vadd.f32 %v2606, %v2635
        %v2646 = vadd.f32 %v2607, %v2635
        %v2647 = vadd.f32 %v2608, %v2635
        %v2648 = vadd.f32 %v2609, %v2635
        %v2649 = vadd.f32 %v2610, %v2635
        %v2650 = vadd.f32 %v2611, %v2635
        %v2651 = vadd.f32 %v2612, %v2635
        %v2652 = vadd.f32 %v2613, %v2635
        %v2653 = vadd.f32 %v2614, %v2635
        %v2654 = vadd.f32 %v2615, %v2635
        %v2655 = vadd.f32 %v2616, %v2635
        %v2656 = vadd.f32 %v2617, %v2635
        %v2657 = vadd.f32 %v2618, %v2635
        %v2658 = vadd.f32 %v2619, %v2635
        %v2659 = vadd.f32 %v2620, %v2635
        %v2660 = vadd.f32 %v2621, %v2635
        %v2661 = vadd.f32 %v2622, %v2635
        %v2662 = vadd.f32 %v2623, %v2635
        %v2663 = vadd.f32 %v2624, %v2635
        %v2664 = vadd.f32 %v2625, %v2635
        %v2665 = vadd.f32 %v2626, %v2635
        %v2666 = vadd.f32 %v2627, %v2635
        %v2667 = vadd.f32 %v2628, %v2635
        %v2668 = vadd.f32 %v2629, %v2635
        %v2669 = vmax.f32 %v2637, 0.0
        %v2670 = vmax.f32 %v2638, 0.0
        %v2671 = vmax.f32 %v2639, 0.0
        %v2672 = vmax.f32 %v2640, 0.0
        %v2673 = vmax.f32 %v2641, 0.0
        %v2674 = vmax.f32 %v2642, 0.0
        %v2675 = vmax.f32 %v2643, 0.0
        %v2676 = vmax.f32 %v2644, 0.0
        %v2677 = vmax.f32 %v2645, 0.0
        %v2678 = vmax.f32 %v2646, 0.0
        %v2679 = vmax.f32 %v2647, 0.0
        %v2680 = vmax.f32 %v2648, 0.0
        %v2681 = vmax.f32 %v2649, 0.0
        %v2682 = vmax.f32 %v2650, 0.0
        %v2683 = vmax.f32 %v2651, 0.0
        %v2684 = vmax.f32 %v2652, 0.0
        %v2685 = vmax.f32 %v2653, 0.0
        %v2686 = vmax.f32 %v2654, 0.0
        %v2687 = vmax.f32 %v2655, 0.0
        %v2688 = vmax.f32 %v2656, 0.0
        %v2689 = vmax.f32 %v2657, 0.0
        %v2690 = vmax.f32 %v2658, 0.0
        %v2691 = vmax.f32 %v2659, 0.0
        %v2692 = vmax.f32 %v2660, 0.0
        %v2693 = vmax.f32 %v2661, 0.0
        %v2694 = vmax.f32 %v2662, 0.0
        %v2695 = vmax.f32 %v2663, 0.0
        %v2696 = vmax.f32 %v2664, 0.0
        %v2697 = vmax.f32 %v2665, 0.0
        %v2698 = vmax.f32 %v2666, 0.0
        %v2699 = vmax.f32 %v2667, 0.0
        %v2700 = vmax.f32 %v2668, 0.0
        %v2701 = vpack.c.bf16 %v2670, %v2669
        %v2702 = vpack.c.bf16 %v2672, %v2671
        %v2703 = vpack.c.bf16 %v2674, %v2673
        %v2704 = vpack.c.bf16 %v2676, %v2675
        %v2705 = vpack.c.bf16 %v2678, %v2677
        %v2706 = vpack.c.bf16 %v2680, %v2679
        %v2707 = vpack.c.bf16 %v2682, %v2681
        %v2708 = vpack.c.bf16 %v2684, %v2683
        %v2709 = vpack.c.bf16 %v2686, %v2685
        %v2710 = vpack.c.bf16 %v2688, %v2687
        %v2711 = vpack.c.bf16 %v2690, %v2689
        %v2712 = vpack.c.bf16 %v2692, %v2691
        %v2713 = vpack.c.bf16 %v2694, %v2693
        %v2714 = vpack.c.bf16 %v2696, %v2695
        %v2715 = vpack.c.bf16 %v2698, %v2697
        %v2716 = vpack.c.bf16 %v2700, %v2699
        %v2733 = vunpack.c.l.b16 %v2701
        %v2734 = vunpack.c.h.b16 %v2701
        %v2735 = vunpack.c.l.b16 %v2702
        %v2736 = vunpack.c.h.b16 %v2702
        %v2737 = vunpack.c.l.b16 %v2703
        %v2738 = vunpack.c.h.b16 %v2703
        %v2739 = vunpack.c.l.b16 %v2704
        %v2740 = vunpack.c.h.b16 %v2704
        %v2741 = vunpack.c.l.b16 %v2705
        %v2742 = vunpack.c.h.b16 %v2705
        %v2743 = vunpack.c.l.b16 %v2706
        %v2744 = vunpack.c.h.b16 %v2706
        %v2745 = vunpack.c.l.b16 %v2707
        %v2746 = vunpack.c.h.b16 %v2707
        %v2747 = vunpack.c.l.b16 %v2708
        %v2748 = vunpack.c.h.b16 %v2708
        %v2749 = vunpack.c.l.b16 %v2709
        %v2750 = vunpack.c.h.b16 %v2709
        %v2751 = vunpack.c.l.b16 %v2710
        %v2752 = vunpack.c.h.b16 %v2710
        %v2753 = vunpack.c.l.b16 %v2711
        %v2754 = vunpack.c.h.b16 %v2711
        %v2755 = vunpack.c.l.b16 %v2712
        %v2756 = vunpack.c.h.b16 %v2712
        %v2757 = vunpack.c.l.b16 %v2713
        %v2758 = vunpack.c.h.b16 %v2713
        %v2759 = vunpack.c.l.b16 %v2714
        %v2760 = vunpack.c.h.b16 %v2714
        %v2761 = vunpack.c.l.b16 %v2715
        %v2762 = vunpack.c.h.b16 %v2715
        %v2763 = vunpack.c.l.b16 %v2716
        %v2764 = vunpack.c.h.b16 %v2716
        %v2765 = vpack.c.b16 %v2733, %v2733
        %v2766 = vpack.c.b16 %v2734, %v2734
        %v2767 = vpack.c.b16 %v2735, %v2735
        %v2768 = vpack.c.b16 %v2736, %v2736
        %v2769 = vpack.c.b16 %v2737, %v2737
        %v2770 = vpack.c.b16 %v2738, %v2738
        %v2771 = vpack.c.b16 %v2739, %v2739
        %v2772 = vpack.c.b16 %v2740, %v2740
        %v2773 = vpack.c.b16 %v2741, %v2741
        %v2774 = vpack.c.b16 %v2742, %v2742
        %v2775 = vpack.c.b16 %v2743, %v2743
        %v2776 = vpack.c.b16 %v2744, %v2744
        %v2777 = vpack.c.b16 %v2745, %v2745
        %v2778 = vpack.c.b16 %v2746, %v2746
        %v2779 = vpack.c.b16 %v2747, %v2747
        %v2780 = vpack.c.b16 %v2748, %v2748
        %v2781 = vpack.c.b16 %v2749, %v2749
        %v2782 = vpack.c.b16 %v2750, %v2750
        %v2783 = vpack.c.b16 %v2751, %v2751
        %v2784 = vpack.c.b16 %v2752, %v2752
        %v2785 = vpack.c.b16 %v2753, %v2753
        %v2786 = vpack.c.b16 %v2754, %v2754
        %v2787 = vpack.c.b16 %v2755, %v2755
        %v2788 = vpack.c.b16 %v2756, %v2756
        %v2789 = vpack.c.b16 %v2757, %v2757
        %v2790 = vpack.c.b16 %v2758, %v2758
        %v2791 = vpack.c.b16 %v2759, %v2759
        %v2792 = vpack.c.b16 %v2760, %v2760
        %v2793 = vpack.c.b16 %v2761, %v2761
        %v2794 = vpack.c.b16 %v2762, %v2762
        %v2795 = vpack.c.b16 %v2763, %v2763
        %v2796 = vpack.c.b16 %v2764, %v2764
        %v2798 = vshrl.u32 %v2765, 16
        %v2800 = vrot.slane %v2798, 7
        %v2801 = vshll.u32 %v2765, 16
        %v2803 = vor.u32 %v2800, %v2801
        %v2804 = vrot.slane %v2800, 4
        %v2806 = vshrl.u32 %v2766, 16
        %v2808 = vrot.slane %v2806, 7
        %v2809 = vshll.u32 %v2766, 16
        %v2811 = vor.u32 %v2808, %v2809
        %v2812 = vsel %vm552, %v2804, %v2811
        %v2813 = vrot.slane %v2808, 4
        %v2815 = vshrl.u32 %v2767, 16
        %v2817 = vrot.slane %v2815, 7
        %v2818 = vshll.u32 %v2767, 16
        %v2820 = vor.u32 %v2817, %v2818
        %v2821 = vrot.slane %v2817, 4
        %v2823 = vshrl.u32 %v2768, 16
        %v2825 = vrot.slane %v2823, 7
        %v2826 = vshll.u32 %v2768, 16
        %v2828 = vor.u32 %v2825, %v2826
        %v2829 = vsel %vm552, %v2821, %v2828
        %v2830 = vrot.slane %v2825, 4
        %v2832 = vshrl.u32 %v2769, 16
        %v2834 = vrot.slane %v2832, 7
        %v2835 = vshll.u32 %v2769, 16
        %v2837 = vor.u32 %v2834, %v2835
        %v2838 = vrot.slane %v2834, 4
        %v2840 = vshrl.u32 %v2770, 16
        %v2842 = vrot.slane %v2840, 7
        %v2843 = vshll.u32 %v2770, 16
        %v2845 = vor.u32 %v2842, %v2843
        %v2846 = vsel %vm552, %v2838, %v2845
        %v2847 = vrot.slane %v2842, 4
        %v2849 = vshrl.u32 %v2771, 16
        %v2851 = vrot.slane %v2849, 7
        %v2852 = vshll.u32 %v2771, 16
        %v2854 = vor.u32 %v2851, %v2852
        %v2855 = vrot.slane %v2851, 4
        %v2857 = vshrl.u32 %v2772, 16
        %v2859 = vrot.slane %v2857, 7
        %v2860 = vshll.u32 %v2772, 16
        %v2862 = vor.u32 %v2859, %v2860
        %v2863 = vsel %vm552, %v2855, %v2862
        %v2864 = vrot.slane %v2859, 4
        %v2866 = vshrl.u32 %v2773, 16
        %v2868 = vrot.slane %v2866, 7
        %v2869 = vshll.u32 %v2773, 16
        %v2871 = vor.u32 %v2868, %v2869
        %v2872 = vrot.slane %v2868, 4
        %v2874 = vshrl.u32 %v2774, 16
        %v2876 = vrot.slane %v2874, 7
        %v2877 = vshll.u32 %v2774, 16
        %v2879 = vor.u32 %v2876, %v2877
        %v2880 = vsel %vm552, %v2872, %v2879
        %v2881 = vrot.slane %v2876, 4
        %v2883 = vshrl.u32 %v2775, 16
        %v2885 = vrot.slane %v2883, 7
        %v2886 = vshll.u32 %v2775, 16
        %v2888 = vor.u32 %v2885, %v2886
        %v2889 = vrot.slane %v2885, 4
        %v2891 = vshrl.u32 %v2776, 16
        %v2893 = vrot.slane %v2891, 7
        %v2894 = vshll.u32 %v2776, 16
        %v2896 = vor.u32 %v2893, %v2894
        %v2897 = vsel %vm552, %v2889, %v2896
        %v2898 = vrot.slane %v2893, 4
        %v2900 = vshrl.u32 %v2777, 16
        %v2902 = vrot.slane %v2900, 7
        %v2903 = vshll.u32 %v2777, 16
        %v2905 = vor.u32 %v2902, %v2903
        %v2906 = vrot.slane %v2902, 4
        %v2908 = vshrl.u32 %v2778, 16
        %v2910 = vrot.slane %v2908, 7
        %v2911 = vshll.u32 %v2778, 16
        %v2913 = vor.u32 %v2910, %v2911
        %v2914 = vsel %vm552, %v2906, %v2913
        %v2915 = vrot.slane %v2910, 4
        %v2917 = vshrl.u32 %v2779, 16
        %v2919 = vrot.slane %v2917, 7
        %v2920 = vshll.u32 %v2779, 16
        %v2922 = vor.u32 %v2919, %v2920
        %v2923 = vrot.slane %v2919, 4
        %v2925 = vshrl.u32 %v2780, 16
        %v2927 = vrot.slane %v2925, 7
        %v2928 = vshll.u32 %v2780, 16
        %v2930 = vor.u32 %v2927, %v2928
        %v2931 = vsel %vm552, %v2923, %v2930
        %v2932 = vrot.slane %v2927, 4
        %v2934 = vshrl.u32 %v2781, 16
        %v2936 = vrot.slane %v2934, 7
        %v2937 = vshll.u32 %v2781, 16
        %v2939 = vor.u32 %v2936, %v2937
        %v2940 = vrot.slane %v2936, 4
        %v2942 = vshrl.u32 %v2782, 16
        %v2944 = vrot.slane %v2942, 7
        %v2945 = vshll.u32 %v2782, 16
        %v2947 = vor.u32 %v2944, %v2945
        %v2948 = vsel %vm552, %v2940, %v2947
        %v2949 = vrot.slane %v2944, 4
        %v2951 = vshrl.u32 %v2783, 16
        %v2953 = vrot.slane %v2951, 7
        %v2954 = vshll.u32 %v2783, 16
        %v2956 = vor.u32 %v2953, %v2954
        %v2957 = vrot.slane %v2953, 4
        %v2959 = vshrl.u32 %v2784, 16
        %v2961 = vrot.slane %v2959, 7
        %v2962 = vshll.u32 %v2784, 16
        %v2964 = vor.u32 %v2961, %v2962
        %v2965 = vsel %vm552, %v2957, %v2964
        %v2966 = vrot.slane %v2961, 4
        %v2968 = vshrl.u32 %v2785, 16
        %v2970 = vrot.slane %v2968, 7
        %v2971 = vshll.u32 %v2785, 16
        %v2973 = vor.u32 %v2970, %v2971
        %v2974 = vrot.slane %v2970, 4
        %v2976 = vshrl.u32 %v2786, 16
        %v2978 = vrot.slane %v2976, 7
        %v2979 = vshll.u32 %v2786, 16
        %v2981 = vor.u32 %v2978, %v2979
        %v2982 = vsel %vm552, %v2974, %v2981
        %v2983 = vrot.slane %v2978, 4
        %v2985 = vshrl.u32 %v2787, 16
        %v2987 = vrot.slane %v2985, 7
        %v2988 = vshll.u32 %v2787, 16
        %v2990 = vor.u32 %v2987, %v2988
        %v2991 = vrot.slane %v2987, 4
        %v2993 = vshrl.u32 %v2788, 16
        %v2995 = vrot.slane %v2993, 7
        %v2996 = vshll.u32 %v2788, 16
        %v2998 = vor.u32 %v2995, %v2996
        %v2999 = vsel %vm552, %v2991, %v2998
        %v3000 = vrot.slane %v2995, 4
        %v3002 = vshrl.u32 %v2789, 16
        %v3004 = vrot.slane %v3002, 7
        %v3005 = vshll.u32 %v2789, 16
        %v3007 = vor.u32 %v3004, %v3005
        %v3008 = vrot.slane %v3004, 4
        %v3010 = vshrl.u32 %v2790, 16
        %v3012 = vrot.slane %v3010, 7
        %v3013 = vshll.u32 %v2790, 16
        %v3015 = vor.u32 %v3012, %v3013
        %v3016 = vsel %vm552, %v3008, %v3015
        %v3017 = vrot.slane %v3012, 4
        %v3019 = vshrl.u32 %v2791, 16
        %v3021 = vrot.slane %v3019, 7
        %v3022 = vshll.u32 %v2791, 16
        %v3024 = vor.u32 %v3021, %v3022
        %v3025 = vrot.slane %v3021, 4
        %v3027 = vshrl.u32 %v2792, 16
        %v3029 = vrot.slane %v3027, 7
        %v3030 = vshll.u32 %v2792, 16
        %v3032 = vor.u32 %v3029, %v3030
        %v3033 = vsel %vm552, %v3025, %v3032
        %v3034 = vrot.slane %v3029, 4
        %v3036 = vshrl.u32 %v2793, 16
        %v3038 = vrot.slane %v3036, 7
        %v3039 = vshll.u32 %v2793, 16
        %v3041 = vor.u32 %v3038, %v3039
        %v3042 = vrot.slane %v3038, 4
        %v3044 = vshrl.u32 %v2794, 16
        %v3046 = vrot.slane %v3044, 7
        %v3047 = vshll.u32 %v2794, 16
        %v3049 = vor.u32 %v3046, %v3047
        %v3050 = vsel %vm552, %v3042, %v3049
        %v3051 = vrot.slane %v3046, 4
        %v3053 = vshrl.u32 %v2795, 16
        %v3055 = vrot.slane %v3053, 7
        %v3056 = vshll.u32 %v2795, 16
        %v3058 = vor.u32 %v3055, %v3056
        %v3059 = vrot.slane %v3055, 4
        %v3061 = vshrl.u32 %v2796, 16
        %v3063 = vrot.slane %v3061, 7
        %v3064 = vshll.u32 %v2796, 16
        %v3066 = vor.u32 %v3063, %v3064
        %v3067 = vsel %vm552, %v3059, %v3066
        %v3068 = vrot.slane %v3063, 4
        %v3117 = vld [vmem:[%s289] sm:$0xf]
        %v3118 = vsel %vm874, %v2803, %v3117
        %3119 = vst [vmem:[%s289] sm:$0xf] %v3118
        %3120 = vst.msk [vmem:[%s289 + $0x4] sm:$0xf] %vm280, %v2812
        %v3121 = vld [vmem:[%s289 + $0x8] sm:$0x1]
        %v3122 = vsel %vm292, %v2813, %v3121
        %3123 = vst [vmem:[%s289 + $0x8] sm:$0x1] %v3122
        %v3124 = vld [vmem:[%s289 + $0xc] sm:$0xf]
        %v3125 = vsel %vm874, %v2820, %v3124
        %3126 = vst [vmem:[%s289 + $0xc] sm:$0xf] %v3125
        %3127 = vst.msk [vmem:[%s289 + $0x10] sm:$0xf] %vm280, %v2829
        %v3128 = vld [vmem:[%s289 + $0x14] sm:$0x1]
        %v3129 = vsel %vm292, %v2830, %v3128
        %3130 = vst [vmem:[%s289 + $0x14] sm:$0x1] %v3129
        %v3131 = vld [vmem:[%s289 + $0x18] sm:$0xf]
        %v3132 = vsel %vm874, %v2837, %v3131
        %3133 = vst [vmem:[%s289 + $0x18] sm:$0xf] %v3132
        %3134 = vst.msk [vmem:[%s289 + $0x1c] sm:$0xf] %vm280, %v2846
        %v3135 = vld [vmem:[%s289 + $0x20] sm:$0x1]
        %v3136 = vsel %vm292, %v2847, %v3135
        %3137 = vst [vmem:[%s289 + $0x20] sm:$0x1] %v3136
        %v3138 = vld [vmem:[%s289 + $0x24] sm:$0xf]
        %v3139 = vsel %vm874, %v2854, %v3138
        %3140 = vst [vmem:[%s289 + $0x24] sm:$0xf] %v3139
        %3141 = vst.msk [vmem:[%s289 + $0x28] sm:$0xf] %vm280, %v2863
        %v3142 = vld [vmem:[%s289 + $0x2c] sm:$0x1]
        %v3143 = vsel %vm292, %v2864, %v3142
        %3144 = vst [vmem:[%s289 + $0x2c] sm:$0x1] %v3143
        %v3145 = vld [vmem:[%s289 + $0x30] sm:$0xf]
        %v3146 = vsel %vm874, %v2871, %v3145
        %3147 = vst [vmem:[%s289 + $0x30] sm:$0xf] %v3146
        %3148 = vst.msk [vmem:[%s289 + $0x34] sm:$0xf] %vm280, %v2880
        %v3149 = vld [vmem:[%s289 + $0x38] sm:$0x1]
        %v3150 = vsel %vm292, %v2881, %v3149
        %3151 = vst [vmem:[%s289 + $0x38] sm:$0x1] %v3150
        %v3152 = vld [vmem:[%s289 + $0x3c] sm:$0xf]
        %v3153 = vsel %vm874, %v2888, %v3152
        %3154 = vst [vmem:[%s289 + $0x3c] sm:$0xf] %v3153
        %3155 = vst.msk [vmem:[%s289 + $0x40] sm:$0xf] %vm280, %v2897
        %v3156 = vld [vmem:[%s289 + $0x44] sm:$0x1]
        %v3157 = vsel %vm292, %v2898, %v3156
        %3158 = vst [vmem:[%s289 + $0x44] sm:$0x1] %v3157
        %v3159 = vld [vmem:[%s289 + $0x48] sm:$0xf]
        %v3160 = vsel %vm874, %v2905, %v3159
        %3161 = vst [vmem:[%s289 + $0x48] sm:$0xf] %v3160
        %3162 = vst.msk [vmem:[%s289 + $0x4c] sm:$0xf] %vm280, %v2914
        %v3163 = vld [vmem:[%s289 + $0x50] sm:$0x1]
        %v3164 = vsel %vm292, %v2915, %v3163
        %3165 = vst [vmem:[%s289 + $0x50] sm:$0x1] %v3164
        %v3166 = vld [vmem:[%s289 + $0x54] sm:$0xf]
        %v3167 = vsel %vm874, %v2922, %v3166
        %3168 = vst [vmem:[%s289 + $0x54] sm:$0xf] %v3167
        %3169 = vst.msk [vmem:[%s289 + $0x58] sm:$0xf] %vm280, %v2931
        %v3170 = vld [vmem:[%s289 + $0x5c] sm:$0x1]
        %v3171 = vsel %vm292, %v2932, %v3170
        %3172 = vst [vmem:[%s289 + $0x5c] sm:$0x1] %v3171
        %v3173 = vld [vmem:[%s289 + $0x60] sm:$0xf]
        %v3174 = vsel %vm874, %v2939, %v3173
        %3175 = vst [vmem:[%s289 + $0x60] sm:$0xf] %v3174
        %3176 = vst.msk [vmem:[%s289 + $0x64] sm:$0xf] %vm280, %v2948
        %v3177 = vld [vmem:[%s289 + $0x68] sm:$0x1]
        %v3178 = vsel %vm292, %v2949, %v3177
        %3179 = vst [vmem:[%s289 + $0x68] sm:$0x1] %v3178
        %v3180 = vld [vmem:[%s289 + $0x6c] sm:$0xf]
        %v3181 = vsel %vm874, %v2956, %v3180
        %3182 = vst [vmem:[%s289 + $0x6c] sm:$0xf] %v3181
        %3183 = vst.msk [vmem:[%s289 + $0x70] sm:$0xf] %vm280, %v2965
        %v3184 = vld [vmem:[%s289 + $0x74] sm:$0x1]
        %v3185 = vsel %vm292, %v2966, %v3184
        %3186 = vst [vmem:[%s289 + $0x74] sm:$0x1] %v3185
        %v3187 = vld [vmem:[%s289 + $0x78] sm:$0xf]
        %v3188 = vsel %vm874, %v2973, %v3187
        %3189 = vst [vmem:[%s289 + $0x78] sm:$0xf] %v3188
        %3190 = vst.msk [vmem:[%s289 + $0x7c] sm:$0xf] %vm280, %v2982
        %v3191 = vld [vmem:[%s289 + $0x80] sm:$0x1]
        %v3192 = vsel %vm292, %v2983, %v3191
        %3193 = vst [vmem:[%s289 + $0x80] sm:$0x1] %v3192
        %v3194 = vld [vmem:[%s289 + $0x84] sm:$0xf]
        %v3195 = vsel %vm874, %v2990, %v3194
        %3196 = vst [vmem:[%s289 + $0x84] sm:$0xf] %v3195
        %3197 = vst.msk [vmem:[%s289 + $0x88] sm:$0xf] %vm280, %v2999
        %v3198 = vld [vmem:[%s289 + $0x8c] sm:$0x1]
        %v3199 = vsel %vm292, %v3000, %v3198
        %3200 = vst [vmem:[%s289 + $0x8c] sm:$0x1] %v3199
        %v3201 = vld [vmem:[%s289 + $0x90] sm:$0xf]
        %v3202 = vsel %vm874, %v3007, %v3201
        %3203 = vst [vmem:[%s289 + $0x90] sm:$0xf] %v3202
        %3204 = vst.msk [vmem:[%s289 + $0x94] sm:$0xf] %vm280, %v3016
        %v3205 = vld [vmem:[%s289 + $0x98] sm:$0x1]
        %v3206 = vsel %vm292, %v3017, %v3205
        %3207 = vst [vmem:[%s289 + $0x98] sm:$0x1] %v3206
        %v3208 = vld [vmem:[%s289 + $0x9c] sm:$0xf]
        %v3209 = vsel %vm874, %v3024, %v3208
        %3210 = vst [vmem:[%s289 + $0x9c] sm:$0xf] %v3209
        %3211 = vst.msk [vmem:[%s289 + $0xa0] sm:$0xf] %vm280, %v3033
        %v3212 = vld [vmem:[%s289 + $0xa4] sm:$0x1]
        %v3213 = vsel %vm292, %v3034, %v3212
        %3214 = vst [vmem:[%s289 + $0xa4] sm:$0x1] %v3213
        %v3215 = vld [vmem:[%s289 + $0xa8] sm:$0xf]
        %v3216 = vsel %vm874, %v3041, %v3215
        %3217 = vst [vmem:[%s289 + $0xa8] sm:$0xf] %v3216
        %3218 = vst.msk [vmem:[%s289 + $0xac] sm:$0xf] %vm280, %v3050
        %v3219 = vld [vmem:[%s289 + $0xb0] sm:$0x1]
        %v3220 = vsel %vm292, %v3051, %v3219
        %3221 = vst [vmem:[%s289 + $0xb0] sm:$0x1] %v3220
        %v3222 = vld [vmem:[%s289 + $0xb4] sm:$0xf]
        %v3223 = vsel %vm874, %v3058, %v3222
        %3224 = vst [vmem:[%s289 + $0xb4] sm:$0xf] %v3223
        %3225 = vst.msk [vmem:[%s289 + $0xb8] sm:$0xf] %vm280, %v3067
        %v3226 = vld [vmem:[%s289 + $0xbc] sm:$0x1]
        %v3227 = vsel %vm292, %v3068, %v3226
        %3228 = vst [vmem:[%s289 + $0xbc] sm:$0x1] %v3227
        %v3229 = vld [vmem:[#allocation2] sm:$0xf]
        %v3230 = vld [vmem:[#allocation2 + $0x4] sm:$0xf]
        %v3231 = vld [vmem:[#allocation2 + $0x8] sm:$0x1]
        %v3232 = vld [vmem:[#allocation2 + $0xc] sm:$0xf]
        %v3233 = vld [vmem:[#allocation2 + $0x10] sm:$0xf]
        %v3234 = vld [vmem:[#allocation2 + $0x14] sm:$0x1]
        %v3235 = vld [vmem:[#allocation2 + $0x18] sm:$0xf]
        %v3236 = vld [vmem:[#allocation2 + $0x1c] sm:$0xf]
        %v3237 = vld [vmem:[#allocation2 + $0x20] sm:$0x1]
        %v3238 = vld [vmem:[#allocation2 + $0x24] sm:$0xf]
        %v3239 = vld [vmem:[#allocation2 + $0x28] sm:$0xf]
        %v3240 = vld [vmem:[#allocation2 + $0x2c] sm:$0x1]
        %v3241 = vld [vmem:[#allocation2 + $0x30] sm:$0xf]
        %v3242 = vld [vmem:[#allocation2 + $0x34] sm:$0xf]
        %v3243 = vld [vmem:[#allocation2 + $0x38] sm:$0x1]
        %v3244 = vld [vmem:[#allocation2 + $0x3c] sm:$0xf]
        %v3245 = vld [vmem:[#allocation2 + $0x40] sm:$0xf]
        %v3246 = vld [vmem:[#allocation2 + $0x44] sm:$0x1]
        %v3247 = vld [vmem:[#allocation2 + $0x48] sm:$0xf]
        %v3248 = vld [vmem:[#allocation2 + $0x4c] sm:$0xf]
        %v3249 = vld [vmem:[#allocation2 + $0x50] sm:$0x1]
        %v3250 = vld [vmem:[#allocation2 + $0x54] sm:$0xf]
        %v3251 = vld [vmem:[#allocation2 + $0x58] sm:$0xf]
        %v3252 = vld [vmem:[#allocation2 + $0x5c] sm:$0x1]
        %v3253 = vld [vmem:[#allocation2 + $0x60] sm:$0xf]
        %v3254 = vld [vmem:[#allocation2 + $0x64] sm:$0xf]
        %v3255 = vld [vmem:[#allocation2 + $0x68] sm:$0x1]
        %v3256 = vld [vmem:[#allocation2 + $0x6c] sm:$0xf]
        %v3257 = vld [vmem:[#allocation2 + $0x70] sm:$0xf]
        %v3258 = vld [vmem:[#allocation2 + $0x74] sm:$0x1]
        %v3259 = vld [vmem:[#allocation2 + $0x78] sm:$0xf]
        %v3260 = vld [vmem:[#allocation2 + $0x7c] sm:$0xf]
        %v3261 = vld [vmem:[#allocation2 + $0x80] sm:$0x1]
        %v3262 = vld [vmem:[#allocation2 + $0x84] sm:$0xf]
        %v3263 = vld [vmem:[#allocation2 + $0x88] sm:$0xf]
        %v3264 = vld [vmem:[#allocation2 + $0x8c] sm:$0x1]
        %v3265 = vld [vmem:[#allocation2 + $0x90] sm:$0xf]
        %v3266 = vld [vmem:[#allocation2 + $0x94] sm:$0xf]
        %v3267 = vld [vmem:[#allocation2 + $0x98] sm:$0x1]
        %v3268 = vld [vmem:[#allocation2 + $0x9c] sm:$0xf]
        %v3269 = vld [vmem:[#allocation2 + $0xa0] sm:$0xf]
        %v3270 = vld [vmem:[#allocation2 + $0xa4] sm:$0x1]
        %v3271 = vld [vmem:[#allocation2 + $0xa8] sm:$0xf]
        %v3272 = vld [vmem:[#allocation2 + $0xac] sm:$0xf]
        %v3273 = vld [vmem:[#allocation2 + $0xb0] sm:$0x1]
        %v3274 = vld [vmem:[#allocation2 + $0xb4] sm:$0xf]
        %v3275 = vld [vmem:[#allocation2 + $0xb8] sm:$0xf]
        %v3276 = vld [vmem:[#allocation2 + $0xbc] sm:$0x1]
        %v3277 = vld [vmem:[#allocation2 + $0xc0] sm:$0xf]
        %v3278 = vld [vmem:[#allocation2 + $0xc4] sm:$0xf]
        %v3279 = vld [vmem:[#allocation2 + $0xc8] sm:$0x1]
        %v3280 = vld [vmem:[#allocation2 + $0xcc] sm:$0xf]
        %v3281 = vld [vmem:[#allocation2 + $0xd0] sm:$0xf]
        %v3282 = vld [vmem:[#allocation2 + $0xd4] sm:$0x1]
        %v3284 = vshrl.u32 %v3229, 16
        %v3286 = vrot.slane %v3284, 4
        %v3287 = vshll.u32 %v3229, 16
        %v3289 = vrot.slane %v3287, 5
        %v3290 = vor.u32 %v3286, %v3289
        %v3291 = vrot.slane %v3290, 4
        %v3293 = vshll.u32 %v3230, 16
        %v3295 = vrot.slane %v3293, 5
        %v3296 = vsel %vm1043, %v3291, %v3295
        %v3297 = vshrl.u32 %v3230, 16
        %v3299 = vrot.slane %v3297, 4
        %v3300 = vor.u32 %v3299, %v3295
        %v3301 = vrot.slane %v3300, 4
        %v3303 = vshll.u32 %v3231, 16
        %v3305 = vrot.slane %v3303, 5
        %v3306 = vsel %vm1043, %v3301, %v3305
        %v3308 = vshrl.u32 %v3232, 16
        %v3310 = vrot.slane %v3308, 4
        %v3311 = vshll.u32 %v3232, 16
        %v3313 = vrot.slane %v3311, 5
        %v3314 = vor.u32 %v3310, %v3313
        %v3315 = vrot.slane %v3314, 4
        %v3317 = vshll.u32 %v3233, 16
        %v3319 = vrot.slane %v3317, 5
        %v3320 = vsel %vm1043, %v3315, %v3319
        %v3321 = vshrl.u32 %v3233, 16
        %v3323 = vrot.slane %v3321, 4
        %v3324 = vor.u32 %v3323, %v3319
        %v3325 = vrot.slane %v3324, 4
        %v3327 = vshll.u32 %v3234, 16
        %v3329 = vrot.slane %v3327, 5
        %v3330 = vsel %vm1043, %v3325, %v3329
        %v3332 = vshrl.u32 %v3235, 16
        %v3334 = vrot.slane %v3332, 4
        %v3335 = vshll.u32 %v3235, 16
        %v3337 = vrot.slane %v3335, 5
        %v3338 = vor.u32 %v3334, %v3337
        %v3339 = vrot.slane %v3338, 4
        %v3341 = vshll.u32 %v3236, 16
        %v3343 = vrot.slane %v3341, 5
        %v3344 = vsel %vm1043, %v3339, %v3343
        %v3345 = vshrl.u32 %v3236, 16
        %v3347 = vrot.slane %v3345, 4
        %v3348 = vor.u32 %v3347, %v3343
        %v3349 = vrot.slane %v3348, 4
        %v3351 = vshll.u32 %v3237, 16
        %v3353 = vrot.slane %v3351, 5
        %v3354 = vsel %vm1043, %v3349, %v3353
        %v3356 = vshrl.u32 %v3238, 16
        %v3358 = vrot.slane %v3356, 4
        %v3359 = vshll.u32 %v3238, 16
        %v3361 = vrot.slane %v3359, 5
        %v3362 = vor.u32 %v3358, %v3361
        %v3363 = vrot.slane %v3362, 4
        %v3365 = vshll.u32 %v3239, 16
        %v3367 = vrot.slane %v3365, 5
        %v3368 = vsel %vm1043, %v3363, %v3367
        %v3369 = vshrl.u32 %v3239, 16
        %v3371 = vrot.slane %v3369, 4
        %v3372 = vor.u32 %v3371, %v3367
        %v3373 = vrot.slane %v3372, 4
        %v3375 = vshll.u32 %v3240, 16
        %v3377 = vrot.slane %v3375, 5
        %v3378 = vsel %vm1043, %v3373, %v3377
        %v3380 = vshrl.u32 %v3241, 16
        %v3382 = vrot.slane %v3380, 4
        %v3383 = vshll.u32 %v3241, 16
        %v3385 = vrot.slane %v3383, 5
        %v3386 = vor.u32 %v3382, %v3385
        %v3387 = vrot.slane %v3386, 4
        %v3389 = vshll.u32 %v3242, 16
        %v3391 = vrot.slane %v3389, 5
        %v3392 = vsel %vm1043, %v3387, %v3391
        %v3393 = vshrl.u32 %v3242, 16
        %v3395 = vrot.slane %v3393, 4
        %v3396 = vor.u32 %v3395, %v3391
        %v3397 = vrot.slane %v3396, 4
        %v3399 = vshll.u32 %v3243, 16
        %v3401 = vrot.slane %v3399, 5
        %v3402 = vsel %vm1043, %v3397, %v3401
        %v3404 = vshrl.u32 %v3244, 16
        %v3406 = vrot.slane %v3404, 4
        %v3407 = vshll.u32 %v3244, 16
        %v3409 = vrot.slane %v3407, 5
        %v3410 = vor.u32 %v3406, %v3409
        %v3411 = vrot.slane %v3410, 4
        %v3413 = vshll.u32 %v3245, 16
        %v3415 = vrot.slane %v3413, 5
        %v3416 = vsel %vm1043, %v3411, %v3415
        %v3417 = vshrl.u32 %v3245, 16
        %v3419 = vrot.slane %v3417, 4
        %v3420 = vor.u32 %v3419, %v3415
        %v3421 = vrot.slane %v3420, 4
        %v3423 = vshll.u32 %v3246, 16
        %v3425 = vrot.slane %v3423, 5
        %v3426 = vsel %vm1043, %v3421, %v3425
        %v3428 = vshrl.u32 %v3247, 16
        %v3430 = vrot.slane %v3428, 4
        %v3431 = vshll.u32 %v3247, 16
        %v3433 = vrot.slane %v3431, 5
        %v3434 = vor.u32 %v3430, %v3433
        %v3435 = vrot.slane %v3434, 4
        %v3437 = vshll.u32 %v3248, 16
        %v3439 = vrot.slane %v3437, 5
        %v3440 = vsel %vm1043, %v3435, %v3439
        %v3441 = vshrl.u32 %v3248, 16
        %v3443 = vrot.slane %v3441, 4
        %v3444 = vor.u32 %v3443, %v3439
        %v3445 = vrot.slane %v3444, 4
        %v3447 = vshll.u32 %v3249, 16
        %v3449 = vrot.slane %v3447, 5
        %v3450 = vsel %vm1043, %v3445, %v3449
        %v3452 = vshrl.u32 %v3250, 16
        %v3454 = vrot.slane %v3452, 4
        %v3455 = vshll.u32 %v3250, 16
        %v3457 = vrot.slane %v3455, 5
        %v3458 = vor.u32 %v3454, %v3457
        %v3459 = vrot.slane %v3458, 4
        %v3461 = vshll.u32 %v3251, 16
        %v3463 = vrot.slane %v3461, 5
        %v3464 = vsel %vm1043, %v3459, %v3463
        %v3465 = vshrl.u32 %v3251, 16
        %v3467 = vrot.slane %v3465, 4
        %v3468 = vor.u32 %v3467, %v3463
        %v3469 = vrot.slane %v3468, 4
        %v3471 = vshll.u32 %v3252, 16
        %v3473 = vrot.slane %v3471, 5
        %v3474 = vsel %vm1043, %v3469, %v3473
        %v3476 = vshrl.u32 %v3253, 16
        %v3478 = vrot.slane %v3476, 4
        %v3479 = vshll.u32 %v3253, 16
        %v3481 = vrot.slane %v3479, 5
        %v3482 = vor.u32 %v3478, %v3481
        %v3483 = vrot.slane %v3482, 4
        %v3485 = vshll.u32 %v3254, 16
        %v3487 = vrot.slane %v3485, 5
        %v3488 = vsel %vm1043, %v3483, %v3487
        %v3489 = vshrl.u32 %v3254, 16
        %v3491 = vrot.slane %v3489, 4
        %v3492 = vor.u32 %v3491, %v3487
        %v3493 = vrot.slane %v3492, 4
        %v3495 = vshll.u32 %v3255, 16
        %v3497 = vrot.slane %v3495, 5
        %v3498 = vsel %vm1043, %v3493, %v3497
        %v3500 = vshrl.u32 %v3256, 16
        %v3502 = vrot.slane %v3500, 4
        %v3503 = vshll.u32 %v3256, 16
        %v3505 = vrot.slane %v3503, 5
        %v3506 = vor.u32 %v3502, %v3505
        %v3507 = vrot.slane %v3506, 4
        %v3509 = vshll.u32 %v3257, 16
        %v3511 = vrot.slane %v3509, 5
        %v3512 = vsel %vm1043, %v3507, %v3511
        %v3513 = vshrl.u32 %v3257, 16
        %v3515 = vrot.slane %v3513, 4
        %v3516 = vor.u32 %v3515, %v3511
        %v3517 = vrot.slane %v3516, 4
        %v3519 = vshll.u32 %v3258, 16
        %v3521 = vrot.slane %v3519, 5
        %v3522 = vsel %vm1043, %v3517, %v3521
        %v3524 = vshrl.u32 %v3259, 16
        %v3526 = vrot.slane %v3524, 4
        %v3527 = vshll.u32 %v3259, 16
        %v3529 = vrot.slane %v3527, 5
        %v3530 = vor.u32 %v3526, %v3529
        %v3531 = vrot.slane %v3530, 4
        %v3533 = vshll.u32 %v3260, 16
        %v3535 = vrot.slane %v3533, 5
        %v3536 = vsel %vm1043, %v3531, %v3535
        %v3537 = vshrl.u32 %v3260, 16
        %v3539 = vrot.slane %v3537, 4
        %v3540 = vor.u32 %v3539, %v3535
        %v3541 = vrot.slane %v3540, 4
        %v3543 = vshll.u32 %v3261, 16
        %v3545 = vrot.slane %v3543, 5
        %v3546 = vsel %vm1043, %v3541, %v3545
        %v3548 = vshrl.u32 %v3262, 16
        %v3550 = vrot.slane %v3548, 4
        %v3551 = vshll.u32 %v3262, 16
        %v3553 = vrot.slane %v3551, 5
        %v3554 = vor.u32 %v3550, %v3553
        %v3555 = vrot.slane %v3554, 4
        %v3557 = vshll.u32 %v3263, 16
        %v3559 = vrot.slane %v3557, 5
        %v3560 = vsel %vm1043, %v3555, %v3559
        %v3561 = vshrl.u32 %v3263, 16
        %v3563 = vrot.slane %v3561, 4
        %v3564 = vor.u32 %v3563, %v3559
        %v3565 = vrot.slane %v3564, 4
        %v3567 = vshll.u32 %v3264, 16
        %v3569 = vrot.slane %v3567, 5
        %v3570 = vsel %vm1043, %v3565, %v3569
        %v3572 = vshrl.u32 %v3265, 16
        %v3574 = vrot.slane %v3572, 4
        %v3575 = vshll.u32 %v3265, 16
        %v3577 = vrot.slane %v3575, 5
        %v3578 = vor.u32 %v3574, %v3577
        %v3579 = vrot.slane %v3578, 4
        %v3581 = vshll.u32 %v3266, 16
        %v3583 = vrot.slane %v3581, 5
        %v3584 = vsel %vm1043, %v3579, %v3583
        %v3585 = vshrl.u32 %v3266, 16
        %v3587 = vrot.slane %v3585, 4
        %v3588 = vor.u32 %v3587, %v3583
        %v3589 = vrot.slane %v3588, 4
        %v3591 = vshll.u32 %v3267, 16
        %v3593 = vrot.slane %v3591, 5
        %v3594 = vsel %vm1043, %v3589, %v3593
        %v3596 = vshrl.u32 %v3268, 16
        %v3598 = vrot.slane %v3596, 4
        %v3599 = vshll.u32 %v3268, 16
        %v3601 = vrot.slane %v3599, 5
        %v3602 = vor.u32 %v3598, %v3601
        %v3603 = vrot.slane %v3602, 4
        %v3605 = vshll.u32 %v3269, 16
        %v3607 = vrot.slane %v3605, 5
        %v3608 = vsel %vm1043, %v3603, %v3607
        %v3609 = vshrl.u32 %v3269, 16
        %v3611 = vrot.slane %v3609, 4
        %v3612 = vor.u32 %v3611, %v3607
        %v3613 = vrot.slane %v3612, 4
        %v3615 = vshll.u32 %v3270, 16
        %v3617 = vrot.slane %v3615, 5
        %v3618 = vsel %vm1043, %v3613, %v3617
        %v3620 = vshrl.u32 %v3271, 16
        %v3622 = vrot.slane %v3620, 4
        %v3623 = vshll.u32 %v3271, 16
        %v3625 = vrot.slane %v3623, 5
        %v3626 = vor.u32 %v3622, %v3625
        %v3627 = vrot.slane %v3626, 4
        %v3629 = vshll.u32 %v3272, 16
        %v3631 = vrot.slane %v3629, 5
        %v3632 = vsel %vm1043, %v3627, %v3631
        %v3633 = vshrl.u32 %v3272, 16
        %v3635 = vrot.slane %v3633, 4
        %v3636 = vor.u32 %v3635, %v3631
        %v3637 = vrot.slane %v3636, 4
        %v3639 = vshll.u32 %v3273, 16
        %v3641 = vrot.slane %v3639, 5
        %v3642 = vsel %vm1043, %v3637, %v3641
        %v3644 = vshrl.u32 %v3274, 16
        %v3646 = vrot.slane %v3644, 4
        %v3647 = vshll.u32 %v3274, 16
        %v3649 = vrot.slane %v3647, 5
        %v3650 = vor.u32 %v3646, %v3649
        %v3651 = vrot.slane %v3650, 4
        %v3653 = vshll.u32 %v3275, 16
        %v3655 = vrot.slane %v3653, 5
        %v3656 = vsel %vm1043, %v3651, %v3655
        %v3657 = vshrl.u32 %v3275, 16
        %v3659 = vrot.slane %v3657, 4
        %v3660 = vor.u32 %v3659, %v3655
        %v3661 = vrot.slane %v3660, 4
        %v3663 = vshll.u32 %v3276, 16
        %v3665 = vrot.slane %v3663, 5
        %v3666 = vsel %vm1043, %v3661, %v3665
        %v3715 = vrot.slane %v3229, 5
        %v3716 = vrot.slane %v3715, 4
        %v3717 = vrot.slane %v3230, 5
        %v3718 = vsel %vm1478, %v3716, %v3717
        %v3719 = vrot.slane %v3717, 4
        %v3720 = vrot.slane %v3231, 5
        %v3721 = vsel %vm1478, %v3719, %v3720
        %v3722 = vrot.slane %v3232, 5
        %v3723 = vrot.slane %v3722, 4
        %v3724 = vrot.slane %v3233, 5
        %v3725 = vsel %vm1478, %v3723, %v3724
        %v3726 = vrot.slane %v3724, 4
        %v3727 = vrot.slane %v3234, 5
        %v3728 = vsel %vm1478, %v3726, %v3727
        %v3729 = vrot.slane %v3235, 5
        %v3730 = vrot.slane %v3729, 4
        %v3731 = vrot.slane %v3236, 5
        %v3732 = vsel %vm1478, %v3730, %v3731
        %v3733 = vrot.slane %v3731, 4
        %v3734 = vrot.slane %v3237, 5
        %v3735 = vsel %vm1478, %v3733, %v3734
        %v3736 = vrot.slane %v3238, 5
        %v3737 = vrot.slane %v3736, 4
        %v3738 = vrot.slane %v3239, 5
        %v3739 = vsel %vm1478, %v3737, %v3738
        %v3740 = vrot.slane %v3738, 4
        %v3741 = vrot.slane %v3240, 5
        %v3742 = vsel %vm1478, %v3740, %v3741
        %v3743 = vrot.slane %v3241, 5
        %v3744 = vrot.slane %v3743, 4
        %v3745 = vrot.slane %v3242, 5
        %v3746 = vsel %vm1478, %v3744, %v3745
        %v3747 = vrot.slane %v3745, 4
        %v3748 = vrot.slane %v3243, 5
        %v3749 = vsel %vm1478, %v3747, %v3748
        %v3750 = vrot.slane %v3244, 5
        %v3751 = vrot.slane %v3750, 4
        %v3752 = vrot.slane %v3245, 5
        %v3753 = vsel %vm1478, %v3751, %v3752
        %v3754 = vrot.slane %v3752, 4
        %v3755 = vrot.slane %v3246, 5
        %v3756 = vsel %vm1478, %v3754, %v3755
        %v3757 = vrot.slane %v3247, 5
        %v3758 = vrot.slane %v3757, 4
        %v3759 = vrot.slane %v3248, 5
        %v3760 = vsel %vm1478, %v3758, %v3759
        %v3761 = vrot.slane %v3759, 4
        %v3762 = vrot.slane %v3249, 5
        %v3763 = vsel %vm1478, %v3761, %v3762
        %v3764 = vrot.slane %v3250, 5
        %v3765 = vrot.slane %v3764, 4
        %v3766 = vrot.slane %v3251, 5
        %v3767 = vsel %vm1478, %v3765, %v3766
        %v3768 = vrot.slane %v3766, 4
        %v3769 = vrot.slane %v3252, 5
        %v3770 = vsel %vm1478, %v3768, %v3769
        %v3771 = vrot.slane %v3253, 5
        %v3772 = vrot.slane %v3771, 4
        %v3773 = vrot.slane %v3254, 5
        %v3774 = vsel %vm1478, %v3772, %v3773
        %v3775 = vrot.slane %v3773, 4
        %v3776 = vrot.slane %v3255, 5
        %v3777 = vsel %vm1478, %v3775, %v3776
        %v3778 = vrot.slane %v3256, 5
        %v3779 = vrot.slane %v3778, 4
        %v3780 = vrot.slane %v3257, 5
        %v3781 = vsel %vm1478, %v3779, %v3780
        %v3782 = vrot.slane %v3780, 4
        %v3783 = vrot.slane %v3258, 5
        %v3784 = vsel %vm1478, %v3782, %v3783
        %v3785 = vrot.slane %v3259, 5
        %v3786 = vrot.slane %v3785, 4
        %v3787 = vrot.slane %v3260, 5
        %v3788 = vsel %vm1478, %v3786, %v3787
        %v3789 = vrot.slane %v3787, 4
        %v3790 = vrot.slane %v3261, 5
        %v3791 = vsel %vm1478, %v3789, %v3790
        %v3792 = vrot.slane %v3262, 5
        %v3793 = vrot.slane %v3792, 4
        %v3794 = vrot.slane %v3263, 5
        %v3795 = vsel %vm1478, %v3793, %v3794
        %v3796 = vrot.slane %v3794, 4
        %v3797 = vrot.slane %v3264, 5
        %v3798 = vsel %vm1478, %v3796, %v3797
        %v3799 = vrot.slane %v3265, 5
        %v3800 = vrot.slane %v3799, 4
        %v3801 = vrot.slane %v3266, 5
        %v3802 = vsel %vm1478, %v3800, %v3801
        %v3803 = vrot.slane %v3801, 4
        %v3804 = vrot.slane %v3267, 5
        %v3805 = vsel %vm1478, %v3803, %v3804
        %v3806 = vrot.slane %v3268, 5
        %v3807 = vrot.slane %v3806, 4
        %v3808 = vrot.slane %v3269, 5
        %v3809 = vsel %vm1478, %v3807, %v3808
        %v3810 = vrot.slane %v3808, 4
        %v3811 = vrot.slane %v3270, 5
        %v3812 = vsel %vm1478, %v3810, %v3811
        %v3813 = vrot.slane %v3271, 5
        %v3814 = vrot.slane %v3813, 4
        %v3815 = vrot.slane %v3272, 5
        %v3816 = vsel %vm1478, %v3814, %v3815
        %v3817 = vrot.slane %v3815, 4
        %v3818 = vrot.slane %v3273, 5
        %v3819 = vsel %vm1478, %v3817, %v3818
        %v3820 = vrot.slane %v3274, 5
        %v3821 = vrot.slane %v3820, 4
        %v3822 = vrot.slane %v3275, 5
        %v3823 = vsel %vm1478, %v3821, %v3822
        %v3824 = vrot.slane %v3822, 4
        %v3825 = vrot.slane %v3276, 5
        %v3826 = vsel %vm1478, %v3824, %v3825
        %v3828 = vshrl.u32 %v3277, 16
        %v3830 = vrot.slane %v3828, 4
        %v3831 = vshll.u32 %v3277, 16
        %v3833 = vrot.slane %v3831, 5
        %v3834 = vor.u32 %v3830, %v3833
        %v3835 = vrot.slane %v3834, 4
        %v3837 = vshll.u32 %v3278, 16
        %v3839 = vrot.slane %v3837, 5
        %v3840 = vsel %vm1043, %v3835, %v3839
        %v3841 = vshrl.u32 %v3278, 16
        %v3843 = vrot.slane %v3841, 4
        %v3844 = vor.u32 %v3843, %v3839
        %v3845 = vrot.slane %v3844, 4
        %v3847 = vshll.u32 %v3279, 16
        %v3849 = vrot.slane %v3847, 5
        %v3850 = vsel %vm1043, %v3845, %v3849
        %v3854 = vrot.slane %v3277, 5
        %v3855 = vrot.slane %v3854, 4
        %v3856 = vrot.slane %v3278, 5
        %v3857 = vsel %vm1478, %v3855, %v3856
        %v3858 = vrot.slane %v3856, 4
        %v3859 = vrot.slane %v3279, 5
        %v3860 = vsel %vm1478, %v3858, %v3859
        %v3862 = vshrl.u32 %v3280, 16
        %v3864 = vrot.slane %v3862, 4
        %v3865 = vshll.u32 %v3280, 16
        %v3867 = vrot.slane %v3865, 5
        %v3868 = vor.u32 %v3864, %v3867
        %v3869 = vrot.slane %v3868, 4
        %v3871 = vshll.u32 %v3281, 16
        %v3873 = vrot.slane %v3871, 5
        %v3874 = vsel %vm1043, %v3869, %v3873
        %v3875 = vshrl.u32 %v3281, 16
        %v3877 = vrot.slane %v3875, 4
        %v3878 = vor.u32 %v3877, %v3873
        %v3879 = vrot.slane %v3878, 4
        %v3881 = vshll.u32 %v3282, 16
        %v3883 = vrot.slane %v3881, 5
        %v3884 = vsel %vm1043, %v3879, %v3883
        %v3888 = vrot.slane %v3280, 5
        %v3889 = vrot.slane %v3888, 4
        %v3890 = vrot.slane %v3281, 5
        %v3891 = vsel %vm1478, %v3889, %v3890
        %v3892 = vrot.slane %v3890, 4
        %v3893 = vrot.slane %v3282, 5
        %v3894 = vsel %vm1478, %v3892, %v3893
        %v3895 = vunpack.c.l.b16 %v3229
        %v3896 = vunpack.c.l.b16 %v3230
        %v3897 = vunpack.c.l.b16 %v3232
        %v3898 = vunpack.c.l.b16 %v3233
        %v3899 = vunpack.c.l.b16 %v3235
        %v3900 = vunpack.c.l.b16 %v3236
        %v3901 = vunpack.c.l.b16 %v3238
        %v3902 = vunpack.c.l.b16 %v3239
        %v3903 = vunpack.c.l.b16 %v3241
        %v3904 = vunpack.c.l.b16 %v3242
        %v3905 = vunpack.c.l.b16 %v3244
        %v3906 = vunpack.c.l.b16 %v3245
        %v3907 = vunpack.c.l.b16 %v3247
        %v3908 = vunpack.c.l.b16 %v3248
        %v3909 = vunpack.c.l.b16 %v3250
        %v3910 = vunpack.c.l.b16 %v3251
        %v3911 = vunpack.c.l.b16 %v3253
        %v3912 = vunpack.c.l.b16 %v3254
        %v3913 = vunpack.c.l.b16 %v3256
        %v3914 = vunpack.c.l.b16 %v3257
        %v3915 = vunpack.c.l.b16 %v3259
        %v3916 = vunpack.c.l.b16 %v3260
        %v3917 = vunpack.c.l.b16 %v3262
        %v3918 = vunpack.c.l.b16 %v3263
        %v3919 = vunpack.c.l.b16 %v3265
        %v3920 = vunpack.c.l.b16 %v3266
        %v3921 = vunpack.c.l.b16 %v3268
        %v3922 = vunpack.c.l.b16 %v3269
        %v3923 = vunpack.c.l.b16 %v3271
        %v3924 = vunpack.c.l.b16 %v3272
        %v3925 = vunpack.c.l.b16 %v3274
        %v3926 = vunpack.c.l.b16 %v3275
        %v3927 = vpack.c.b16 %v3896, %v3895
        %v3928 = vpack.c.b16 %v3898, %v3897
        %v3929 = vpack.c.b16 %v3900, %v3899
        %v3930 = vpack.c.b16 %v3902, %v3901
        %v3931 = vpack.c.b16 %v3904, %v3903
        %v3932 = vpack.c.b16 %v3906, %v3905
        %v3933 = vpack.c.b16 %v3908, %v3907
        %v3934 = vpack.c.b16 %v3910, %v3909
        %v3935 = vpack.c.b16 %v3912, %v3911
        %v3936 = vpack.c.b16 %v3914, %v3913
        %v3937 = vpack.c.b16 %v3916, %v3915
        %v3938 = vpack.c.b16 %v3918, %v3917
        %v3939 = vpack.c.b16 %v3920, %v3919
        %v3940 = vpack.c.b16 %v3922, %v3921
        %v3941 = vpack.c.b16 %v3924, %v3923
        %v3942 = vpack.c.b16 %v3926, %v3925
        %v3943 = vunpack.c.l.b16 %v3296
        %v3944 = vunpack.c.l.b16 %v3306
        %v3945 = vunpack.c.l.b16 %v3320
        %v3946 = vunpack.c.l.b16 %v3330
        %v3947 = vunpack.c.l.b16 %v3344
        %v3948 = vunpack.c.l.b16 %v3354
        %v3949 = vunpack.c.l.b16 %v3368
        %v3950 = vunpack.c.l.b16 %v3378
        %v3951 = vunpack.c.l.b16 %v3392
        %v3952 = vunpack.c.l.b16 %v3402
        %v3953 = vunpack.c.l.b16 %v3416
        %v3954 = vunpack.c.l.b16 %v3426
        %v3955 = vunpack.c.l.b16 %v3440
        %v3956 = vunpack.c.l.b16 %v3450
        %v3957 = vunpack.c.l.b16 %v3464
        %v3958 = vunpack.c.l.b16 %v3474
        %v3959 = vunpack.c.l.b16 %v3488
        %v3960 = vunpack.c.l.b16 %v3498
        %v3961 = vunpack.c.l.b16 %v3512
        %v3962 = vunpack.c.l.b16 %v3522
        %v3963 = vunpack.c.l.b16 %v3536
        %v3964 = vunpack.c.l.b16 %v3546
        %v3965 = vunpack.c.l.b16 %v3560
        %v3966 = vunpack.c.l.b16 %v3570
        %v3967 = vunpack.c.l.b16 %v3584
        %v3968 = vunpack.c.l.b16 %v3594
        %v3969 = vunpack.c.l.b16 %v3608
        %v3970 = vunpack.c.l.b16 %v3618
        %v3971 = vunpack.c.l.b16 %v3632
        %v3972 = vunpack.c.l.b16 %v3642
        %v3973 = vunpack.c.l.b16 %v3656
        %v3974 = vunpack.c.l.b16 %v3666
        %v3975 = vpack.c.b16 %v3944, %v3943
        %v3976 = vpack.c.b16 %v3946, %v3945
        %v3977 = vpack.c.b16 %v3948, %v3947
        %v3978 = vpack.c.b16 %v3950, %v3949
        %v3979 = vpack.c.b16 %v3952, %v3951
        %v3980 = vpack.c.b16 %v3954, %v3953
        %v3981 = vpack.c.b16 %v3956, %v3955
        %v3982 = vpack.c.b16 %v3958, %v3957
        %v3983 = vpack.c.b16 %v3960, %v3959
        %v3984 = vpack.c.b16 %v3962, %v3961
        %v3985 = vpack.c.b16 %v3964, %v3963
        %v3986 = vpack.c.b16 %v3966, %v3965
        %v3987 = vpack.c.b16 %v3968, %v3967
        %v3988 = vpack.c.b16 %v3970, %v3969
        %v3989 = vpack.c.b16 %v3972, %v3971
        %v3990 = vpack.c.b16 %v3974, %v3973
        %3991 = vrot.lane.b32.xlu0 %v3975, 8
        %v3992 = vpop.permute.xlu0 %3991
        %3993 = vrot.lane.b32.xlu0 %v3976, 8
        %v3994 = vpop.permute.xlu0 %3993
        %3995 = vrot.lane.b32.xlu0 %v3977, 8
        %v3996 = vpop.permute.xlu0 %3995
        %3997 = vrot.lane.b32.xlu0 %v3978, 8
        %v3998 = vpop.permute.xlu0 %3997
        %3999 = vrot.lane.b32.xlu0 %v3979, 8
        %v4000 = vpop.permute.xlu0 %3999
        %4001 = vrot.lane.b32.xlu0 %v3980, 8
        %v4002 = vpop.permute.xlu0 %4001
        %4003 = vrot.lane.b32.xlu0 %v3981, 8
        %v4004 = vpop.permute.xlu0 %4003
        %4005 = vrot.lane.b32.xlu0 %v3982, 8
        %v4006 = vpop.permute.xlu0 %4005
        %4007 = vrot.lane.b32.xlu0 %v3983, 8
        %v4008 = vpop.permute.xlu0 %4007
        %4009 = vrot.lane.b32.xlu0 %v3984, 8
        %v4010 = vpop.permute.xlu0 %4009
        %4011 = vrot.lane.b32.xlu0 %v3985, 8
        %v4012 = vpop.permute.xlu0 %4011
        %4013 = vrot.lane.b32.xlu0 %v3986, 8
        %v4014 = vpop.permute.xlu0 %4013
        %4015 = vrot.lane.b32.xlu0 %v3987, 8
        %v4016 = vpop.permute.xlu0 %4015
        %4017 = vrot.lane.b32.xlu0 %v3988, 8
        %v4018 = vpop.permute.xlu0 %4017
        %4019 = vrot.lane.b32.xlu0 %v3989, 8
        %v4020 = vpop.permute.xlu0 %4019
        %4021 = vrot.lane.b32.xlu0 %v3990, 8
        %v4022 = vpop.permute.xlu0 %4021
        %v4023 = vunpack.c.l.b16 %v3718
        %v4024 = vunpack.c.l.b16 %v3721
        %v4025 = vunpack.c.l.b16 %v3725
        %v4026 = vunpack.c.l.b16 %v3728
        %v4027 = vunpack.c.l.b16 %v3732
        %v4028 = vunpack.c.l.b16 %v3735
        %v4029 = vunpack.c.l.b16 %v3739
        %v4030 = vunpack.c.l.b16 %v3742
        %v4031 = vunpack.c.l.b16 %v3746
        %v4032 = vunpack.c.l.b16 %v3749
        %v4033 = vunpack.c.l.b16 %v3753
        %v4034 = vunpack.c.l.b16 %v3756
        %v4035 = vunpack.c.l.b16 %v3760
        %v4036 = vunpack.c.l.b16 %v3763
        %v4037 = vunpack.c.l.b16 %v3767
        %v4038 = vunpack.c.l.b16 %v3770
        %v4039 = vunpack.c.l.b16 %v3774
        %v4040 = vunpack.c.l.b16 %v3777
        %v4041 = vunpack.c.l.b16 %v3781
        %v4042 = vunpack.c.l.b16 %v3784
        %v4043 = vunpack.c.l.b16 %v3788
        %v4044 = vunpack.c.l.b16 %v3791
        %v4045 = vunpack.c.l.b16 %v3795
        %v4046 = vunpack.c.l.b16 %v3798
        %v4047 = vunpack.c.l.b16 %v3802
        %v4048 = vunpack.c.l.b16 %v3805
        %v4049 = vunpack.c.l.b16 %v3809
        %v4050 = vunpack.c.l.b16 %v3812
        %v4051 = vunpack.c.l.b16 %v3816
        %v4052 = vunpack.c.l.b16 %v3819
        %v4053 = vunpack.c.l.b16 %v3823
        %v4054 = vunpack.c.l.b16 %v3826
        %v4055 = vpack.c.b16 %v4024, %v4023
        %v4056 = vpack.c.b16 %v4026, %v4025
        %v4057 = vpack.c.b16 %v4028, %v4027
        %v4058 = vpack.c.b16 %v4030, %v4029
        %v4059 = vpack.c.b16 %v4032, %v4031
        %v4060 = vpack.c.b16 %v4034, %v4033
        %v4061 = vpack.c.b16 %v4036, %v4035
        %v4062 = vpack.c.b16 %v4038, %v4037
        %v4063 = vpack.c.b16 %v4040, %v4039
        %v4064 = vpack.c.b16 %v4042, %v4041
        %v4065 = vpack.c.b16 %v4044, %v4043
        %v4066 = vpack.c.b16 %v4046, %v4045
        %v4067 = vpack.c.b16 %v4048, %v4047
        %v4068 = vpack.c.b16 %v4050, %v4049
        %v4069 = vpack.c.b16 %v4052, %v4051
        %v4070 = vpack.c.b16 %v4054, %v4053
        %4071 = vrot.lane.b32.xlu0 %v4055, 16
        %v4072 = vpop.permute.xlu0 %4071
        %4073 = vrot.lane.b32.xlu0 %v4056, 16
        %v4074 = vpop.permute.xlu0 %4073
        %4075 = vrot.lane.b32.xlu0 %v4057, 16
        %v4076 = vpop.permute.xlu0 %4075
        %4077 = vrot.lane.b32.xlu0 %v4058, 16
        %v4078 = vpop.permute.xlu0 %4077
        %4079 = vrot.lane.b32.xlu0 %v4059, 16
        %v4080 = vpop.permute.xlu0 %4079
        %4081 = vrot.lane.b32.xlu0 %v4060, 16
        %v4082 = vpop.permute.xlu0 %4081
        %4083 = vrot.lane.b32.xlu0 %v4061, 16
        %v4084 = vpop.permute.xlu0 %4083
        %4085 = vrot.lane.b32.xlu0 %v4062, 16
        %v4086 = vpop.permute.xlu0 %4085
        %4087 = vrot.lane.b32.xlu0 %v4063, 16
        %v4088 = vpop.permute.xlu0 %4087
        %4089 = vrot.lane.b32.xlu0 %v4064, 16
        %v4090 = vpop.permute.xlu0 %4089
        %4091 = vrot.lane.b32.xlu0 %v4065, 16
        %v4092 = vpop.permute.xlu0 %4091
        %4093 = vrot.lane.b32.xlu0 %v4066, 16
        %v4094 = vpop.permute.xlu0 %4093
        %4095 = vrot.lane.b32.xlu0 %v4067, 16
        %v4096 = vpop.permute.xlu0 %4095
        %4097 = vrot.lane.b32.xlu0 %v4068, 16
        %v4098 = vpop.permute.xlu0 %4097
        %4099 = vrot.lane.b32.xlu0 %v4069, 16
        %v4100 = vpop.permute.xlu0 %4099
        %4101 = vrot.lane.b32.xlu0 %v4070, 16
        %v4102 = vpop.permute.xlu0 %4101
        %v4103 = vunpack.c.l.b16 %v3277
        %v4104 = vunpack.c.l.b16 %v3278
        %v4105 = vpack.c.b16 %v4104, %v4103
        %4106 = vrot.lane.b32.xlu0 %v3928, 24
        %v4107 = vpop.permute.xlu0 %4106
        %4108 = vrot.lane.b32.xlu0 %v3929, 24
        %v4109 = vpop.permute.xlu0 %4108
        %4110 = vrot.lane.b32.xlu0 %v3930, 24
        %v4111 = vpop.permute.xlu0 %4110
        %4112 = vrot.lane.b32.xlu0 %v3931, 24
        %v4113 = vpop.permute.xlu0 %4112
        %4114 = vrot.lane.b32.xlu0 %v3932, 24
        %v4115 = vpop.permute.xlu0 %4114
        %4116 = vrot.lane.b32.xlu0 %v3933, 24
        %v4117 = vpop.permute.xlu0 %4116
        %4118 = vrot.lane.b32.xlu0 %v3934, 24
        %v4119 = vpop.permute.xlu0 %4118
        %4120 = vrot.lane.b32.xlu0 %v3935, 24
        %v4121 = vpop.permute.xlu0 %4120
        %4122 = vrot.lane.b32.xlu0 %v3936, 24
        %v4123 = vpop.permute.xlu0 %4122
        %4124 = vrot.lane.b32.xlu0 %v3937, 24
        %v4125 = vpop.permute.xlu0 %4124
        %4126 = vrot.lane.b32.xlu0 %v3938, 24
        %v4127 = vpop.permute.xlu0 %4126
        %4128 = vrot.lane.b32.xlu0 %v3939, 24
        %v4129 = vpop.permute.xlu0 %4128
        %4130 = vrot.lane.b32.xlu0 %v3940, 24
        %v4131 = vpop.permute.xlu0 %4130
        %4132 = vrot.lane.b32.xlu0 %v3941, 24
        %v4133 = vpop.permute.xlu0 %4132
        %4134 = vrot.lane.b32.xlu0 %v3942, 24
        %v4135 = vpop.permute.xlu0 %4134
        %4136 = vrot.lane.b32.xlu0 %v4105, 24
        %v4137 = vpop.permute.xlu0 %4136
        %v4138 = vunpack.c.l.b16 %v3840
        %v4139 = vunpack.c.l.b16 %v3850
        %v4140 = vpack.c.b16 %v4139, %v4138
        %4141 = vrot.lane.b32.xlu0 %v3976, 32
        %v4142 = vpop.permute.xlu0 %4141
        %4143 = vrot.lane.b32.xlu0 %v3977, 32
        %v4144 = vpop.permute.xlu0 %4143
        %4145 = vrot.lane.b32.xlu0 %v3978, 32
        %v4146 = vpop.permute.xlu0 %4145
        %4147 = vrot.lane.b32.xlu0 %v3979, 32
        %v4148 = vpop.permute.xlu0 %4147
        %4149 = vrot.lane.b32.xlu0 %v3980, 32
        %v4150 = vpop.permute.xlu0 %4149
        %4151 = vrot.lane.b32.xlu0 %v3981, 32
        %v4152 = vpop.permute.xlu0 %4151
        %4153 = vrot.lane.b32.xlu0 %v3982, 32
        %v4154 = vpop.permute.xlu0 %4153
        %4155 = vrot.lane.b32.xlu0 %v3983, 32
        %v4156 = vpop.permute.xlu0 %4155
        %4157 = vrot.lane.b32.xlu0 %v3984, 32
        %v4158 = vpop.permute.xlu0 %4157
        %4159 = vrot.lane.b32.xlu0 %v3985, 32
        %v4160 = vpop.permute.xlu0 %4159
        %4161 = vrot.lane.b32.xlu0 %v3986, 32
        %v4162 = vpop.permute.xlu0 %4161
        %4163 = vrot.lane.b32.xlu0 %v3987, 32
        %v4164 = vpop.permute.xlu0 %4163
        %4165 = vrot.lane.b32.xlu0 %v3988, 32
        %v4166 = vpop.permute.xlu0 %4165
        %4167 = vrot.lane.b32.xlu0 %v3989, 32
        %v4168 = vpop.permute.xlu0 %4167
        %4169 = vrot.lane.b32.xlu0 %v3990, 32
        %v4170 = vpop.permute.xlu0 %4169
        %4171 = vrot.lane.b32.xlu0 %v4140, 32
        %v4172 = vpop.permute.xlu0 %4171
        %v4173 = vunpack.c.l.b16 %v3857
        %v4174 = vunpack.c.l.b16 %v3860
        %v4175 = vpack.c.b16 %v4174, %v4173
        %4176 = vrot.lane.b32.xlu0 %v4056, 40
        %v4177 = vpop.permute.xlu0 %4176
        %4178 = vrot.lane.b32.xlu0 %v4057, 40
        %v4179 = vpop.permute.xlu0 %4178
        %4180 = vrot.lane.b32.xlu0 %v4058, 40
        %v4181 = vpop.permute.xlu0 %4180
        %4182 = vrot.lane.b32.xlu0 %v4059, 40
        %v4183 = vpop.permute.xlu0 %4182
        %4184 = vrot.lane.b32.xlu0 %v4060, 40
        %v4185 = vpop.permute.xlu0 %4184
        %4186 = vrot.lane.b32.xlu0 %v4061, 40
        %v4187 = vpop.permute.xlu0 %4186
        %4188 = vrot.lane.b32.xlu0 %v4062, 40
        %v4189 = vpop.permute.xlu0 %4188
        %4190 = vrot.lane.b32.xlu0 %v4063, 40
        %v4191 = vpop.permute.xlu0 %4190
        %4192 = vrot.lane.b32.xlu0 %v4064, 40
        %v4193 = vpop.permute.xlu0 %4192
        %4194 = vrot.lane.b32.xlu0 %v4065, 40
        %v4195 = vpop.permute.xlu0 %4194
        %4196 = vrot.lane.b32.xlu0 %v4066, 40
        %v4197 = vpop.permute.xlu0 %4196
        %4198 = vrot.lane.b32.xlu0 %v4067, 40
        %v4199 = vpop.permute.xlu0 %4198
        %4200 = vrot.lane.b32.xlu0 %v4068, 40
        %v4201 = vpop.permute.xlu0 %4200
        %4202 = vrot.lane.b32.xlu0 %v4069, 40
        %v4203 = vpop.permute.xlu0 %4202
        %4204 = vrot.lane.b32.xlu0 %v4070, 40
        %v4205 = vpop.permute.xlu0 %4204
        %4206 = vrot.lane.b32.xlu0 %v4175, 40
        %v4207 = vpop.permute.xlu0 %4206
        %v4208 = vunpack.c.l.b16 %v3280
        %v4209 = vunpack.c.l.b16 %v3281
        %v4210 = vpack.c.b16 %v4209, %v4208
        %4211 = vrot.lane.b32.xlu0 %v3929, 48
        %v4212 = vpop.permute.xlu0 %4211
        %4213 = vrot.lane.b32.xlu0 %v3930, 48
        %v4214 = vpop.permute.xlu0 %4213
        %4215 = vrot.lane.b32.xlu0 %v3931, 48
        %v4216 = vpop.permute.xlu0 %4215
        %4217 = vrot.lane.b32.xlu0 %v3932, 48
        %v4218 = vpop.permute.xlu0 %4217
        %4219 = vrot.lane.b32.xlu0 %v3933, 48
        %v4220 = vpop.permute.xlu0 %4219
        %4221 = vrot.lane.b32.xlu0 %v3934, 48
        %v4222 = vpop.permute.xlu0 %4221
        %4223 = vrot.lane.b32.xlu0 %v3935, 48
        %v4224 = vpop.permute.xlu0 %4223
        %4225 = vrot.lane.b32.xlu0 %v3936, 48
        %v4226 = vpop.permute.xlu0 %4225
        %4227 = vrot.lane.b32.xlu0 %v3937, 48
        %v4228 = vpop.permute.xlu0 %4227
        %4229 = vrot.lane.b32.xlu0 %v3938, 48
        %v4230 = vpop.permute.xlu0 %4229
        %4231 = vrot.lane.b32.xlu0 %v3939, 48
        %v4232 = vpop.permute.xlu0 %4231
        %4233 = vrot.lane.b32.xlu0 %v3940, 48
        %v4234 = vpop.permute.xlu0 %4233
        %4235 = vrot.lane.b32.xlu0 %v3941, 48
        %v4236 = vpop.permute.xlu0 %4235
        %4237 = vrot.lane.b32.xlu0 %v3942, 48
        %v4238 = vpop.permute.xlu0 %4237
        %4239 = vrot.lane.b32.xlu0 %v4105, 48
        %v4240 = vpop.permute.xlu0 %4239
        %4241 = vrot.lane.b32.xlu0 %v4210, 48
        %v4242 = vpop.permute.xlu0 %4241
        %v4243 = vunpack.c.l.b16 %v3874
        %v4244 = vunpack.c.l.b16 %v3884
        %v4245 = vpack.c.b16 %v4244, %v4243
        %4246 = vrot.lane.b32.xlu0 %v3977, 56
        %v4247 = vpop.permute.xlu0 %4246
        %4248 = vrot.lane.b32.xlu0 %v3978, 56
        %v4249 = vpop.permute.xlu0 %4248
        %4250 = vrot.lane.b32.xlu0 %v3979, 56
        %v4251 = vpop.permute.xlu0 %4250
        %4252 = vrot.lane.b32.xlu0 %v3980, 56
        %v4253 = vpop.permute.xlu0 %4252
        %4254 = vrot.lane.b32.xlu0 %v3981, 56
        %v4255 = vpop.permute.xlu0 %4254
        %4256 = vrot.lane.b32.xlu0 %v3982, 56
        %v4257 = vpop.permute.xlu0 %4256
        %4258 = vrot.lane.b32.xlu0 %v3983, 56
        %v4259 = vpop.permute.xlu0 %4258
        %4260 = vrot.lane.b32.xlu0 %v3984, 56
        %v4261 = vpop.permute.xlu0 %4260
        %4262 = vrot.lane.b32.xlu0 %v3985, 56
        %v4263 = vpop.permute.xlu0 %4262
        %4264 = vrot.lane.b32.xlu0 %v3986, 56
        %v4265 = vpop.permute.xlu0 %4264
        %4266 = vrot.lane.b32.xlu0 %v3987, 56
        %v4267 = vpop.permute.xlu0 %4266
        %4268 = vrot.lane.b32.xlu0 %v3988, 56
        %v4269 = vpop.permute.xlu0 %4268
        %4270 = vrot.lane.b32.xlu0 %v3989, 56
        %v4271 = vpop.permute.xlu0 %4270
        %4272 = vrot.lane.b32.xlu0 %v3990, 56
        %v4273 = vpop.permute.xlu0 %4272
        %4274 = vrot.lane.b32.xlu0 %v4140, 56
        %v4275 = vpop.permute.xlu0 %4274
        %4276 = vrot.lane.b32.xlu0 %v4245, 56
        %v4277 = vpop.permute.xlu0 %4276
        %v4278 = vunpack.c.l.b16 %v3891
        %v4279 = vunpack.c.l.b16 %v3894
        %v4280 = vpack.c.b16 %v4279, %v4278
        %4281 = vrot.lane.b32.xlu0 %v4057, 64
        %v4282 = vpop.permute.xlu0 %4281
        %4283 = vrot.lane.b32.xlu0 %v4058, 64
        %v4284 = vpop.permute.xlu0 %4283
        %4285 = vrot.lane.b32.xlu0 %v4059, 64
        %v4286 = vpop.permute.xlu0 %4285
        %4287 = vrot.lane.b32.xlu0 %v4060, 64
        %v4288 = vpop.permute.xlu0 %4287
        %4289 = vrot.lane.b32.xlu0 %v4061, 64
        %v4290 = vpop.permute.xlu0 %4289
        %4291 = vrot.lane.b32.xlu0 %v4062, 64
        %v4292 = vpop.permute.xlu0 %4291
        %4293 = vrot.lane.b32.xlu0 %v4063, 64
        %v4294 = vpop.permute.xlu0 %4293
        %4295 = vrot.lane.b32.xlu0 %v4064, 64
        %v4296 = vpop.permute.xlu0 %4295
        %4297 = vrot.lane.b32.xlu0 %v4065, 64
        %v4298 = vpop.permute.xlu0 %4297
        %4299 = vrot.lane.b32.xlu0 %v4066, 64
        %v4300 = vpop.permute.xlu0 %4299
        %4301 = vrot.lane.b32.xlu0 %v4067, 64
        %v4302 = vpop.permute.xlu0 %4301
        %4303 = vrot.lane.b32.xlu0 %v4068, 64
        %v4304 = vpop.permute.xlu0 %4303
        %4305 = vrot.lane.b32.xlu0 %v4069, 64
        %v4306 = vpop.permute.xlu0 %4305
        %4307 = vrot.lane.b32.xlu0 %v4070, 64
        %v4308 = vpop.permute.xlu0 %4307
        %4309 = vrot.lane.b32.xlu0 %v4175, 64
        %v4310 = vpop.permute.xlu0 %4309
        %4311 = vrot.lane.b32.xlu0 %v4280, 64
        %v4312 = vpop.permute.xlu0 %4311
        %v4315 = vsel %vm2077, %v3927, %v3992
        %v4318 = vsel %vm2077, %v3928, %v3994
        %v4321 = vsel %vm2077, %v3929, %v3996
        %v4324 = vsel %vm2077, %v3930, %v3998
        %v4327 = vsel %vm2077, %v3931, %v4000
        %v4330 = vsel %vm2077, %v3932, %v4002
        %v4333 = vsel %vm2077, %v3933, %v4004
        %v4336 = vsel %vm2077, %v3934, %v4006
        %v4339 = vsel %vm2077, %v3935, %v4008
        %v4342 = vsel %vm2077, %v3936, %v4010
        %v4345 = vsel %vm2077, %v3937, %v4012
        %v4348 = vsel %vm2077, %v3938, %v4014
        %v4351 = vsel %vm2077, %v3939, %v4016
        %v4354 = vsel %vm2077, %v3940, %v4018
        %v4357 = vsel %vm2077, %v3941, %v4020
        %v4360 = vsel %vm2077, %v3942, %v4022
        %v4362 = vsel %vm2126, %v4315, %v4072
        %v4364 = vsel %vm2126, %v4318, %v4074
        %v4366 = vsel %vm2126, %v4321, %v4076
        %v4368 = vsel %vm2126, %v4324, %v4078
        %v4370 = vsel %vm2126, %v4327, %v4080
        %v4372 = vsel %vm2126, %v4330, %v4082
        %v4374 = vsel %vm2126, %v4333, %v4084
        %v4376 = vsel %vm2126, %v4336, %v4086
        %v4378 = vsel %vm2126, %v4339, %v4088
        %v4380 = vsel %vm2126, %v4342, %v4090
        %v4382 = vsel %vm2126, %v4345, %v4092
        %v4384 = vsel %vm2126, %v4348, %v4094
        %v4386 = vsel %vm2126, %v4351, %v4096
        %v4388 = vsel %vm2126, %v4354, %v4098
        %v4390 = vsel %vm2126, %v4357, %v4100
        %v4392 = vsel %vm2126, %v4360, %v4102
        %v4394 = vsel %vm2159, %v4362, %v4107
        %v4396 = vsel %vm2159, %v4364, %v4109
        %v4398 = vsel %vm2159, %v4366, %v4111
        %v4400 = vsel %vm2159, %v4368, %v4113
        %v4402 = vsel %vm2159, %v4370, %v4115
        %v4404 = vsel %vm2159, %v4372, %v4117
        %v4406 = vsel %vm2159, %v4374, %v4119
        %v4408 = vsel %vm2159, %v4376, %v4121
        %v4410 = vsel %vm2159, %v4378, %v4123
        %v4412 = vsel %vm2159, %v4380, %v4125
        %v4414 = vsel %vm2159, %v4382, %v4127
        %v4416 = vsel %vm2159, %v4384, %v4129
        %v4418 = vsel %vm2159, %v4386, %v4131
        %v4420 = vsel %vm2159, %v4388, %v4133
        %v4422 = vsel %vm2159, %v4390, %v4135
        %v4424 = vsel %vm2159, %v4392, %v4137
        %v4426 = vsel %vm2192, %v4394, %v4142
        %v4428 = vsel %vm2192, %v4396, %v4144
        %v4430 = vsel %vm2192, %v4398, %v4146
        %v4432 = vsel %vm2192, %v4400, %v4148
        %v4434 = vsel %vm2192, %v4402, %v4150
        %v4436 = vsel %vm2192, %v4404, %v4152
        %v4438 = vsel %vm2192, %v4406, %v4154
        %v4440 = vsel %vm2192, %v4408, %v4156
        %v4442 = vsel %vm2192, %v4410, %v4158
        %v4444 = vsel %vm2192, %v4412, %v4160
        %v4446 = vsel %vm2192, %v4414, %v4162
        %v4448 = vsel %vm2192, %v4416, %v4164
        %v4450 = vsel %vm2192, %v4418, %v4166
        %v4452 = vsel %vm2192, %v4420, %v4168
        %v4454 = vsel %vm2192, %v4422, %v4170
        %v4456 = vsel %vm2192, %v4424, %v4172
        %v4458 = vsel %vm2225, %v4426, %v4177
        %v4460 = vsel %vm2225, %v4428, %v4179
        %v4462 = vsel %vm2225, %v4430, %v4181
        %v4464 = vsel %vm2225, %v4432, %v4183
        %v4466 = vsel %vm2225, %v4434, %v4185
        %v4468 = vsel %vm2225, %v4436, %v4187
        %v4470 = vsel %vm2225, %v4438, %v4189
        %v4472 = vsel %vm2225, %v4440, %v4191
        %v4474 = vsel %vm2225, %v4442, %v4193
        %v4476 = vsel %vm2225, %v4444, %v4195
        %v4478 = vsel %vm2225, %v4446, %v4197
        %v4480 = vsel %vm2225, %v4448, %v4199
        %v4482 = vsel %vm2225, %v4450, %v4201
        %v4484 = vsel %vm2225, %v4452, %v4203
        %v4486 = vsel %vm2225, %v4454, %v4205
        %v4488 = vsel %vm2225, %v4456, %v4207
        %v4490 = vsel %vm2258, %v4458, %v4212
        %v4492 = vsel %vm2258, %v4460, %v4214
        %v4494 = vsel %vm2258, %v4462, %v4216
        %v4496 = vsel %vm2258, %v4464, %v4218
        %v4498 = vsel %vm2258, %v4466, %v4220
        %v4500 = vsel %vm2258, %v4468, %v4222
        %v4502 = vsel %vm2258, %v4470, %v4224
        %v4504 = vsel %vm2258, %v4472, %v4226
        %v4506 = vsel %vm2258, %v4474, %v4228
        %v4508 = vsel %vm2258, %v4476, %v4230
        %v4510 = vsel %vm2258, %v4478, %v4232
        %v4512 = vsel %vm2258, %v4480, %v4234
        %v4514 = vsel %vm2258, %v4482, %v4236
        %v4516 = vsel %vm2258, %v4484, %v4238
        %v4518 = vsel %vm2258, %v4486, %v4240
        %v4520 = vsel %vm2258, %v4488, %v4242
        %v4522 = vsel %vm2291, %v4490, %v4247
        %v4524 = vsel %vm2291, %v4492, %v4249
        %v4526 = vsel %vm2291, %v4494, %v4251
        %v4528 = vsel %vm2291, %v4496, %v4253
        %v4530 = vsel %vm2291, %v4498, %v4255
        %v4532 = vsel %vm2291, %v4500, %v4257
        %v4534 = vsel %vm2291, %v4502, %v4259
        %v4536 = vsel %vm2291, %v4504, %v4261
        %v4538 = vsel %vm2291, %v4506, %v4263
        %v4540 = vsel %vm2291, %v4508, %v4265
        %v4542 = vsel %vm2291, %v4510, %v4267
        %v4544 = vsel %vm2291, %v4512, %v4269
        %v4546 = vsel %vm2291, %v4514, %v4271
        %v4548 = vsel %vm2291, %v4516, %v4273
        %v4550 = vsel %vm2291, %v4518, %v4275
        %v4552 = vsel %vm2291, %v4520, %v4277
        %v4554 = vsel %vm2324, %v4522, %v4282
        %v4556 = vsel %vm2324, %v4524, %v4284
        %v4558 = vsel %vm2324, %v4526, %v4286
        %v4560 = vsel %vm2324, %v4528, %v4288
        %v4562 = vsel %vm2324, %v4530, %v4290
        %v4564 = vsel %vm2324, %v4532, %v4292
        %v4566 = vsel %vm2324, %v4534, %v4294
        %v4568 = vsel %vm2324, %v4536, %v4296
        %v4570 = vsel %vm2324, %v4538, %v4298
        %v4572 = vsel %vm2324, %v4540, %v4300
        %v4574 = vsel %vm2324, %v4542, %v4302
        %v4576 = vsel %vm2324, %v4544, %v4304
        %v4578 = vsel %vm2324, %v4546, %v4306
        %v4580 = vsel %vm2324, %v4548, %v4308
        %v4582 = vsel %vm2324, %v4550, %v4310
        %v4584 = vsel %vm2324, %v4552, %v4312
        %v4585 = vld [vmem:[%s4] sm:$0xf]
        %v4586 = vld [vmem:[%s4 + $0x4] sm:$0xf]
        %v4587 = vld [vmem:[%s4 + $0x8] sm:$0xf]
        %v4588 = vld [vmem:[%s4 + $0xc] sm:$0xf]
        %v4589 = vld [vmem:[%s4 + $0x10] sm:$0xf]
        %v4590 = vld [vmem:[%s4 + $0x14] sm:$0xf]
        %v4591 = vld [vmem:[%s4 + $0x18] sm:$0xf]
        %v4592 = vld [vmem:[%s4 + $0x1c] sm:$0xf]
        %v4593 = vld [vmem:[%s4 + $0x20] sm:$0xf]
        %v4603 = vunpack.c.l.b16 %v4585
        %v4604 = vunpack.c.l.b16 %v4586
        %v4605 = vunpack.c.l.b16 %v4587
        %v4606 = vunpack.c.l.b16 %v4588
        %v4607 = vunpack.c.l.b16 %v4589
        %v4608 = vunpack.c.l.b16 %v4590
        %v4609 = vunpack.c.l.b16 %v4591
        %v4610 = vunpack.c.l.b16 %v4592
        %v4611 = vunpack.c.l.b16 %v4593
        %v4612 = vpack.c.b16 %v4604, %v4603
        %v4613 = vpack.c.b16 %v4606, %v4605
        %v4614 = vpack.c.b16 %v4608, %v4607
        %v4615 = vpack.c.b16 %v4610, %v4609
        %v4616 = vpack.c.b16 %v4611, %v4611
        %v4621 = vsel %vm2393, %v4554, 0
        %v4623 = vsel %vm2393, %v4556, 0
        %v4625 = vsel %vm2393, %v4558, 0
        %v4627 = vsel %vm2393, %v4560, 0
        %v4629 = vsel %vm2393, %v4562, 0
        %v4631 = vsel %vm2393, %v4564, 0
        %v4633 = vsel %vm2393, %v4566, 0
        %v4635 = vsel %vm2393, %v4568, 0
        %v4637 = vsel %vm2393, %v4570, 0
        %v4639 = vsel %vm2393, %v4572, 0
        %v4641 = vsel %vm2393, %v4574, 0
        %v4643 = vsel %vm2393, %v4576, 0
        %v4645 = vsel %vm2393, %v4578, 0
        %v4647 = vsel %vm2393, %v4580, 0
        %v4649 = vsel %vm2393, %v4582, 0
        %v4651 = vsel %vm2393, %v4584, 0
        %v4654 = vsel %vm2426, %v4616, 0
        %4656 = vmatprep.subr.bf16.mxu0 0
        %4657 = vmatpush1.bf16.msra.mxu0 0
        %4658 = vmatprep.subr.bf16.mxu0 0
        %4659 = vmatpush1.bf16.msra.mxu0 0
        %4660 = vmatprep.subr.bf16.mxu0 0
        %4661 = vmatpush1.bf16.msra.mxu0 0
        %4662 = vmatprep.subr.bf16.mxu0 0
        %4663 = vmatpush1.bf16.msra.mxu0 %v4654
        %4664 = vmatprep.subr.bf16.mxu0 0
        %4665 = vmatpush1.bf16.msra.mxu0 %v4615
        %4666 = vmatprep.subr.bf16.mxu0 0
        %4667 = vmatpush1.bf16.msra.mxu0 %v4614
        %4668 = vmatprep.subr.bf16.mxu0 0
        %4669 = vmatpush1.bf16.msra.mxu0 %v4613
        %4670 = vmatprep.subr.bf16.mxu0 0
        %4671 = vmatpush1.bf16.msra.mxu0 %v4612
        %4672 = vmatprep.subr.bf16.mxu0 0
        %4673 = vmatpush2.bf16.msra.mxu0 0
        %4674 = vmatprep.subr.bf16.mxu0 0
        %4675 = vmatpush2.bf16.msra.mxu0 0
        %4676 = vmatprep.subr.bf16.mxu0 0
        %4677 = vmatpush2.bf16.msra.mxu0 0
        %4678 = vmatprep.subr.bf16.mxu0 0
        %4679 = vmatpush2.bf16.msra.mxu0 0
        %4680 = vmatprep.subr.bf16.mxu0 0
        %4681 = vmatpush2.bf16.msra.mxu0 0
        %4682 = vmatprep.subr.bf16.mxu0 0
        %4683 = vmatpush2.bf16.msra.mxu0 0
        %4684 = vmatprep.subr.bf16.mxu0 0
        %4685 = vmatpush2.bf16.msra.mxu0 0
        %4686 = vmatprep.subr.bf16.mxu0 0
        %4687 = vmatpush2.bf16.msra.mxu0 0
        %4688 = vmatprep.mubr.bf16.mxu0 0
        %4689 = vmatmul.mubr.bf16.gmra.mxu0 %v4621
        %v4690 = vpop.f32.mrf.mxu0
        %v4691 = vadd.f32 0.0, %v4690
        %v4692 = vpop.f32.mrf.mxu0
        %v4693 = vpop.f32.mrf.mxu0
        %v4694 = vadd.f32 0.0, %v4693
        %v4695 = vpop.f32.mrf.mxu0
        %4696 = vmatprep.mubr.bf16.mxu0 0
        %4697 = vmatmul.mubr.bf16.gmra.mxu0 %v4623
        %v4698 = vpop.f32.mrf.mxu0
        %v4699 = vadd.f32 0.0, %v4698
        %v4700 = vpop.f32.mrf.mxu0
        %v4701 = vpop.f32.mrf.mxu0
        %v4702 = vadd.f32 0.0, %v4701
        %v4703 = vpop.f32.mrf.mxu0
        %4704 = vmatprep.mubr.bf16.mxu0 0
        %4705 = vmatmul.mubr.bf16.gmra.mxu0 %v4625
        %v4706 = vpop.f32.mrf.mxu0
        %v4707 = vadd.f32 0.0, %v4706
        %v4708 = vpop.f32.mrf.mxu0
        %v4709 = vpop.f32.mrf.mxu0
        %v4710 = vadd.f32 0.0, %v4709
        %v4711 = vpop.f32.mrf.mxu0
        %4712 = vmatprep.mubr.bf16.mxu0 0
        %4713 = vmatmul.mubr.bf16.gmra.mxu0 %v4627
        %v4714 = vpop.f32.mrf.mxu0
        %v4715 = vadd.f32 0.0, %v4714
        %v4716 = vpop.f32.mrf.mxu0
        %v4717 = vpop.f32.mrf.mxu0
        %v4718 = vadd.f32 0.0, %v4717
        %v4719 = vpop.f32.mrf.mxu0
        %4720 = vmatprep.mubr.bf16.mxu0 0
        %4721 = vmatmul.mubr.bf16.gmra.mxu0 %v4629
        %v4722 = vpop.f32.mrf.mxu0
        %v4723 = vadd.f32 0.0, %v4722
        %v4724 = vpop.f32.mrf.mxu0
        %v4725 = vpop.f32.mrf.mxu0
        %v4726 = vadd.f32 0.0, %v4725
        %v4727 = vpop.f32.mrf.mxu0
        %4728 = vmatprep.mubr.bf16.mxu0 0
        %4729 = vmatmul.mubr.bf16.gmra.mxu0 %v4631
        %v4730 = vpop.f32.mrf.mxu0
        %v4731 = vadd.f32 0.0, %v4730
        %v4732 = vpop.f32.mrf.mxu0
        %v4733 = vpop.f32.mrf.mxu0
        %v4734 = vadd.f32 0.0, %v4733
        %v4735 = vpop.f32.mrf.mxu0
        %4736 = vmatprep.mubr.bf16.mxu0 0
        %4737 = vmatmul.mubr.bf16.gmra.mxu0 %v4633
        %v4738 = vpop.f32.mrf.mxu0
        %v4739 = vadd.f32 0.0, %v4738
        %v4740 = vpop.f32.mrf.mxu0
        %v4741 = vpop.f32.mrf.mxu0
        %v4742 = vadd.f32 0.0, %v4741
        %v4743 = vpop.f32.mrf.mxu0
        %4744 = vmatprep.mubr.bf16.mxu0 0
        %4745 = vmatmul.mubr.bf16.gmra.mxu0 %v4635
        %v4746 = vpop.f32.mrf.mxu0
        %v4747 = vadd.f32 0.0, %v4746
        %v4748 = vpop.f32.mrf.mxu0
        %v4749 = vpop.f32.mrf.mxu0
        %v4750 = vadd.f32 0.0, %v4749
        %v4751 = vpop.f32.mrf.mxu0
        %4752 = vmatprep.mubr.bf16.mxu0 0
        %4753 = vmatmul.mubr.bf16.gmra.mxu0 %v4637
        %v4754 = vpop.f32.mrf.mxu0
        %v4755 = vadd.f32 0.0, %v4754
        %v4756 = vpop.f32.mrf.mxu0
        %v4757 = vpop.f32.mrf.mxu0
        %v4758 = vadd.f32 0.0, %v4757
        %v4759 = vpop.f32.mrf.mxu0
        %4760 = vmatprep.mubr.bf16.mxu0 0
        %4761 = vmatmul.mubr.bf16.gmra.mxu0 %v4639
        %v4762 = vpop.f32.mrf.mxu0
        %v4763 = vadd.f32 0.0, %v4762
        %v4764 = vpop.f32.mrf.mxu0
        %v4765 = vpop.f32.mrf.mxu0
        %v4766 = vadd.f32 0.0, %v4765
        %v4767 = vpop.f32.mrf.mxu0
        %4768 = vmatprep.mubr.bf16.mxu0 0
        %4769 = vmatmul.mubr.bf16.gmra.mxu0 %v4641
        %v4770 = vpop.f32.mrf.mxu0
        %v4771 = vadd.f32 0.0, %v4770
        %v4772 = vpop.f32.mrf.mxu0
        %v4773 = vpop.f32.mrf.mxu0
        %v4774 = vadd.f32 0.0, %v4773
        %v4775 = vpop.f32.mrf.mxu0
        %4776 = vmatprep.mubr.bf16.mxu0 0
        %4777 = vmatmul.mubr.bf16.gmra.mxu0 %v4643
        %v4778 = vpop.f32.mrf.mxu0
        %v4779 = vadd.f32 0.0, %v4778
        %v4780 = vpop.f32.mrf.mxu0
        %v4781 = vpop.f32.mrf.mxu0
        %v4782 = vadd.f32 0.0, %v4781
        %v4783 = vpop.f32.mrf.mxu0
        %4784 = vmatprep.mubr.bf16.mxu0 0
        %4785 = vmatmul.mubr.bf16.gmra.mxu0 %v4645
        %v4786 = vpop.f32.mrf.mxu0
        %v4787 = vadd.f32 0.0, %v4786
        %v4788 = vpop.f32.mrf.mxu0
        %v4789 = vpop.f32.mrf.mxu0
        %v4790 = vadd.f32 0.0, %v4789
        %v4791 = vpop.f32.mrf.mxu0
        %4792 = vmatprep.mubr.bf16.mxu0 0
        %4793 = vmatmul.mubr.bf16.gmra.mxu0 %v4647
        %v4794 = vpop.f32.mrf.mxu0
        %v4795 = vadd.f32 0.0, %v4794
        %v4796 = vpop.f32.mrf.mxu0
        %v4797 = vpop.f32.mrf.mxu0
        %v4798 = vadd.f32 0.0, %v4797
        %v4799 = vpop.f32.mrf.mxu0
        %4800 = vmatprep.mubr.bf16.mxu0 0
        %4801 = vmatmul.mubr.bf16.gmra.mxu0 %v4649
        %v4802 = vpop.f32.mrf.mxu0
        %v4803 = vadd.f32 0.0, %v4802
        %v4804 = vpop.f32.mrf.mxu0
        %v4805 = vpop.f32.mrf.mxu0
        %v4806 = vadd.f32 0.0, %v4805
        %v4807 = vpop.f32.mrf.mxu0
        %4808 = vmatprep.mubr.bf16.mxu0 0
        %4809 = vmatmul.mubr.bf16.gmra.mxu0 %v4651
        %v4810 = vpop.f32.mrf.mxu0
        %v4811 = vadd.f32 0.0, %v4810
        %v4812 = vpop.f32.mrf.mxu0
        %v4813 = vpop.f32.mrf.mxu0
        %v4814 = vadd.f32 0.0, %v4813
        %v4815 = vpop.f32.mrf.mxu0
        %4816 = vdwg.mxu0
        %v4817 = vld [vmem:[%s5] sm:$0x1]
        %v4819 = vlaneseq
        %v4820 = vshrl.u32 %v4819, 7
        %v4821 = vsub.s32 0, %v4820
        %v4822 = vrot.slane %v4817, %v4821
        %v4824 = vmul.f32 %v4691, %v4822
        %v4825 = vmul.f32 %v4694, %v4822
        %v4826 = vmul.f32 %v4699, %v4822
        %v4827 = vmul.f32 %v4702, %v4822
        %v4828 = vmul.f32 %v4707, %v4822
        %v4829 = vmul.f32 %v4710, %v4822
        %v4830 = vmul.f32 %v4715, %v4822
        %v4831 = vmul.f32 %v4718, %v4822
        %v4832 = vmul.f32 %v4723, %v4822
        %v4833 = vmul.f32 %v4726, %v4822
        %v4834 = vmul.f32 %v4731, %v4822
        %v4835 = vmul.f32 %v4734, %v4822
        %v4836 = vmul.f32 %v4739, %v4822
        %v4837 = vmul.f32 %v4742, %v4822
        %v4838 = vmul.f32 %v4747, %v4822
        %v4839 = vmul.f32 %v4750, %v4822
        %v4840 = vmul.f32 %v4755, %v4822
        %v4841 = vmul.f32 %v4758, %v4822
        %v4842 = vmul.f32 %v4763, %v4822
        %v4843 = vmul.f32 %v4766, %v4822
        %v4844 = vmul.f32 %v4771, %v4822
        %v4845 = vmul.f32 %v4774, %v4822
        %v4846 = vmul.f32 %v4779, %v4822
        %v4847 = vmul.f32 %v4782, %v4822
        %v4848 = vmul.f32 %v4787, %v4822
        %v4849 = vmul.f32 %v4790, %v4822
        %v4850 = vmul.f32 %v4795, %v4822
        %v4851 = vmul.f32 %v4798, %v4822
        %v4852 = vmul.f32 %v4803, %v4822
        %v4853 = vmul.f32 %v4806, %v4822
        %v4854 = vmul.f32 %v4811, %v4822
        %v4855 = vmul.f32 %v4814, %v4822
        %v4856 = vld [vmem:[%s6] sm:$0x1]
        %v4858 = vlaneseq
        %v4859 = vshrl.u32 %v4858, 7
        %v4860 = vsub.s32 0, %v4859
        %v4861 = vrot.slane %v4856, %v4860
        %v4863 = vadd.f32 %v4824, %v4861
        %v4864 = vadd.f32 %v4825, %v4861
        %v4865 = vadd.f32 %v4826, %v4861
        %v4866 = vadd.f32 %v4827, %v4861
        %v4867 = vadd.f32 %v4828, %v4861
        %v4868 = vadd.f32 %v4829, %v4861
        %v4869 = vadd.f32 %v4830, %v4861
        %v4870 = vadd.f32 %v4831, %v4861
        %v4871 = vadd.f32 %v4832, %v4861
        %v4872 = vadd.f32 %v4833, %v4861
        %v4873 = vadd.f32 %v4834, %v4861
        %v4874 = vadd.f32 %v4835, %v4861
        %v4875 = vadd.f32 %v4836, %v4861
        %v4876 = vadd.f32 %v4837, %v4861
        %v4877 = vadd.f32 %v4838, %v4861
        %v4878 = vadd.f32 %v4839, %v4861
        %v4879 = vadd.f32 %v4840, %v4861
        %v4880 = vadd.f32 %v4841, %v4861
        %v4881 = vadd.f32 %v4842, %v4861
        %v4882 = vadd.f32 %v4843, %v4861
        %v4883 = vadd.f32 %v4844, %v4861
        %v4884 = vadd.f32 %v4845, %v4861
        %v4885 = vadd.f32 %v4846, %v4861
        %v4886 = vadd.f32 %v4847, %v4861
        %v4887 = vadd.f32 %v4848, %v4861
        %v4888 = vadd.f32 %v4849, %v4861
        %v4889 = vadd.f32 %v4850, %v4861
        %v4890 = vadd.f32 %v4851, %v4861
        %v4891 = vadd.f32 %v4852, %v4861
        %v4892 = vadd.f32 %v4853, %v4861
        %v4893 = vadd.f32 %v4854, %v4861
        %v4894 = vadd.f32 %v4855, %v4861
        %4895 = vxpose.xlu0.b32.start [1/16] %v4863, 128
        %4896 = vxpose.xlu0.b32.cont [2/16] %v4864, 128
        %4897 = vxpose.xlu0.b32.cont [3/16] %v4865, 128
        %4898 = vxpose.xlu0.b32.cont [4/16] %v4866, 128
        %4899 = vxpose.xlu0.b32.cont [5/16] %v4867, 128
        %4900 = vxpose.xlu0.b32.cont [6/16] %v4868, 128
        %4901 = vxpose.xlu0.b32.cont [7/16] %v4869, 128
        %4902 = vxpose.xlu0.b32.cont [8/16] %v4870, 128
        %4903 = vxpose.xlu0.b32.cont [9/16] %v4871, 128
        %4904 = vxpose.xlu0.b32.cont [10/16] %v4872, 128
        %4905 = vxpose.xlu0.b32.cont [11/16] %v4873, 128
        %4906 = vxpose.xlu0.b32.cont [12/16] %v4874, 128
        %4907 = vxpose.xlu0.b32.cont [13/16] %v4875, 128
        %4908 = vxpose.xlu0.b32.cont [14/16] %v4876, 128
        %4909 = vxpose.xlu0.b32.cont [15/16] %v4877, 128
        %4910 = vxpose.xlu0.b32.end [16/16] %v4878, 128
        %v4911 = vpop.trf.xlu0
        %v4912 = vpop.trf.xlu0
        %v4913 = vpop.trf.xlu0
        %v4914 = vpop.trf.xlu0
        %v4915 = vpop.trf.xlu0
        %v4916 = vpop.trf.xlu0
        %v4917 = vpop.trf.xlu0
        %v4918 = vpop.trf.xlu0
        %v4919 = vpop.trf.xlu0
        %v4920 = vpop.trf.xlu0
        %v4921 = vpop.trf.xlu0
        %v4922 = vpop.trf.xlu0
        %v4923 = vpop.trf.xlu0
        %v4924 = vpop.trf.xlu0
        %v4925 = vpop.trf.xlu0
        %v4926 = vpop.trf.xlu0
        %4927 = vxpose.xlu0.b32.start [1/16] %v4879, 128
        %4928 = vxpose.xlu0.b32.cont [2/16] %v4880, 128
        %4929 = vxpose.xlu0.b32.cont [3/16] %v4881, 128
        %4930 = vxpose.xlu0.b32.cont [4/16] %v4882, 128
        %4931 = vxpose.xlu0.b32.cont [5/16] %v4883, 128
        %4932 = vxpose.xlu0.b32.cont [6/16] %v4884, 128
        %4933 = vxpose.xlu0.b32.cont [7/16] %v4885, 128
        %4934 = vxpose.xlu0.b32.cont [8/16] %v4886, 128
        %4935 = vxpose.xlu0.b32.cont [9/16] %v4887, 128
        %4936 = vxpose.xlu0.b32.cont [10/16] %v4888, 128
        %4937 = vxpose.xlu0.b32.cont [11/16] %v4889, 128
        %4938 = vxpose.xlu0.b32.cont [12/16] %v4890, 128
        %4939 = vxpose.xlu0.b32.cont [13/16] %v4891, 128
        %4940 = vxpose.xlu0.b32.cont [14/16] %v4892, 128
        %4941 = vxpose.xlu0.b32.cont [15/16] %v4893, 128
        %4942 = vxpose.xlu0.b32.end [16/16] %v4894, 128
        %v4943 = vpop.trf.xlu0
        %v4944 = vpop.trf.xlu0
        %v4945 = vpop.trf.xlu0
        %v4946 = vpop.trf.xlu0
        %v4947 = vpop.trf.xlu0
        %v4948 = vpop.trf.xlu0
        %v4949 = vpop.trf.xlu0
        %v4950 = vpop.trf.xlu0
        %v4951 = vpop.trf.xlu0
        %v4952 = vpop.trf.xlu0
        %v4953 = vpop.trf.xlu0
        %v4954 = vpop.trf.xlu0
        %v4955 = vpop.trf.xlu0
        %v4956 = vpop.trf.xlu0
        %v4957 = vpop.trf.xlu0
        %v4958 = vpop.trf.xlu0
        %v4959 = vadd.f32 %v4911, %v278
        %v4960 = vadd.f32 %v4943, %v279
        %v4961 = vmax.f32 %v4959, 0.0
        %v4962 = vmax.f32 %v4960, 0.0
        %4963 = vst [vmem:[%s271] sm:$0xff] %v4961
        %4964 = vst [vmem:[%s271 + $0x8] sm:$0xff] %v4962
        %s4965 = sand.u32 %s181, 1
        %s4966 = scalar_lea.sflag [#allocation4], %s4965
        %s4967 = sand.u32 %s181, 1
        %s4968 = smul.addr %s4967, 16
        %s4969 = scalar_lea.vmem [#allocation3], %s4968
        // Predicated region
        $region49: #{tpu_custom_call.1} parent=47 // pred_check
          %p4970 = pneg %p191
        $region50: #{tpu_custom_call.1} parent=47 // pred_check_branch
          %4972 = sbr.rel (%p4970) target = $region52
        $region51: #{tpu_custom_call.1} parent=47 // pred_region
          %s4974 = ssub.s32 256, 256
          %4975 = vsyncadd %s4966, %s4974
          %s4976 = smul.addr %s21, 2
          %s4977 = smul.addr %s4976, 128
          %s4978 = scalar_lea.hbm %s7, %s4977
          %s4980 = sshll.u32 %s4969, 4
          %s4981 = int_to_ptr.vmem [resolvable:$true] %s4980
          %4983 = dma.vmem_to_hbm [thread:$0]  %s4981, 256, %s4978, %s4966
        $region52: #{tpu_custom_call.1} parent=47 // pred_fallthru
          _
      $region48: #{tpu_custom_call.1} parent=5 // pred_fallthru
        _
      %p4984 = scmp.le.s32.totalorder 2, %s16
      // Predicated region
      $region53: #{tpu_custom_call.1} parent=5 // pred_check
        %p4985 = pneg %p4984
      $region54: #{tpu_custom_call.1} parent=5 // pred_check_branch
        %4987 = sbr.rel (%p4985) target = $region56
      $region55: #{tpu_custom_call.1} parent=5 // pred_region
        %s4988 = ssub.s32 %s16, 2
        // Predicated region
        $region57: #{tpu_custom_call.1} parent=55 // pred_check
          %p4989 = pneg %p197
        $region58: #{tpu_custom_call.1} parent=55 // pred_check_branch
          %4991 = sbr.rel (%p4989) target = $region60
        $region59: #{tpu_custom_call.1} parent=55 // pred_region
          %s4992 = sand.u32 %s182, 1
          %s4993 = scalar_lea.sflag [#allocation4], %s4992
          %s4994 = sand.u32 %s182, 1
          %s4995 = smul.addr %s4994, 16
          %s4996 = scalar_lea.vmem [#allocation3], %s4995
          %4997 = dma.done %s4993, 256
        $region60: #{tpu_custom_call.1} parent=55 // pred_fallthru
          _
      $region56: #{tpu_custom_call.1} parent=5 // pred_fallthru
        _
    $region6: #{tpu_custom_call.1} parent=1 // loop_footer
      %s20 = sadd.s32 1, %s16
    $region7: #{tpu_custom_call.1} parent=1 // loop_footer_branch
      %15 = sbr.rel target = $region3
    $region8: #{tpu_custom_call.1} parent=1 // loop_exit
      _
    %4998 = vsyncpa [#allocation4], 1
    %s4999 = scalar_lea.sflag [#allocation4], 1
    %5000 = vsyncpa %s4999, 1

</llo_original>
